<compile_context>
chip_gen: v6e
topology: v6e:2x2x1
jax: 0.10.0
libtpu: 0.0.40
codegen_flags: <defaults>
</compile_context>

<pallas_src>
import functools

import jax
import jax.numpy as jnp
from jax.experimental import pallas as pl
from jax.experimental.pallas import tpu as pltpu


def _round_up(x, m):
    return (x + m - 1) // m * m


# ----------------------------- Pallas kernel --------------------------------

def _bottleneck_kernel(*refs, s, ho, wo_p, hps, residual_matmul):
    """Fused Bottleneck forward for one batch element.

    Input x arrives padded (by 1 for the 3x3 conv, plus alignment) and
    phase-split by the stride: rows are grouped as [phase pr*s+pc][plane row],
    so each of the 9 conv2 taps is a contiguous (ho, wo_p) window of the
    conv1 output held in VMEM scratch.  bf16 MXU feeds, f32 accumulation.
    """
    if residual_matmul:
        (x_ref, mask_ref, w1_ref, sh1_ref, w2_ref, sh2_ref, w3_ref, sh3_ref,
         wd_ref, shd_ref, o_ref, y1_ref) = refs
    else:
        (x_ref, mask_ref, w1_ref, sh1_ref, w2_ref, sh2_ref, w3_ref, sh3_ref,
         o_ref, y1_ref) = refs
        wd_ref = shd_ref = None

    rows, wps, cin = x_ref.shape[1], x_ref.shape[2], x_ref.shape[3]
    cp1 = w1_ref.shape[1]
    m_plane = rows * wps
    mo = ho * wo_p

    # ---- conv1 (1x1) + bn1 + relu over the whole padded, phase-split plane.
    xm = x_ref[0].reshape(m_plane, cin)             # layout-preserving reshape
    y1 = jnp.dot(xm, w1_ref[...], preferred_element_type=jnp.float32)
    y1 = jnp.maximum(y1 + sh1_ref[...], 0.0) * mask_ref[...]  # zero the pad ring
    y1_ref[...] = y1.astype(jnp.bfloat16).reshape(rows, wps, cp1)

    # ---- conv2 (3x3, stride s) + bn2 + relu: 9 accumulated MXU taps.
    acc = None
    for kh in range(3):
        for kw in range(3):
            ph = (kh % s) * s + (kw % s)
            r0 = ph * hps + kh // s
            c0 = kw // s
            patch = y1_ref[r0:r0 + ho, c0:c0 + wo_p, :].reshape(mo, cp1)
            t = jnp.dot(patch, w2_ref[kh * 3 + kw],
                        preferred_element_type=jnp.float32)
            acc = t if acc is None else acc + t
    y2 = jnp.maximum(acc + sh2_ref[...], 0.0).astype(jnp.bfloat16)

    # ---- conv3 (1x1) + bn3 + residual (+ downsample conv) + relu.
    out = jnp.dot(y2, w3_ref[...], preferred_element_type=jnp.float32)
    out = out + sh3_ref[...]
    phd = (1 % s) * s + (1 % s)          # phase of padded coord (s*i+1, s*j+1)
    rd = phd * hps + 1 // s
    cd = 1 // s
    xr = x_ref[0, rd:rd + ho, cd:cd + wo_p, :].reshape(mo, cin)
    if residual_matmul:
        out = out + jnp.dot(xr, wd_ref[...],
                            preferred_element_type=jnp.float32) + shd_ref[...]
    else:
        out = out + xr.astype(jnp.float32)     # identity: cin == padded cout
    o_ref[0] = jnp.maximum(out, 0.0).astype(o_ref.dtype)


# --------------------------- one-time weight prep -----------------------------

def _fold_bn(w_oihw, gamma, beta, mean, var, bias, eps=1e-5):
    """Fold inference-mode BN into the conv weights (scale on Cout)."""
    scale = gamma / jnp.sqrt(var + eps)
    w_hwio = jnp.transpose(w_oihw, (2, 3, 1, 0)) * scale      # (kh, kw, Cin, Cout)
    shift = beta + (bias - mean) * scale
    return w_hwio, shift


def _pad2(a, rows, cols):
    return jnp.pad(a, ((0, rows - a.shape[0]), (0, cols - a.shape[1])))


def prepare_bottleneck_params(params, *, in_channels, channels, stride):
    """Hoisted weight prep: BN fold, repack, pad Cout to 128, cast to bf16.

    Call once (e.g. at model init); the forward path only streams activations.
    """
    out_channels = channels * 4
    cp1 = _round_up(channels, 128)
    cp3 = _round_up(out_channels, 128)

    w1, sh1 = _fold_bn(params["w1"], params["g1"], params["b1"],
                       params["m1"], params["v1"], params["cb1"])
    w2, sh2 = _fold_bn(params["w2"], params["g2"], params["b2"],
                       params["m2"], params["v2"], params["cb2"])
    w3, sh3 = _fold_bn(params["w3"], params["g3"], params["b3"],
                       params["m3"], params["v3"], params["cb3"])

    prep = {
        "w1": _pad2(w1.reshape(in_channels, channels), in_channels,
                    cp1).astype(jnp.bfloat16),
        "sh1": _pad2(sh1[None, :], 1, cp1).astype(jnp.float32),
        "w2": jnp.pad(w2, ((0, 0), (0, 0), (0, cp1 - channels),
                           (0, cp1 - channels))
                      ).reshape(9, cp1, cp1).astype(jnp.bfloat16),
        "sh2": _pad2(sh2[None, :], 1, cp1).astype(jnp.float32),
        "w3": _pad2(w3.reshape(channels, out_channels), cp1,
                    cp3).astype(jnp.bfloat16),
        "sh3": _pad2(sh3[None, :], 1, cp3).astype(jnp.float32),
    }

    has_proj = (in_channels != out_channels) or (stride != 1)
    residual_matmul = has_proj or (in_channels != cp3)
    if has_proj:
        wd, shd = _fold_bn(params["wd"], params["gd"], params["bd"],
                           params["md"], params["vd"], params["cbd"])
        prep["wd"] = _pad2(wd.reshape(in_channels, out_channels), in_channels,
                           cp3).astype(jnp.bfloat16)
        prep["shd"] = _pad2(shd[None, :], 1, cp3).astype(jnp.float32)
    elif residual_matmul:
        # identity residual with a non-128-aligned channel count: exact
        # identity-matrix projection keeps the kernel uniform.
        prep["wd"] = jnp.eye(in_channels, cp3, dtype=jnp.bfloat16)
        prep["shd"] = jnp.zeros((1, cp3), jnp.float32)
    return prep


# ------------------------------ forward path ---------------------------------

def bottleneck_forward(x_nchw, prep, *, in_channels, channels, stride):
    n, cin, h, w = x_nchw.shape
    assert cin == in_channels
    s = stride
    out_channels = channels * 4
    cp1 = _round_up(channels, 128)
    cp3 = _round_up(out_channels, 128)

    ho = (h - 1) // s + 1
    wo = (w - 1) // s + 1
    # Pad widths to the bf16 sublane tile so every in-kernel reshape is
    # layout-preserving (guaranteed cheap lowering, lane-dense stores).
    wo_p = _round_up(wo, 16)
    hps = max(-(-(h + 2) // s), 2 // s + ho)
    wps = _round_up(max(-(-(w + 2) // s), 2 // s + wo_p), 16)

    # --- single XLA pass over x: NCHW->NHWC, bf16, pad + phase-split ---------
    xb = jnp.transpose(x_nchw, (0, 2, 3, 1)).astype(jnp.bfloat16)
    xp = jnp.pad(xb, ((0, 0), (1, s * hps - h - 1), (1, s * wps - w - 1),
                      (0, 0)))
    xps = (xp.reshape(n, hps, s, wps, s, cin)
             .transpose(0, 2, 4, 1, 3, 5)
             .reshape(n, s * s * hps, wps, cin))

    # Valid-position mask (zero on the conv pad ring / alignment pad), shared
    # across the batch.
    m = jnp.zeros((s * hps, s * wps), jnp.float32).at[1:h + 1, 1:w + 1].set(1.0)
    mask = (m.reshape(hps, s, wps, s).transpose(1, 3, 0, 2)
              .reshape(s * s * hps * wps, 1))

    has_proj = (in_channels != out_channels) or (s != 1)
    residual_matmul = has_proj or (in_channels != cp3)

    m_plane = s * s * hps * wps
    mo = ho * wo_p

    inputs = [xps, mask, prep["w1"], prep["sh1"], prep["w2"], prep["sh2"],
              prep["w3"], prep["sh3"]]
    in_specs = [
        pl.BlockSpec((1, s * s * hps, wps, cin), lambda b: (b, 0, 0, 0)),
        pl.BlockSpec((m_plane, 1), lambda b: (0, 0)),
        pl.BlockSpec((cin, cp1), lambda b: (0, 0)),
        pl.BlockSpec((1, cp1), lambda b: (0, 0)),
        pl.BlockSpec((9, cp1, cp1), lambda b: (0, 0, 0)),
        pl.BlockSpec((1, cp1), lambda b: (0, 0)),
        pl.BlockSpec((cp1, cp3), lambda b: (0, 0)),
        pl.BlockSpec((1, cp3), lambda b: (0, 0)),
    ]
    if residual_matmul:
        inputs += [prep["wd"], prep["shd"]]
        in_specs += [pl.BlockSpec((cin, cp3), lambda b: (0, 0)),
                     pl.BlockSpec((1, cp3), lambda b: (0, 0))]

    kernel = functools.partial(_bottleneck_kernel, s=s, ho=ho, wo_p=wo_p,
                               hps=hps, residual_matmul=residual_matmul)

    weight_bytes = sum(int(a.size) * a.dtype.itemsize for a in inputs[2:])
    flops = 2 * n * (m_plane * cin * cp1 + 9 * mo * cp1 * cp1 + mo * cp1 * cp3
                     + (mo * cin * cp3 if residual_matmul else 0))
    bytes_accessed = (int(xps.size) * 2 + int(mask.size) * 4 + weight_bytes
                      + n * mo * cp3 * 2)
    block_bytes = (s * s * hps * wps * cin * 2 + m_plane * 4 + mo * cp3 * 2
                   + s * s * hps * wps * cp1 * 2 + weight_bytes)
    vmem_limit = int(min(48 * 2 ** 20, max(16 * 2 ** 20, 3 * block_bytes)))

    out = pl.pallas_call(
        kernel,
        out_shape=jax.ShapeDtypeStruct((n, mo, cp3), jnp.bfloat16),
        grid_spec=pltpu.PrefetchScalarGridSpec(
            num_scalar_prefetch=0,
            grid=(n,),
            in_specs=in_specs,
            out_specs=pl.BlockSpec((1, mo, cp3), lambda b: (b, 0, 0)),
            scratch_shapes=[pltpu.VMEM((s * s * hps, wps, cp1), jnp.bfloat16)],
        ),
        compiler_params=pltpu.CompilerParams(
            dimension_semantics=("parallel",),
            vmem_limit_bytes=vmem_limit),
        cost_estimate=pl.CostEstimate(flops=int(flops), transcendentals=0,
                                      bytes_accessed=int(bytes_accessed)),
    )(*inputs)

    # Un-pad + back to the module's NCHW interface (one fused XLA pass).
    out = out.reshape(n, ho, wo_p, cp3)[:, :, :wo, :out_channels]
    return jnp.transpose(out, (0, 3, 1, 2)).astype(jnp.float32)


# --------------------------- pure-JAX reference -------------------------------

def _ref_conv(x, w, b, stride, pad):
    y = jax.lax.conv_general_dilated(
        x, w, (stride, stride), [(pad, pad), (pad, pad)],
        dimension_numbers=("NCHW", "OIHW", "NCHW"))
    return y + b[None, :, None, None]


def _ref_bn(x, g, b, m, v, eps=1e-5):
    return ((x - m[None, :, None, None]) / jnp.sqrt(v[None, :, None, None] + eps)
            * g[None, :, None, None] + b[None, :, None, None])


def ref_bottleneck(x, p, *, in_channels, channels, stride):
    expansion = 4
    out = _ref_bn(_ref_conv(x, p["w1"], p["cb1"], 1, 0),
                  p["g1"], p["b1"], p["m1"], p["v1"])
    out = jnp.maximum(out, 0.0)
    out = _ref_bn(_ref_conv(out, p["w2"], p["cb2"], stride, 1),
                  p["g2"], p["b2"], p["m2"], p["v2"])
    out = jnp.maximum(out, 0.0)
    out = _ref_bn(_ref_conv(out, p["w3"], p["cb3"], 1, 0),
                  p["g3"], p["b3"], p["m3"], p["v3"])
    if in_channels != channels * expansion or stride != 1:
        ds = _ref_bn(_ref_conv(x, p["wd"], p["cbd"], stride, 0),
                     p["gd"], p["bd"], p["md"], p["vd"])
    else:
        ds = x
    return jnp.maximum(out + ds, 0.0)


# ---------------------------------- main --------------------------------------

def _make_bn(key, c):
    k1, k2, k3, k4 = jax.random.split(key, 4)
    return (1.0 + 0.1 * jax.random.normal(k1, (c,), jnp.float32),   # gamma
            0.1 * jax.random.normal(k2, (c,), jnp.float32),         # beta
            0.1 * jax.random.normal(k3, (c,), jnp.float32),         # mean
            1.0 + jnp.abs(0.1 * jax.random.normal(k4, (c,), jnp.float32)))  # var


if __name__ == "__main__":
    N, IN_C, CH, H, W, STRIDE = 2, 8, 4, 16, 16, 2
    OUT_C = CH * 4

    key = jax.random.PRNGKey(0)
    ks = jax.random.split(key, 12)

    g1, b1, m1, v1 = _make_bn(ks[8], CH)
    g2, b2, m2, v2 = _make_bn(ks[9], CH)
    g3, b3, m3, v3 = _make_bn(ks[10], OUT_C)
    gd, bd, md, vd = _make_bn(ks[11], OUT_C)

    params = {
        # conv1 1x1 + bn1
        "w1": jax.random.normal(ks[0], (CH, IN_C, 1, 1), jnp.float32) * 0.2,
        "cb1": jax.random.normal(ks[1], (CH,), jnp.float32) * 0.1,
        "g1": g1, "b1": b1, "m1": m1, "v1": v1,
        # conv2 3x3 + bn2
        "w2": jax.random.normal(ks[2], (CH, CH, 3, 3), jnp.float32) * 0.2,
        "cb2": jax.random.normal(ks[3], (CH,), jnp.float32) * 0.1,
        "g2": g2, "b2": b2, "m2": m2, "v2": v2,
        # conv3 1x1 + bn3
        "w3": jax.random.normal(ks[4], (OUT_C, CH, 1, 1), jnp.float32) * 0.2,
        "cb3": jax.random.normal(ks[5], (OUT_C,), jnp.float32) * 0.1,
        "g3": g3, "b3": b3, "m3": m3, "v3": v3,
        # downsample conv1x1 + bn
        "wd": jax.random.normal(ks[6], (OUT_C, IN_C, 1, 1), jnp.float32) * 0.2,
        "cbd": jax.random.normal(ks[7], (OUT_C,), jnp.float32) * 0.1,
        "gd": gd, "bd": bd, "md": md, "vd": vd,
    }

    x = jax.random.normal(jax.random.PRNGKey(42), (N, IN_C, H, W), jnp.float32)

    # One-time weight prep (hoisted out of the forward path).
    prep = prepare_bottleneck_params(params, in_channels=IN_C, channels=CH,
                                     stride=STRIDE)
    fwd = jax.jit(functools.partial(bottleneck_forward, in_channels=IN_C,
                                    channels=CH, stride=STRIDE))

    out = jax.block_until_ready(fwd(x, prep))
    ref = jax.block_until_ready(
        ref_bottleneck(x, params, in_channels=IN_C, channels=CH,
                       stride=STRIDE))

    assert out.shape == ref.shape == (N, OUT_C, H // STRIDE, W // STRIDE), out.shape
    # bf16 MXU feeds + bf16 activations between fused stages, f32 accumulation.
    assert jnp.allclose(out, ref, atol=6e-2, rtol=6e-2), (
        float(jnp.max(jnp.abs(out - ref))))

    print("KERNEL_OK")
</pallas_src>

<mosaic_0001>
module attributes {stable_mosaic.version = 11 : i64} {
  func.func @_bottleneck_kernel(%arg0: i32, %arg1: memref<1x36x32x8xbf16, #tpu.memory_space<vmem>>, %arg2: memref<1152x1xf32, #tpu.memory_space<vmem>>, %arg3: memref<8x128xbf16, #tpu.memory_space<vmem>>, %arg4: memref<1x128xf32, #tpu.memory_space<vmem>>, %arg5: memref<9x128x128xbf16, #tpu.memory_space<vmem>>, %arg6: memref<1x128xf32, #tpu.memory_space<vmem>>, %arg7: memref<128x128xbf16, #tpu.memory_space<vmem>>, %arg8: memref<1x128xf32, #tpu.memory_space<vmem>>, %arg9: memref<8x128xbf16, #tpu.memory_space<vmem>>, %arg10: memref<1x128xf32, #tpu.memory_space<vmem>>, %arg11: memref<1x128x128xbf16, #tpu.memory_space<vmem>>, %arg12: memref<36x32x128xbf16, #tpu.memory_space<vmem>>) attributes {dimension_semantics = [#tpu.dimension_semantics<parallel>], iteration_bounds = array<i64: 2>, scalar_prefetch = 0 : i64, scratch_operands = 1 : i64, tpu.core_type = #tpu.core_type<tc>, window_params = [{transform_indices = @transform_0, window_bounds = array<i64: 1, 36, 32, 8>}, {pipeline_mode = #tpu.pipeline_mode<synchronous>, transform_indices = @transform_1, window_bounds = array<i64: 1152, 1>}, {pipeline_mode = #tpu.pipeline_mode<synchronous>, transform_indices = @transform_2, window_bounds = array<i64: 8, 128>}, {pipeline_mode = #tpu.pipeline_mode<synchronous>, transform_indices = @transform_3, window_bounds = array<i64: 1, 128>}, {pipeline_mode = #tpu.pipeline_mode<synchronous>, transform_indices = @transform_4, window_bounds = array<i64: 9, 128, 128>}, {pipeline_mode = #tpu.pipeline_mode<synchronous>, transform_indices = @transform_5, window_bounds = array<i64: 1, 128>}, {pipeline_mode = #tpu.pipeline_mode<synchronous>, transform_indices = @transform_6, window_bounds = array<i64: 128, 128>}, {pipeline_mode = #tpu.pipeline_mode<synchronous>, transform_indices = @transform_7, window_bounds = array<i64: 1, 128>}, {pipeline_mode = #tpu.pipeline_mode<synchronous>, transform_indices = @transform_8, window_bounds = array<i64: 8, 128>}, {pipeline_mode = #tpu.pipeline_mode<synchronous>, transform_indices = @transform_9, window_bounds = array<i64: 1, 128>}, {transform_indices = @transform_10, window_bounds = array<i64: 1, 128, 128>}]} {
    %c0 = arith.constant 0 : index
    %c0_0 = arith.constant 0 : index
    %c0_1 = arith.constant 0 : index
    %c0_2 = arith.constant 0 : index
    %0 = vector.load %arg1[%c0, %c0_0, %c0_1, %c0_2] : memref<1x36x32x8xbf16, #tpu.memory_space<vmem>>, vector<1x36x32x8xbf16>
    %1 = vector.shape_cast %0 : vector<1x36x32x8xbf16> to vector<36x32x8xbf16>
    %2 = vector.shape_cast %1 : vector<36x32x8xbf16> to vector<1152x8xbf16>
    %c0_3 = arith.constant 0 : index
    %c0_4 = arith.constant 0 : index
    %3 = vector.load %arg3[%c0_3, %c0_4] : memref<8x128xbf16, #tpu.memory_space<vmem>>, vector<8x128xbf16>
    %cst = arith.constant dense<0.000000e+00> : vector<1152x128xf32>
    %4 = tpu.matmul %2, %3, %cst {dimension_numbers = #tpu.dot_dimension_numbers<[1], [0], [0], [1], [0, 0, 1, 1], [], []>} : vector<1152x8xbf16>, vector<8x128xbf16>, vector<1152x128xf32> -> vector<1152x128xf32>
    %c0_5 = arith.constant 0 : index
    %c0_6 = arith.constant 0 : index
    %5 = vector.load %arg4[%c0_5, %c0_6] : memref<1x128xf32, #tpu.memory_space<vmem>>, vector<1x128xf32>
    %6 = vector.broadcast %5 : vector<1x128xf32> to vector<1152x128xf32>
    %7 = arith.addf %4, %6 : vector<1152x128xf32>
    %cst_7 = arith.constant 0.000000e+00 : f32
    %8 = vector.broadcast %cst_7 : f32 to vector<1152x128xf32>
    %9 = arith.maximumf %7, %8 : vector<1152x128xf32>
    %c0_8 = arith.constant 0 : index
    %c0_9 = arith.constant 0 : index
    %10 = vector.load %arg2[%c0_8, %c0_9] : memref<1152x1xf32, #tpu.memory_space<vmem>>, vector<1152x1xf32>
    %11 = vector.broadcast %10 : vector<1152x1xf32> to vector<1152x128xf32>
    %12 = arith.mulf %9, %11 : vector<1152x128xf32>
    %13 = arith.truncf %12 : vector<1152x128xf32> to vector<1152x128xbf16>
    %14 = vector.shape_cast %13 : vector<1152x128xbf16> to vector<36x32x128xbf16>
    %c0_10 = arith.constant 0 : index
    %c0_11 = arith.constant 0 : index
    %c0_12 = arith.constant 0 : index
    %15 = vector.load %arg12[%c0_10, %c0_11, %c0_12] : memref<36x32x128xbf16, #tpu.memory_space<vmem>>, vector<36x32x128xbf16>
    tpu.vector_store %arg12[%c0_10, %c0_11, %c0_12], %14 {strides = array<i32>} : memref<36x32x128xbf16, #tpu.memory_space<vmem>>, vector<36x32x128xbf16>,
    %c0_13 = arith.constant 0 : index
    %c0_14 = arith.constant 0 : index
    %c0_15 = arith.constant 0 : index
    %16 = vector.load %arg12[%c0_13, %c0_14, %c0_15] : memref<36x32x128xbf16, #tpu.memory_space<vmem>>, vector<8x16x128xbf16>
    %17 = vector.shape_cast %16 : vector<8x16x128xbf16> to vector<128x128xbf16>
    %c0_16 = arith.constant 0 : index
    %c0_17 = arith.constant 0 : index
    %c0_18 = arith.constant 0 : index
    %18 = vector.load %arg5[%c0_16, %c0_17, %c0_18] : memref<9x128x128xbf16, #tpu.memory_space<vmem>>, vector<1x128x128xbf16>
    %19 = vector.shape_cast %18 : vector<1x128x128xbf16> to vector<128x128xbf16>
    %cst_19 = arith.constant dense<0.000000e+00> : vector<128x128xf32>
    %20 = tpu.matmul %17, %19, %cst_19 {dimension_numbers = #tpu.dot_dimension_numbers<[1], [0], [0], [1], [0, 0, 1, 1], [], []>} : vector<128x128xbf16>, vector<128x128xbf16>, vector<128x128xf32> -> vector<128x128xf32>
    %c9 = arith.constant 9 : index
    %c0_20 = arith.constant 0 : index
    %c0_21 = arith.constant 0 : index
    %21 = vector.load %arg12[%c9, %c0_20, %c0_21] : memref<36x32x128xbf16, #tpu.memory_space<vmem>>, vector<8x16x128xbf16>
    %22 = vector.shape_cast %21 : vector<8x16x128xbf16> to vector<128x128xbf16>
    %c1 = arith.constant 1 : index
    %c0_22 = arith.constant 0 : index
    %c0_23 = arith.constant 0 : index
    %23 = vector.load %arg5[%c1, %c0_22, %c0_23] : memref<9x128x128xbf16, #tpu.memory_space<vmem>>, vector<1x128x128xbf16>
    %24 = vector.shape_cast %23 : vector<1x128x128xbf16> to vector<128x128xbf16>
    %cst_24 = arith.constant dense<0.000000e+00> : vector<128x128xf32>
    %25 = tpu.matmul %22, %24, %cst_24 {dimension_numbers = #tpu.dot_dimension_numbers<[1], [0], [0], [1], [0, 0, 1, 1], [], []>} : vector<128x128xbf16>, vector<128x128xbf16>, vector<128x128xf32> -> vector<128x128xf32>
    %26 = arith.addf %20, %25 : vector<128x128xf32>
    %c0_25 = arith.constant 0 : index
    %c1_26 = arith.constant 1 : index
    %c0_27 = arith.constant 0 : index
    %27 = vector.load %arg12[%c0_25, %c1_26, %c0_27] : memref<36x32x128xbf16, #tpu.memory_space<vmem>>, vector<8x16x128xbf16>
    %28 = vector.shape_cast %27 : vector<8x16x128xbf16> to vector<128x128xbf16>
    %c2 = arith.constant 2 : index
    %c0_28 = arith.constant 0 : index
    %c0_29 = arith.constant 0 : index
    %29 = vector.load %arg5[%c2, %c0_28, %c0_29] : memref<9x128x128xbf16, #tpu.memory_space<vmem>>, vector<1x128x128xbf16>
    %30 = vector.shape_cast %29 : vector<1x128x128xbf16> to vector<128x128xbf16>
    %cst_30 = arith.constant dense<0.000000e+00> : vector<128x128xf32>
    %31 = tpu.matmul %28, %30, %cst_30 {dimension_numbers = #tpu.dot_dimension_numbers<[1], [0], [0], [1], [0, 0, 1, 1], [], []>} : vector<128x128xbf16>, vector<128x128xbf16>, vector<128x128xf32> -> vector<128x128xf32>
    %32 = arith.addf %26, %31 : vector<128x128xf32>
    %c18 = arith.constant 18 : index
    %c0_31 = arith.constant 0 : index
    %c0_32 = arith.constant 0 : index
    %33 = vector.load %arg12[%c18, %c0_31, %c0_32] : memref<36x32x128xbf16, #tpu.memory_space<vmem>>, vector<8x16x128xbf16>
    %34 = vector.shape_cast %33 : vector<8x16x128xbf16> to vector<128x128xbf16>
    %c3 = arith.constant 3 : index
    %c0_33 = arith.constant 0 : index
    %c0_34 = arith.constant 0 : index
    %35 = vector.load %arg5[%c3, %c0_33, %c0_34] : memref<9x128x128xbf16, #tpu.memory_space<vmem>>, vector<1x128x128xbf16>
    %36 = vector.shape_cast %35 : vector<1x128x128xbf16> to vector<128x128xbf16>
    %cst_35 = arith.constant dense<0.000000e+00> : vector<128x128xf32>
    %37 = tpu.matmul %34, %36, %cst_35 {dimension_numbers = #tpu.dot_dimension_numbers<[1], [0], [0], [1], [0, 0, 1, 1], [], []>} : vector<128x128xbf16>, vector<128x128xbf16>, vector<128x128xf32> -> vector<128x128xf32>
    %38 = arith.addf %32, %37 : vector<128x128xf32>
    %c27 = arith.constant 27 : index
    %c0_36 = arith.constant 0 : index
    %c0_37 = arith.constant 0 : index
    %39 = vector.load %arg12[%c27, %c0_36, %c0_37] : memref<36x32x128xbf16, #tpu.memory_space<vmem>>, vector<8x16x128xbf16>
    %40 = vector.shape_cast %39 : vector<8x16x128xbf16> to vector<128x128xbf16>
    %c4 = arith.constant 4 : index
    %c0_38 = arith.constant 0 : index
    %c0_39 = arith.constant 0 : index
    %41 = vector.load %arg5[%c4, %c0_38, %c0_39] : memref<9x128x128xbf16, #tpu.memory_space<vmem>>, vector<1x128x128xbf16>
    %42 = vector.shape_cast %41 : vector<1x128x128xbf16> to vector<128x128xbf16>
    %cst_40 = arith.constant dense<0.000000e+00> : vector<128x128xf32>
    %43 = tpu.matmul %40, %42, %cst_40 {dimension_numbers = #tpu.dot_dimension_numbers<[1], [0], [0], [1], [0, 0, 1, 1], [], []>} : vector<128x128xbf16>, vector<128x128xbf16>, vector<128x128xf32> -> vector<128x128xf32>
    %44 = arith.addf %38, %43 : vector<128x128xf32>
    %c18_41 = arith.constant 18 : index
    %c1_42 = arith.constant 1 : index
    %c0_43 = arith.constant 0 : index
    %45 = vector.load %arg12[%c18_41, %c1_42, %c0_43] : memref<36x32x128xbf16, #tpu.memory_space<vmem>>, vector<8x16x128xbf16>
    %46 = vector.shape_cast %45 : vector<8x16x128xbf16> to vector<128x128xbf16>
    %c5 = arith.constant 5 : index
    %c0_44 = arith.constant 0 : index
    %c0_45 = arith.constant 0 : index
    %47 = vector.load %arg5[%c5, %c0_44, %c0_45] : memref<9x128x128xbf16, #tpu.memory_space<vmem>>, vector<1x128x128xbf16>
    %48 = vector.shape_cast %47 : vector<1x128x128xbf16> to vector<128x128xbf16>
    %cst_46 = arith.constant dense<0.000000e+00> : vector<128x128xf32>
    %49 = tpu.matmul %46, %48, %cst_46 {dimension_numbers = #tpu.dot_dimension_numbers<[1], [0], [0], [1], [0, 0, 1, 1], [], []>} : vector<128x128xbf16>, vector<128x128xbf16>, vector<128x128xf32> -> vector<128x128xf32>
    %50 = arith.addf %44, %49 : vector<128x128xf32>
    %c1_47 = arith.constant 1 : index
    %c0_48 = arith.constant 0 : index
    %c0_49 = arith.constant 0 : index
    %51 = vector.load %arg12[%c1_47, %c0_48, %c0_49] : memref<36x32x128xbf16, #tpu.memory_space<vmem>>, vector<8x16x128xbf16>
    %52 = vector.shape_cast %51 : vector<8x16x128xbf16> to vector<128x128xbf16>
    %c6 = arith.constant 6 : index
    %c0_50 = arith.constant 0 : index
    %c0_51 = arith.constant 0 : index
    %53 = vector.load %arg5[%c6, %c0_50, %c0_51] : memref<9x128x128xbf16, #tpu.memory_space<vmem>>, vector<1x128x128xbf16>
    %54 = vector.shape_cast %53 : vector<1x128x128xbf16> to vector<128x128xbf16>
    %cst_52 = arith.constant dense<0.000000e+00> : vector<128x128xf32>
    %55 = tpu.matmul %52, %54, %cst_52 {dimension_numbers = #tpu.dot_dimension_numbers<[1], [0], [0], [1], [0, 0, 1, 1], [], []>} : vector<128x128xbf16>, vector<128x128xbf16>, vector<128x128xf32> -> vector<128x128xf32>
    %56 = arith.addf %50, %55 : vector<128x128xf32>
    %c10 = arith.constant 10 : index
    %c0_53 = arith.constant 0 : index
    %c0_54 = arith.constant 0 : index
    %57 = vector.load %arg12[%c10, %c0_53, %c0_54] : memref<36x32x128xbf16, #tpu.memory_space<vmem>>, vector<8x16x128xbf16>
    %58 = vector.shape_cast %57 : vector<8x16x128xbf16> to vector<128x128xbf16>
    %c7 = arith.constant 7 : index
    %c0_55 = arith.constant 0 : index
    %c0_56 = arith.constant 0 : index
    %59 = vector.load %arg5[%c7, %c0_55, %c0_56] : memref<9x128x128xbf16, #tpu.memory_space<vmem>>, vector<1x128x128xbf16>
    %60 = vector.shape_cast %59 : vector<1x128x128xbf16> to vector<128x128xbf16>
    %cst_57 = arith.constant dense<0.000000e+00> : vector<128x128xf32>
    %61 = tpu.matmul %58, %60, %cst_57 {dimension_numbers = #tpu.dot_dimension_numbers<[1], [0], [0], [1], [0, 0, 1, 1], [], []>} : vector<128x128xbf16>, vector<128x128xbf16>, vector<128x128xf32> -> vector<128x128xf32>
    %62 = arith.addf %56, %61 : vector<128x128xf32>
    %c1_58 = arith.constant 1 : index
    %c1_59 = arith.constant 1 : index
    %c0_60 = arith.constant 0 : index
    %63 = vector.load %arg12[%c1_58, %c1_59, %c0_60] : memref<36x32x128xbf16, #tpu.memory_space<vmem>>, vector<8x16x128xbf16>
    %64 = vector.shape_cast %63 : vector<8x16x128xbf16> to vector<128x128xbf16>
    %c8 = arith.constant 8 : index
    %c0_61 = arith.constant 0 : index
    %c0_62 = arith.constant 0 : index
    %65 = vector.load %arg5[%c8, %c0_61, %c0_62] : memref<9x128x128xbf16, #tpu.memory_space<vmem>>, vector<1x128x128xbf16>
    %66 = vector.shape_cast %65 : vector<1x128x128xbf16> to vector<128x128xbf16>
    %cst_63 = arith.constant dense<0.000000e+00> : vector<128x128xf32>
    %67 = tpu.matmul %64, %66, %cst_63 {dimension_numbers = #tpu.dot_dimension_numbers<[1], [0], [0], [1], [0, 0, 1, 1], [], []>} : vector<128x128xbf16>, vector<128x128xbf16>, vector<128x128xf32> -> vector<128x128xf32>
    %68 = arith.addf %62, %67 : vector<128x128xf32>
    %c0_64 = arith.constant 0 : index
    %c0_65 = arith.constant 0 : index
    %69 = vector.load %arg6[%c0_64, %c0_65] : memref<1x128xf32, #tpu.memory_space<vmem>>, vector<1x128xf32>
    %70 = vector.broadcast %69 : vector<1x128xf32> to vector<128x128xf32>
    %71 = arith.addf %68, %70 : vector<128x128xf32>
    %cst_66 = arith.constant 0.000000e+00 : f32
    %72 = vector.broadcast %cst_66 : f32 to vector<128x128xf32>
    %73 = arith.maximumf %71, %72 : vector<128x128xf32>
    %74 = arith.truncf %73 : vector<128x128xf32> to vector<128x128xbf16>
    %c0_67 = arith.constant 0 : index
    %c0_68 = arith.constant 0 : index
    %75 = vector.load %arg7[%c0_67, %c0_68] : memref<128x128xbf16, #tpu.memory_space<vmem>>, vector<128x128xbf16>
    %cst_69 = arith.constant dense<0.000000e+00> : vector<128x128xf32>
    %76 = tpu.matmul %74, %75, %cst_69 {dimension_numbers = #tpu.dot_dimension_numbers<[1], [0], [0], [1], [0, 0, 1, 1], [], []>} : vector<128x128xbf16>, vector<128x128xbf16>, vector<128x128xf32> -> vector<128x128xf32>
    %c0_70 = arith.constant 0 : index
    %c0_71 = arith.constant 0 : index
    %77 = vector.load %arg8[%c0_70, %c0_71] : memref<1x128xf32, #tpu.memory_space<vmem>>, vector<1x128xf32>
    %78 = vector.broadcast %77 : vector<1x128xf32> to vector<128x128xf32>
    %79 = arith.addf %76, %78 : vector<128x128xf32>
    %c0_72 = arith.constant 0 : index
    %c27_73 = arith.constant 27 : index
    %c0_74 = arith.constant 0 : index
    %c0_75 = arith.constant 0 : index
    %80 = vector.load %arg1[%c0_72, %c27_73, %c0_74, %c0_75] : memref<1x36x32x8xbf16, #tpu.memory_space<vmem>>, vector<1x8x16x8xbf16>
    %81 = vector.shape_cast %80 : vector<1x8x16x8xbf16> to vector<8x16x8xbf16>
    %82 = vector.shape_cast %81 : vector<8x16x8xbf16> to vector<128x8xbf16>
    %c0_76 = arith.constant 0 : index
    %c0_77 = arith.constant 0 : index
    %83 = vector.load %arg9[%c0_76, %c0_77] : memref<8x128xbf16, #tpu.memory_space<vmem>>, vector<8x128xbf16>
    %cst_78 = arith.constant dense<0.000000e+00> : vector<128x128xf32>
    %84 = tpu.matmul %82, %83, %cst_78 {dimension_numbers = #tpu.dot_dimension_numbers<[1], [0], [0], [1], [0, 0, 1, 1], [], []>} : vector<128x8xbf16>, vector<8x128xbf16>, vector<128x128xf32> -> vector<128x128xf32>
    %85 = arith.addf %79, %84 : vector<128x128xf32>
    %c0_79 = arith.constant 0 : index
    %c0_80 = arith.constant 0 : index
    %86 = vector.load %arg10[%c0_79, %c0_80] : memref<1x128xf32, #tpu.memory_space<vmem>>, vector<1x128xf32>
    %87 = vector.broadcast %86 : vector<1x128xf32> to vector<128x128xf32>
    %88 = arith.addf %85, %87 : vector<128x128xf32>
    %cst_81 = arith.constant 0.000000e+00 : f32
    %89 = vector.broadcast %cst_81 : f32 to vector<128x128xf32>
    %90 = arith.maximumf %88, %89 : vector<128x128xf32>
    %91 = arith.truncf %90 : vector<128x128xf32> to vector<128x128xbf16>
    %c0_82 = arith.constant 0 : index
    %c0_83 = arith.constant 0 : index
    %c0_84 = arith.constant 0 : index
    %92 = vector.load %arg11[%c0_82, %c0_83, %c0_84] : memref<1x128x128xbf16, #tpu.memory_space<vmem>>, vector<1x128x128xbf16>
    %93 = vector.shape_cast %92 : vector<1x128x128xbf16> to vector<128x128xbf16>
    %94 = vector.shape_cast %91 : vector<128x128xbf16> to vector<1x128x128xbf16>
    tpu.vector_store %arg11[%c0_82, %c0_83, %c0_84], %94 {strides = array<i32>} : memref<1x128x128xbf16, #tpu.memory_space<vmem>>, vector<1x128x128xbf16>,
    return
  }
  func.func @transform_0(%arg0: i32) -> (i32, i32, i32, i32) {
    %c0_i32 = arith.constant 0 : i32
    %c0_i32_0 = arith.constant 0 : i32
    %c0_i32_1 = arith.constant 0 : i32
    %c0_i32_2 = arith.constant 0 : i32
    return %arg0, %c0_i32, %c0_i32_0, %c0_i32_1 : i32, i32, i32, i32
  }
  func.func @transform_1(%arg0: i32) -> (i32, i32) {
    %c0_i32 = arith.constant 0 : i32
    %c0_i32_0 = arith.constant 0 : i32
    %c0_i32_1 = arith.constant 0 : i32
    return %c0_i32, %c0_i32_0 : i32, i32
  }
  func.func @transform_2(%arg0: i32) -> (i32, i32) {
    %c0_i32 = arith.constant 0 : i32
    %c0_i32_0 = arith.constant 0 : i32
    %c0_i32_1 = arith.constant 0 : i32
    return %c0_i32, %c0_i32_0 : i32, i32
  }
  func.func @transform_3(%arg0: i32) -> (i32, i32) {
    %c0_i32 = arith.constant 0 : i32
    %c0_i32_0 = arith.constant 0 : i32
    %c0_i32_1 = arith.constant 0 : i32
    return %c0_i32, %c0_i32_0 : i32, i32
  }
  func.func @transform_4(%arg0: i32) -> (i32, i32, i32) {
    %c0_i32 = arith.constant 0 : i32
    %c0_i32_0 = arith.constant 0 : i32
    %c0_i32_1 = arith.constant 0 : i32
    %c0_i32_2 = arith.constant 0 : i32
    return %c0_i32, %c0_i32_0, %c0_i32_1 : i32, i32, i32
  }
  func.func @transform_5(%arg0: i32) -> (i32, i32) {
    %c0_i32 = arith.constant 0 : i32
    %c0_i32_0 = arith.constant 0 : i32
    %c0_i32_1 = arith.constant 0 : i32
    return %c0_i32, %c0_i32_0 : i32, i32
  }
  func.func @transform_6(%arg0: i32) -> (i32, i32) {
    %c0_i32 = arith.constant 0 : i32
    %c0_i32_0 = arith.constant 0 : i32
    %c0_i32_1 = arith.constant 0 : i32
    return %c0_i32, %c0_i32_0 : i32, i32
  }
  func.func @transform_7(%arg0: i32) -> (i32, i32) {
    %c0_i32 = arith.constant 0 : i32
    %c0_i32_0 = arith.constant 0 : i32
    %c0_i32_1 = arith.constant 0 : i32
    return %c0_i32, %c0_i32_0 : i32, i32
  }
  func.func @transform_8(%arg0: i32) -> (i32, i32) {
    %c0_i32 = arith.constant 0 : i32
    %c0_i32_0 = arith.constant 0 : i32
    %c0_i32_1 = arith.constant 0 : i32
    return %c0_i32, %c0_i32_0 : i32, i32
  }
  func.func @transform_9(%arg0: i32) -> (i32, i32) {
    %c0_i32 = arith.constant 0 : i32
    %c0_i32_0 = arith.constant 0 : i32
    %c0_i32_1 = arith.constant 0 : i32
    return %c0_i32, %c0_i32_0 : i32, i32
  }
  func.func @transform_10(%arg0: i32) -> (i32, i32, i32) {
    %c0_i32 = arith.constant 0 : i32
    %c0_i32_0 = arith.constant 0 : i32
    %c0_i32_1 = arith.constant 0 : i32
    return %arg0, %c0_i32, %c0_i32_0 : i32, i32, i32
  }
}

</mosaic_0001>

<llo_original>
// kernel: bottleneck_forward.1
$region0: #{bottleneck_forward.1}
  #allocation0 [shape = 'u32[]', space=smem, size = 0x4, offset = 0x4, fixed_abs, tag = 'smem constant byte address 0x4 - core index']
  #allocation1 [shape = 'u32[144,128]{1,0:T(1,128)}', space=vmem, size = 0x12000, scoped, tag = 'internal scratch']
  #allocation2 [shape = 'bf16[36,32,128]{2,1,0:T(8,128)(2,1)}', space=vmem, size = 0x48000, scoped, tag = 'scratch operand']
  %s0 = inlined_call_operand.vmem [shape: bf16[2,36,32,8], index: 0, kind: input, shape index: {}]
  %s1 = inlined_call_operand.vmem [shape: f32[1152,1], index: 1, kind: input, shape index: {}]
  %s2 = inlined_call_operand.vmem [shape: bf16[8,128], index: 2, kind: input, shape index: {}]
  %s3 = inlined_call_operand.vmem [shape: f32[1,128], index: 3, kind: input, shape index: {}]
  %s4 = inlined_call_operand.vmem [shape: bf16[9,128,128], index: 4, kind: input, shape index: {}]
  %s5 = inlined_call_operand.vmem [shape: f32[1,128], index: 5, kind: input, shape index: {}]
  %s6 = inlined_call_operand.vmem [shape: bf16[128,128], index: 6, kind: input, shape index: {}]
  %s7 = inlined_call_operand.vmem [shape: f32[1,128], index: 7, kind: input, shape index: {}]
  %s8 = inlined_call_operand.vmem [shape: bf16[8,128], index: 8, kind: input, shape index: {}]
  %s9 = inlined_call_operand.vmem [shape: f32[1,128], index: 9, kind: input, shape index: {}]
  %s10 = inlined_call_operand.vmem [shape: bf16[2,128,128], index: 10, kind: output, shape index: {}]
  %s11 = sld [smem:[#allocation0]]
  $region73: #{bottleneck_forward.1} parent=0
    _
  %s13 = ssub.s32 1, %s11
  %s14 = scalar_select 0, %s13, %s11
  loop: start=0, step=1, limit=4
  $region2: #{bottleneck_forward.1} parent=0 // loop_pre_header
    _
  $region3: #{bottleneck_forward.1} parent=0 // loop_header
    %s16 = sphi 0, %s20
    %p17 = scmp.ge.s32.totalorder %s16, 4
    %s26 = sphi 0, %s28
    %s29 = sphi 0, %s26
    %s30 = sphi 0, %s29
    %s46 = sphi 0, %s30
    %s50 = sphi 0, %s50
    %s52 = sphi 0, %s50
    %s53 = sphi 0, %s52
    %s67 = sphi 0, %s53
    %s71 = sphi 0, %s71
    %s73 = sphi 0, %s71
    %s74 = sphi 0, %s73
    %s88 = sphi 0, %s74
    %s92 = sphi 0, %s92
    %s94 = sphi 0, %s92
    %s95 = sphi 0, %s94
    %s109 = sphi 0, %s95
    %s113 = sphi 0, %s113
    %s115 = sphi 0, %s113
    %s116 = sphi 0, %s115
    %s130 = sphi 0, %s116
    %s134 = sphi 0, %s134
    %s136 = sphi 0, %s134
    %s137 = sphi 0, %s136
    %s151 = sphi 0, %s137
    %s155 = sphi 0, %s155
    %s157 = sphi 0, %s155
    %s158 = sphi 0, %s157
    %s172 = sphi 0, %s158
    %s176 = sphi 0, %s176
    %s178 = sphi 0, %s176
    %s179 = sphi 0, %s178
    %s193 = sphi 0, %s179
    %s197 = sphi 0, %s197
    %s199 = sphi 0, %s197
    %s200 = sphi 0, %s199
    %s214 = sphi 0, %s200
    %s218 = sphi 0, %s218
    %s220 = sphi 0, %s218
    %s221 = sphi 0, %s220
    %s235 = sphi 0, %s221
    %s241 = sphi 0, %s243
    %s244 = sphi 0, %s241
    %s245 = sphi 0, %s244
    %s261 = sphi 0, %s245
  $region4: #{bottleneck_forward.1} parent=0 // loop_header_branch
    %19 = sbr.rel (%p17) target = $region8
  $region5: #{bottleneck_forward.1} parent=0 // loop_body
    %s21 = ssub.s32 %s16, 1
    %s22 = ssub.s32 %s16, 2
    %s23 = sadd.s32 %s16, 1
    %s24 = ssub.s32 %s16, %s23
    %p25 = scmp.eq.s32.totalorder %s24, 0
    %s27 = sadd.s32 %s26, 1
    %s28 = scalar_select %p25, %s26, %s27
    %p31 = pneg %p25
    %p32 = scmp.eq.s32.totalorder %s16, 1
    %p33 = por %p31, %p32
    %p34 = scmp.ne.s32.totalorder %s26, %s29
    %p35 = scmp.eq.s32.totalorder %s16, 0
    %p36 = por %p34, %p35
    %p37 = scmp.ne.s32.totalorder %s26, %s29
    %p38 = scmp.eq.s32.totalorder %s21, 1
    %p39 = por %p37, %p38
    %p40 = scmp.ne.s32.totalorder %s29, %s30
    %p41 = scmp.eq.s32.totalorder %s21, 0
    %p42 = por %p40, %p41
    %p43 = scmp.ne.s32.totalorder %s29, %s30
    %p44 = scmp.eq.s32.totalorder %s22, 1
    %p45 = por %p43, %p44
    %p47 = scmp.ne.s32.totalorder %s30, %s46
    %p48 = scmp.eq.s32.totalorder %s22, 0
    %p49 = por %p47, %p48
    %s51 = sadd.s32 %s50, 1
    %p54 = scmp.eq.s32.totalorder %s16, 1
    %p55 = scmp.ne.s32.totalorder %s50, %s52
    %p56 = scmp.eq.s32.totalorder %s16, 0
    %p57 = por %p55, %p56
    %p58 = scmp.ne.s32.totalorder %s50, %s52
    %p59 = scmp.eq.s32.totalorder %s21, 1
    %p60 = por %p58, %p59
    %p61 = scmp.ne.s32.totalorder %s52, %s53
    %p62 = scmp.eq.s32.totalorder %s21, 0
    %p63 = por %p61, %p62
    %p64 = scmp.ne.s32.totalorder %s52, %s53
    %p65 = scmp.eq.s32.totalorder %s22, 1
    %p66 = por %p64, %p65
    %p68 = scmp.ne.s32.totalorder %s53, %s67
    %p69 = scmp.eq.s32.totalorder %s22, 0
    %p70 = por %p68, %p69
    %s72 = sadd.s32 %s71, 1
    %p75 = scmp.eq.s32.totalorder %s16, 1
    %p76 = scmp.ne.s32.totalorder %s71, %s73
    %p77 = scmp.eq.s32.totalorder %s16, 0
    %p78 = por %p76, %p77
    %p79 = scmp.ne.s32.totalorder %s71, %s73
    %p80 = scmp.eq.s32.totalorder %s21, 1
    %p81 = por %p79, %p80
    %p82 = scmp.ne.s32.totalorder %s73, %s74
    %p83 = scmp.eq.s32.totalorder %s21, 0
    %p84 = por %p82, %p83
    %p85 = scmp.ne.s32.totalorder %s73, %s74
    %p86 = scmp.eq.s32.totalorder %s22, 1
    %p87 = por %p85, %p86
    %p89 = scmp.ne.s32.totalorder %s74, %s88
    %p90 = scmp.eq.s32.totalorder %s22, 0
    %p91 = por %p89, %p90
    %s93 = sadd.s32 %s92, 1
    %p96 = scmp.eq.s32.totalorder %s16, 1
    %p97 = scmp.ne.s32.totalorder %s92, %s94
    %p98 = scmp.eq.s32.totalorder %s16, 0
    %p99 = por %p97, %p98
    %p100 = scmp.ne.s32.totalorder %s92, %s94
    %p101 = scmp.eq.s32.totalorder %s21, 1
    %p102 = por %p100, %p101
    %p103 = scmp.ne.s32.totalorder %s94, %s95
    %p104 = scmp.eq.s32.totalorder %s21, 0
    %p105 = por %p103, %p104
    %p106 = scmp.ne.s32.totalorder %s94, %s95
    %p107 = scmp.eq.s32.totalorder %s22, 1
    %p108 = por %p106, %p107
    %p110 = scmp.ne.s32.totalorder %s95, %s109
    %p111 = scmp.eq.s32.totalorder %s22, 0
    %p112 = por %p110, %p111
    %s114 = sadd.s32 %s113, 1
    %p117 = scmp.eq.s32.totalorder %s16, 1
    %p118 = scmp.ne.s32.totalorder %s113, %s115
    %p119 = scmp.eq.s32.totalorder %s16, 0
    %p120 = por %p118, %p119
    %p121 = scmp.ne.s32.totalorder %s113, %s115
    %p122 = scmp.eq.s32.totalorder %s21, 1
    %p123 = por %p121, %p122
    %p124 = scmp.ne.s32.totalorder %s115, %s116
    %p125 = scmp.eq.s32.totalorder %s21, 0
    %p126 = por %p124, %p125
    %p127 = scmp.ne.s32.totalorder %s115, %s116
    %p128 = scmp.eq.s32.totalorder %s22, 1
    %p129 = por %p127, %p128
    %p131 = scmp.ne.s32.totalorder %s116, %s130
    %p132 = scmp.eq.s32.totalorder %s22, 0
    %p133 = por %p131, %p132
    %s135 = sadd.s32 %s134, 1
    %p138 = scmp.eq.s32.totalorder %s16, 1
    %p139 = scmp.ne.s32.totalorder %s134, %s136
    %p140 = scmp.eq.s32.totalorder %s16, 0
    %p141 = por %p139, %p140
    %p142 = scmp.ne.s32.totalorder %s134, %s136
    %p143 = scmp.eq.s32.totalorder %s21, 1
    %p144 = por %p142, %p143
    %p145 = scmp.ne.s32.totalorder %s136, %s137
    %p146 = scmp.eq.s32.totalorder %s21, 0
    %p147 = por %p145, %p146
    %p148 = scmp.ne.s32.totalorder %s136, %s137
    %p149 = scmp.eq.s32.totalorder %s22, 1
    %p150 = por %p148, %p149
    %p152 = scmp.ne.s32.totalorder %s137, %s151
    %p153 = scmp.eq.s32.totalorder %s22, 0
    %p154 = por %p152, %p153
    %s156 = sadd.s32 %s155, 1
    %p159 = scmp.eq.s32.totalorder %s16, 1
    %p160 = scmp.ne.s32.totalorder %s155, %s157
    %p161 = scmp.eq.s32.totalorder %s16, 0
    %p162 = por %p160, %p161
    %p163 = scmp.ne.s32.totalorder %s155, %s157
    %p164 = scmp.eq.s32.totalorder %s21, 1
    %p165 = por %p163, %p164
    %p166 = scmp.ne.s32.totalorder %s157, %s158
    %p167 = scmp.eq.s32.totalorder %s21, 0
    %p168 = por %p166, %p167
    %p169 = scmp.ne.s32.totalorder %s157, %s158
    %p170 = scmp.eq.s32.totalorder %s22, 1
    %p171 = por %p169, %p170
    %p173 = scmp.ne.s32.totalorder %s158, %s172
    %p174 = scmp.eq.s32.totalorder %s22, 0
    %p175 = por %p173, %p174
    %s177 = sadd.s32 %s176, 1
    %p180 = scmp.eq.s32.totalorder %s16, 1
    %p181 = scmp.ne.s32.totalorder %s176, %s178
    %p182 = scmp.eq.s32.totalorder %s16, 0
    %p183 = por %p181, %p182
    %p184 = scmp.ne.s32.totalorder %s176, %s178
    %p185 = scmp.eq.s32.totalorder %s21, 1
    %p186 = por %p184, %p185
    %p187 = scmp.ne.s32.totalorder %s178, %s179
    %p188 = scmp.eq.s32.totalorder %s21, 0
    %p189 = por %p187, %p188
    %p190 = scmp.ne.s32.totalorder %s178, %s179
    %p191 = scmp.eq.s32.totalorder %s22, 1
    %p192 = por %p190, %p191
    %p194 = scmp.ne.s32.totalorder %s179, %s193
    %p195 = scmp.eq.s32.totalorder %s22, 0
    %p196 = por %p194, %p195
    %s198 = sadd.s32 %s197, 1
    %p201 = scmp.eq.s32.totalorder %s16, 1
    %p202 = scmp.ne.s32.totalorder %s197, %s199
    %p203 = scmp.eq.s32.totalorder %s16, 0
    %p204 = por %p202, %p203
    %p205 = scmp.ne.s32.totalorder %s197, %s199
    %p206 = scmp.eq.s32.totalorder %s21, 1
    %p207 = por %p205, %p206
    %p208 = scmp.ne.s32.totalorder %s199, %s200
    %p209 = scmp.eq.s32.totalorder %s21, 0
    %p210 = por %p208, %p209
    %p211 = scmp.ne.s32.totalorder %s199, %s200
    %p212 = scmp.eq.s32.totalorder %s22, 1
    %p213 = por %p211, %p212
    %p215 = scmp.ne.s32.totalorder %s200, %s214
    %p216 = scmp.eq.s32.totalorder %s22, 0
    %p217 = por %p215, %p216
    %s219 = sadd.s32 %s218, 1
    %p222 = scmp.eq.s32.totalorder %s16, 1
    %p223 = scmp.ne.s32.totalorder %s218, %s220
    %p224 = scmp.eq.s32.totalorder %s16, 0
    %p225 = por %p223, %p224
    %p226 = scmp.ne.s32.totalorder %s218, %s220
    %p227 = scmp.eq.s32.totalorder %s21, 1
    %p228 = por %p226, %p227
    %p229 = scmp.ne.s32.totalorder %s220, %s221
    %p230 = scmp.eq.s32.totalorder %s21, 0
    %p231 = por %p229, %p230
    %p232 = scmp.ne.s32.totalorder %s220, %s221
    %p233 = scmp.eq.s32.totalorder %s22, 1
    %p234 = por %p232, %p233
    %p236 = scmp.ne.s32.totalorder %s221, %s235
    %p237 = scmp.eq.s32.totalorder %s22, 0
    %p238 = por %p236, %p237
    %s239 = ssub.s32 %s16, %s23
    %p240 = scmp.eq.s32.totalorder %s239, 0
    %s242 = sadd.s32 %s241, 1
    %s243 = scalar_select %p240, %s241, %s242
    %p246 = pneg %p240
    %p247 = scmp.eq.s32.totalorder %s16, 1
    %p248 = por %p246, %p247
    %p249 = scmp.ne.s32.totalorder %s241, %s244
    %p250 = scmp.eq.s32.totalorder %s16, 0
    %p251 = por %p249, %p250
    %p252 = scmp.ne.s32.totalorder %s241, %s244
    %p253 = scmp.eq.s32.totalorder %s21, 1
    %p254 = por %p252, %p253
    %p255 = scmp.ne.s32.totalorder %s244, %s245
    %p256 = scmp.eq.s32.totalorder %s21, 0
    %p257 = por %p255, %p256
    %p258 = scmp.ne.s32.totalorder %s244, %s245
    %p259 = scmp.eq.s32.totalorder %s22, 1
    %p260 = por %p258, %p259
    %p262 = scmp.ne.s32.totalorder %s245, %s261
    %p263 = scmp.eq.s32.totalorder %s22, 0
    %p264 = por %p262, %p263
    %p265 = scmp.le.s32.totalorder 1, %s16
    %p266 = scmp.lt.s32.totalorder %s16, 3
    %p267 = pnand %p265, %p266
    %p268 = pneg %p267
    // Predicated region
    $region9: #{bottleneck_forward.1} parent=5 // pred_check
      _
    $region10: #{bottleneck_forward.1} parent=5 // pred_check_branch
      %270 = sbr.rel (%p267) target = $region12
    $region11: #{bottleneck_forward.1} parent=5 // pred_region
      %s271 = ssub.s32 %s16, 1
      // Predicated region
      $region13: #{bottleneck_forward.1} parent=11 // pred_check
        %p272 = pneg %p63
      $region14: #{bottleneck_forward.1} parent=11 // pred_check_branch
        %274 = sbr.rel (%p272) target = $region16
      $region15: #{bottleneck_forward.1} parent=11 // pred_region
        _
      $region16: #{bottleneck_forward.1} parent=11 // pred_fallthru
        _
      // Predicated region
      $region17: #{bottleneck_forward.1} parent=11 // pred_check
        %p275 = pneg %p84
      $region18: #{bottleneck_forward.1} parent=11 // pred_check_branch
        %277 = sbr.rel (%p275) target = $region20
      $region19: #{bottleneck_forward.1} parent=11 // pred_region
        _
      $region20: #{bottleneck_forward.1} parent=11 // pred_fallthru
        _
      // Predicated region
      $region21: #{bottleneck_forward.1} parent=11 // pred_check
        %p278 = pneg %p105
      $region22: #{bottleneck_forward.1} parent=11 // pred_check_branch
        %280 = sbr.rel (%p278) target = $region24
      $region23: #{bottleneck_forward.1} parent=11 // pred_region
        _
      $region24: #{bottleneck_forward.1} parent=11 // pred_fallthru
        _
      // Predicated region
      $region25: #{bottleneck_forward.1} parent=11 // pred_check
        %p281 = pneg %p126
      $region26: #{bottleneck_forward.1} parent=11 // pred_check_branch
        %283 = sbr.rel (%p281) target = $region28
      $region27: #{bottleneck_forward.1} parent=11 // pred_region
        _
      $region28: #{bottleneck_forward.1} parent=11 // pred_fallthru
        _
      // Predicated region
      $region29: #{bottleneck_forward.1} parent=11 // pred_check
        %p284 = pneg %p147
      $region30: #{bottleneck_forward.1} parent=11 // pred_check_branch
        %286 = sbr.rel (%p284) target = $region32
      $region31: #{bottleneck_forward.1} parent=11 // pred_region
        _
      $region32: #{bottleneck_forward.1} parent=11 // pred_fallthru
        _
      // Predicated region
      $region33: #{bottleneck_forward.1} parent=11 // pred_check
        %p287 = pneg %p168
      $region34: #{bottleneck_forward.1} parent=11 // pred_check_branch
        %289 = sbr.rel (%p287) target = $region36
      $region35: #{bottleneck_forward.1} parent=11 // pred_region
        _
      $region36: #{bottleneck_forward.1} parent=11 // pred_fallthru
        _
      // Predicated region
      $region37: #{bottleneck_forward.1} parent=11 // pred_check
        %p290 = pneg %p189
      $region38: #{bottleneck_forward.1} parent=11 // pred_check_branch
        %292 = sbr.rel (%p290) target = $region40
      $region39: #{bottleneck_forward.1} parent=11 // pred_region
        _
      $region40: #{bottleneck_forward.1} parent=11 // pred_fallthru
        _
      // Predicated region
      $region41: #{bottleneck_forward.1} parent=11 // pred_check
        %p293 = pneg %p210
      $region42: #{bottleneck_forward.1} parent=11 // pred_check_branch
        %295 = sbr.rel (%p293) target = $region44
      $region43: #{bottleneck_forward.1} parent=11 // pred_region
        _
      $region44: #{bottleneck_forward.1} parent=11 // pred_fallthru
        _
      // Predicated region
      $region45: #{bottleneck_forward.1} parent=11 // pred_check
        %p296 = pneg %p231
      $region46: #{bottleneck_forward.1} parent=11 // pred_check_branch
        %298 = sbr.rel (%p296) target = $region48
      $region47: #{bottleneck_forward.1} parent=11 // pred_region
        _
      $region48: #{bottleneck_forward.1} parent=11 // pred_fallthru
        _
    $region12: #{bottleneck_forward.1} parent=5 // pred_fallthru
      _
    %p299 = scmp.lt.s32.totalorder %s16, 2
    // Predicated region
    $region49: #{bottleneck_forward.1} parent=5 // pred_check
      %p300 = pneg %p299
    $region50: #{bottleneck_forward.1} parent=5 // pred_check_branch
      %302 = sbr.rel (%p300) target = $region52
    $region51: #{bottleneck_forward.1} parent=5 // pred_region
      // Predicated region
      $region53: #{bottleneck_forward.1} parent=51 // pred_check
        %p303 = pneg %p36
      $region54: #{bottleneck_forward.1} parent=51 // pred_check_branch
        %305 = sbr.rel (%p303) target = $region56
      $region55: #{bottleneck_forward.1} parent=51 // pred_region
        %p306 = scmp.lt.s32.totalorder %s16, 1
        %s307 = scalar_select %p306, %s16, 1
        %s308 = smul.addr %s307, 144
        %s309 = smul.addr %s308, 4
        %s310 = scalar_lea.vmem %s0, %s309
      $region56: #{bottleneck_forward.1} parent=51 // pred_fallthru
        _
    $region52: #{bottleneck_forward.1} parent=5 // pred_fallthru
      _
    %p311 = scmp.le.s32.totalorder 1, %s16
    %p312 = scmp.lt.s32.totalorder %s16, 3
    %p313 = pnand %p311, %p312
    %p314 = pneg %p313
    // Predicated region
    $region57: #{bottleneck_forward.1} parent=5 // pred_check
      _
    $region58: #{bottleneck_forward.1} parent=5 // pred_check_branch
      %316 = sbr.rel (%p313) target = $region60
    $region59: #{bottleneck_forward.1} parent=5 // pred_region
      %s317 = ssub.s32 %s16, 1
      %p318 = scmp.lt.s32.totalorder %s21, 1
      %s319 = scalar_select %p318, %s21, 1
      %s320 = smul.addr %s319, 144
      %s321 = smul.addr %s320, 4
      %s322 = scalar_lea.vmem %s0, %s321
      %p323 = pneg %p42
      %p324 = pneg %p39
      %p325 = pneg %p63
      %p326 = pneg %p60
      %p327 = pneg %p84
      %p328 = pneg %p81
      %p329 = pneg %p105
      %p330 = pneg %p102
      %p331 = pneg %p126
      %p332 = pneg %p123
      %p333 = pneg %p147
      %p334 = pneg %p144
      %p335 = pneg %p168
      %p336 = pneg %p165
      %p337 = pneg %p189
      %p338 = pneg %p186
      %p339 = pneg %p210
      %p340 = pneg %p207
      %p341 = pneg %p231
      %p342 = pneg %p228
      %p343 = pneg %p257
      %p344 = pneg %p254
      %p345 = scmp.lt.s32.totalorder %s21, 1
      %s346 = scalar_select %p345, %s21, 1
      %s347 = smul.addr %s346, 16
      %s348 = smul.addr %s347, 4
      %s349 = scalar_lea.vmem %s10, %s348
      %p350 = scmp.lt.s32.totalorder %s21, 1
      %s351 = scalar_select %p350, %s21, 1
      %s352 = smul.addr %s351, 144
      %s353 = smul.addr %s352, 4
      %s354 = scalar_lea.vmem %s0, %s353
      %p355 = scmp.lt.s32.totalorder %s21, 1
      %s356 = scalar_select %p355, %s21, 1
      %s357 = smul.addr %s356, 16
      %s358 = smul.addr %s357, 4
      %s359 = scalar_lea.vmem %s10, %s358
      %v361 = vld [vmem:[%s354] sm:$0xf]
      %v362 = vld [vmem:[%s354 + $0x4] sm:$0xf]
      %v363 = vld [vmem:[%s354 + $0x8] sm:$0xf]
      %v364 = vld [vmem:[%s354 + $0xc] sm:$0xf]
      %v365 = vld [vmem:[%s354 + $0x10] sm:$0xf]
      %v366 = vld [vmem:[%s354 + $0x14] sm:$0xf]
      %v367 = vld [vmem:[%s354 + $0x18] sm:$0xf]
      %v368 = vld [vmem:[%s354 + $0x1c] sm:$0xf]
      %v369 = vld [vmem:[%s354 + $0x20] sm:$0xf]
      %v370 = vld [vmem:[%s354 + $0x24] sm:$0xf]
      %v371 = vld [vmem:[%s354 + $0x28] sm:$0xf]
      %v372 = vld [vmem:[%s354 + $0x2c] sm:$0xf]
      %v373 = vld [vmem:[%s354 + $0x30] sm:$0xf]
      %v374 = vld [vmem:[%s354 + $0x34] sm:$0xf]
      %v375 = vld [vmem:[%s354 + $0x38] sm:$0xf]
      %v376 = vld [vmem:[%s354 + $0x3c] sm:$0xf]
      %v377 = vld [vmem:[%s354 + $0x40] sm:$0xf]
      %v378 = vld [vmem:[%s354 + $0x44] sm:$0xf]
      %v379 = vld [vmem:[%s354 + $0x48] sm:$0xf]
      %v380 = vld [vmem:[%s354 + $0x4c] sm:$0xf]
      %v381 = vld [vmem:[%s354 + $0x50] sm:$0xf]
      %v382 = vld [vmem:[%s354 + $0x54] sm:$0xf]
      %v383 = vld [vmem:[%s354 + $0x58] sm:$0xf]
      %v384 = vld [vmem:[%s354 + $0x5c] sm:$0xf]
      %v385 = vld [vmem:[%s354 + $0x60] sm:$0xf]
      %v386 = vld [vmem:[%s354 + $0x64] sm:$0xf]
      %v387 = vld [vmem:[%s354 + $0x68] sm:$0xf]
      %v388 = vld [vmem:[%s354 + $0x6c] sm:$0xf]
      %v389 = vld [vmem:[%s354 + $0x70] sm:$0xf]
      %v390 = vld [vmem:[%s354 + $0x74] sm:$0xf]
      %v391 = vld [vmem:[%s354 + $0x78] sm:$0xf]
      %v392 = vld [vmem:[%s354 + $0x7c] sm:$0xf]
      %v393 = vld [vmem:[%s354 + $0x80] sm:$0xf]
      %v394 = vld [vmem:[%s354 + $0x84] sm:$0xf]
      %v395 = vld [vmem:[%s354 + $0x88] sm:$0xf]
      %v396 = vld [vmem:[%s354 + $0x8c] sm:$0xf]
      %v397 = vld [vmem:[%s354 + $0x90] sm:$0xf]
      %v398 = vld [vmem:[%s354 + $0x94] sm:$0xf]
      %v399 = vld [vmem:[%s354 + $0x98] sm:$0xf]
      %v400 = vld [vmem:[%s354 + $0x9c] sm:$0xf]
      %v401 = vld [vmem:[%s354 + $0xa0] sm:$0xf]
      %v402 = vld [vmem:[%s354 + $0xa4] sm:$0xf]
      %v403 = vld [vmem:[%s354 + $0xa8] sm:$0xf]
      %v404 = vld [vmem:[%s354 + $0xac] sm:$0xf]
      %v405 = vld [vmem:[%s354 + $0xb0] sm:$0xf]
      %v406 = vld [vmem:[%s354 + $0xb4] sm:$0xf]
      %v407 = vld [vmem:[%s354 + $0xb8] sm:$0xf]
      %v408 = vld [vmem:[%s354 + $0xbc] sm:$0xf]
      %v409 = vld [vmem:[%s354 + $0xc0] sm:$0xf]
      %v410 = vld [vmem:[%s354 + $0xc4] sm:$0xf]
      %v411 = vld [vmem:[%s354 + $0xc8] sm:$0xf]
      %v412 = vld [vmem:[%s354 + $0xcc] sm:$0xf]
      %v413 = vld [vmem:[%s354 + $0xd0] sm:$0xf]
      %v414 = vld [vmem:[%s354 + $0xd4] sm:$0xf]
      %v415 = vld [vmem:[%s354 + $0xd8] sm:$0xf]
      %v416 = vld [vmem:[%s354 + $0xdc] sm:$0xf]
      %v417 = vld [vmem:[%s354 + $0xe0] sm:$0xf]
      %v418 = vld [vmem:[%s354 + $0xe4] sm:$0xf]
      %v419 = vld [vmem:[%s354 + $0xe8] sm:$0xf]
      %v420 = vld [vmem:[%s354 + $0xec] sm:$0xf]
      %v421 = vld [vmem:[%s354 + $0xf0] sm:$0xf]
      %v422 = vld [vmem:[%s354 + $0xf4] sm:$0xf]
      %v423 = vld [vmem:[%s354 + $0xf8] sm:$0xf]
      %v424 = vld [vmem:[%s354 + $0xfc] sm:$0xf]
      %v425 = vld [vmem:[%s354 + $0x100] sm:$0xf]
      %v426 = vld [vmem:[%s354 + $0x104] sm:$0xf]
      %v427 = vld [vmem:[%s354 + $0x108] sm:$0xf]
      %v428 = vld [vmem:[%s354 + $0x10c] sm:$0xf]
      %v429 = vld [vmem:[%s354 + $0x110] sm:$0xf]
      %v430 = vld [vmem:[%s354 + $0x114] sm:$0xf]
      %v431 = vld [vmem:[%s354 + $0x118] sm:$0xf]
      %v432 = vld [vmem:[%s354 + $0x11c] sm:$0xf]
      %v433 = vld [vmem:[%s354 + $0x120] sm:$0xf]
      %v434 = vld [vmem:[%s354 + $0x124] sm:$0xf]
      %v435 = vld [vmem:[%s354 + $0x128] sm:$0xf]
      %v436 = vld [vmem:[%s354 + $0x12c] sm:$0xf]
      %v437 = vld [vmem:[%s354 + $0x130] sm:$0xf]
      %v438 = vld [vmem:[%s354 + $0x134] sm:$0xf]
      %v439 = vld [vmem:[%s354 + $0x138] sm:$0xf]
      %v440 = vld [vmem:[%s354 + $0x13c] sm:$0xf]
      %v441 = vld [vmem:[%s354 + $0x140] sm:$0xf]
      %v442 = vld [vmem:[%s354 + $0x144] sm:$0xf]
      %v443 = vld [vmem:[%s354 + $0x148] sm:$0xf]
      %v444 = vld [vmem:[%s354 + $0x14c] sm:$0xf]
      %v445 = vld [vmem:[%s354 + $0x150] sm:$0xf]
      %v446 = vld [vmem:[%s354 + $0x154] sm:$0xf]
      %v447 = vld [vmem:[%s354 + $0x158] sm:$0xf]
      %v448 = vld [vmem:[%s354 + $0x15c] sm:$0xf]
      %v449 = vld [vmem:[%s354 + $0x160] sm:$0xf]
      %v450 = vld [vmem:[%s354 + $0x164] sm:$0xf]
      %v451 = vld [vmem:[%s354 + $0x168] sm:$0xf]
      %v452 = vld [vmem:[%s354 + $0x16c] sm:$0xf]
      %v453 = vld [vmem:[%s354 + $0x170] sm:$0xf]
      %v454 = vld [vmem:[%s354 + $0x174] sm:$0xf]
      %v455 = vld [vmem:[%s354 + $0x178] sm:$0xf]
      %v456 = vld [vmem:[%s354 + $0x17c] sm:$0xf]
      %v457 = vld [vmem:[%s354 + $0x180] sm:$0xf]
      %v458 = vld [vmem:[%s354 + $0x184] sm:$0xf]
      %v459 = vld [vmem:[%s354 + $0x188] sm:$0xf]
      %v460 = vld [vmem:[%s354 + $0x18c] sm:$0xf]
      %v461 = vld [vmem:[%s354 + $0x190] sm:$0xf]
      %v462 = vld [vmem:[%s354 + $0x194] sm:$0xf]
      %v463 = vld [vmem:[%s354 + $0x198] sm:$0xf]
      %v464 = vld [vmem:[%s354 + $0x19c] sm:$0xf]
      %v465 = vld [vmem:[%s354 + $0x1a0] sm:$0xf]
      %v466 = vld [vmem:[%s354 + $0x1a4] sm:$0xf]
      %v467 = vld [vmem:[%s354 + $0x1a8] sm:$0xf]
      %v468 = vld [vmem:[%s354 + $0x1ac] sm:$0xf]
      %v469 = vld [vmem:[%s354 + $0x1b0] sm:$0xf]
      %v470 = vld [vmem:[%s354 + $0x1b4] sm:$0xf]
      %v471 = vld [vmem:[%s354 + $0x1b8] sm:$0xf]
      %v472 = vld [vmem:[%s354 + $0x1bc] sm:$0xf]
      %v473 = vld [vmem:[%s354 + $0x1c0] sm:$0xf]
      %v474 = vld [vmem:[%s354 + $0x1c4] sm:$0xf]
      %v475 = vld [vmem:[%s354 + $0x1c8] sm:$0xf]
      %v476 = vld [vmem:[%s354 + $0x1cc] sm:$0xf]
      %v477 = vld [vmem:[%s354 + $0x1d0] sm:$0xf]
      %v478 = vld [vmem:[%s354 + $0x1d4] sm:$0xf]
      %v479 = vld [vmem:[%s354 + $0x1d8] sm:$0xf]
      %v480 = vld [vmem:[%s354 + $0x1dc] sm:$0xf]
      %v481 = vld [vmem:[%s354 + $0x1e0] sm:$0xf]
      %v482 = vld [vmem:[%s354 + $0x1e4] sm:$0xf]
      %v483 = vld [vmem:[%s354 + $0x1e8] sm:$0xf]
      %v484 = vld [vmem:[%s354 + $0x1ec] sm:$0xf]
      %v485 = vld [vmem:[%s354 + $0x1f0] sm:$0xf]
      %v486 = vld [vmem:[%s354 + $0x1f4] sm:$0xf]
      %v487 = vld [vmem:[%s354 + $0x1f8] sm:$0xf]
      %v488 = vld [vmem:[%s354 + $0x1fc] sm:$0xf]
      %v489 = vld [vmem:[%s354 + $0x200] sm:$0xf]
      %v490 = vld [vmem:[%s354 + $0x204] sm:$0xf]
      %v491 = vld [vmem:[%s354 + $0x208] sm:$0xf]
      %v492 = vld [vmem:[%s354 + $0x20c] sm:$0xf]
      %v493 = vld [vmem:[%s354 + $0x210] sm:$0xf]
      %v494 = vld [vmem:[%s354 + $0x214] sm:$0xf]
      %v495 = vld [vmem:[%s354 + $0x218] sm:$0xf]
      %v496 = vld [vmem:[%s354 + $0x21c] sm:$0xf]
      %v497 = vld [vmem:[%s354 + $0x220] sm:$0xf]
      %v498 = vld [vmem:[%s354 + $0x224] sm:$0xf]
      %v499 = vld [vmem:[%s354 + $0x228] sm:$0xf]
      %v500 = vld [vmem:[%s354 + $0x22c] sm:$0xf]
      %v501 = vld [vmem:[%s354 + $0x230] sm:$0xf]
      %v502 = vld [vmem:[%s354 + $0x234] sm:$0xf]
      %v503 = vld [vmem:[%s354 + $0x238] sm:$0xf]
      %v504 = vld [vmem:[%s354 + $0x23c] sm:$0xf]
      %v505 = vld [vmem:[%s2] sm:$0xf]
      %v506 = vld [vmem:[%s3] sm:$0x1]
      %v508 = vlaneseq
      %v509 = vshrl.u32 %v508, 7
      %v510 = vsub.s32 0, %v509
      %v511 = vrot.slane %v506, %v510
      %v657 = vunpack.c.l.b16 %v361
      %v658 = vunpack.c.l.b16 %v362
      %v659 = vunpack.c.l.b16 %v363
      %v660 = vunpack.c.l.b16 %v364
      %v661 = vunpack.c.l.b16 %v365
      %v662 = vunpack.c.l.b16 %v366
      %v663 = vunpack.c.l.b16 %v367
      %v664 = vunpack.c.l.b16 %v368
      %v665 = vunpack.c.l.b16 %v369
      %v666 = vunpack.c.l.b16 %v370
      %v667 = vunpack.c.l.b16 %v371
      %v668 = vunpack.c.l.b16 %v372
      %v669 = vunpack.c.l.b16 %v373
      %v670 = vunpack.c.l.b16 %v374
      %v671 = vunpack.c.l.b16 %v375
      %v672 = vunpack.c.l.b16 %v376
      %v673 = vunpack.c.l.b16 %v377
      %v674 = vunpack.c.l.b16 %v378
      %v675 = vunpack.c.l.b16 %v379
      %v676 = vunpack.c.l.b16 %v380
      %v677 = vunpack.c.l.b16 %v381
      %v678 = vunpack.c.l.b16 %v382
      %v679 = vunpack.c.l.b16 %v383
      %v680 = vunpack.c.l.b16 %v384
      %v681 = vunpack.c.l.b16 %v385
      %v682 = vunpack.c.l.b16 %v386
      %v683 = vunpack.c.l.b16 %v387
      %v684 = vunpack.c.l.b16 %v388
      %v685 = vunpack.c.l.b16 %v389
      %v686 = vunpack.c.l.b16 %v390
      %v687 = vunpack.c.l.b16 %v391
      %v688 = vunpack.c.l.b16 %v392
      %v689 = vunpack.c.l.b16 %v393
      %v690 = vunpack.c.l.b16 %v394
      %v691 = vunpack.c.l.b16 %v395
      %v692 = vunpack.c.l.b16 %v396
      %v693 = vunpack.c.l.b16 %v397
      %v694 = vunpack.c.l.b16 %v398
      %v695 = vunpack.c.l.b16 %v399
      %v696 = vunpack.c.l.b16 %v400
      %v697 = vunpack.c.l.b16 %v401
      %v698 = vunpack.c.l.b16 %v402
      %v699 = vunpack.c.l.b16 %v403
      %v700 = vunpack.c.l.b16 %v404
      %v701 = vunpack.c.l.b16 %v405
      %v702 = vunpack.c.l.b16 %v406
      %v703 = vunpack.c.l.b16 %v407
      %v704 = vunpack.c.l.b16 %v408
      %v705 = vunpack.c.l.b16 %v409
      %v706 = vunpack.c.l.b16 %v410
      %v707 = vunpack.c.l.b16 %v411
      %v708 = vunpack.c.l.b16 %v412
      %v709 = vunpack.c.l.b16 %v413
      %v710 = vunpack.c.l.b16 %v414
      %v711 = vunpack.c.l.b16 %v415
      %v712 = vunpack.c.l.b16 %v416
      %v713 = vunpack.c.l.b16 %v417
      %v714 = vunpack.c.l.b16 %v418
      %v715 = vunpack.c.l.b16 %v419
      %v716 = vunpack.c.l.b16 %v420
      %v717 = vunpack.c.l.b16 %v421
      %v718 = vunpack.c.l.b16 %v422
      %v719 = vunpack.c.l.b16 %v423
      %v720 = vunpack.c.l.b16 %v424
      %v721 = vunpack.c.l.b16 %v425
      %v722 = vunpack.c.l.b16 %v426
      %v723 = vunpack.c.l.b16 %v427
      %v724 = vunpack.c.l.b16 %v428
      %v725 = vunpack.c.l.b16 %v429
      %v726 = vunpack.c.l.b16 %v430
      %v727 = vunpack.c.l.b16 %v431
      %v728 = vunpack.c.l.b16 %v432
      %v729 = vunpack.c.l.b16 %v433
      %v730 = vunpack.c.l.b16 %v434
      %v731 = vunpack.c.l.b16 %v435
      %v732 = vunpack.c.l.b16 %v436
      %v733 = vunpack.c.l.b16 %v437
      %v734 = vunpack.c.l.b16 %v438
      %v735 = vunpack.c.l.b16 %v439
      %v736 = vunpack.c.l.b16 %v440
      %v737 = vunpack.c.l.b16 %v441
      %v738 = vunpack.c.l.b16 %v442
      %v739 = vunpack.c.l.b16 %v443
      %v740 = vunpack.c.l.b16 %v444
      %v741 = vunpack.c.l.b16 %v445
      %v742 = vunpack.c.l.b16 %v446
      %v743 = vunpack.c.l.b16 %v447
      %v744 = vunpack.c.l.b16 %v448
      %v745 = vunpack.c.l.b16 %v449
      %v746 = vunpack.c.l.b16 %v450
      %v747 = vunpack.c.l.b16 %v451
      %v748 = vunpack.c.l.b16 %v452
      %v749 = vunpack.c.l.b16 %v453
      %v750 = vunpack.c.l.b16 %v454
      %v751 = vunpack.c.l.b16 %v455
      %v752 = vunpack.c.l.b16 %v456
      %v753 = vunpack.c.l.b16 %v457
      %v754 = vunpack.c.l.b16 %v458
      %v755 = vunpack.c.l.b16 %v459
      %v756 = vunpack.c.l.b16 %v460
      %v757 = vunpack.c.l.b16 %v461
      %v758 = vunpack.c.l.b16 %v462
      %v759 = vunpack.c.l.b16 %v463
      %v760 = vunpack.c.l.b16 %v464
      %v761 = vunpack.c.l.b16 %v465
      %v762 = vunpack.c.l.b16 %v466
      %v763 = vunpack.c.l.b16 %v467
      %v764 = vunpack.c.l.b16 %v468
      %v765 = vunpack.c.l.b16 %v469
      %v766 = vunpack.c.l.b16 %v470
      %v767 = vunpack.c.l.b16 %v471
      %v768 = vunpack.c.l.b16 %v472
      %v769 = vunpack.c.l.b16 %v473
      %v770 = vunpack.c.l.b16 %v474
      %v771 = vunpack.c.l.b16 %v475
      %v772 = vunpack.c.l.b16 %v476
      %v773 = vunpack.c.l.b16 %v477
      %v774 = vunpack.c.l.b16 %v478
      %v775 = vunpack.c.l.b16 %v479
      %v776 = vunpack.c.l.b16 %v480
      %v777 = vunpack.c.l.b16 %v481
      %v778 = vunpack.c.l.b16 %v482
      %v779 = vunpack.c.l.b16 %v483
      %v780 = vunpack.c.l.b16 %v484
      %v781 = vunpack.c.l.b16 %v485
      %v782 = vunpack.c.l.b16 %v486
      %v783 = vunpack.c.l.b16 %v487
      %v784 = vunpack.c.l.b16 %v488
      %v785 = vunpack.c.l.b16 %v489
      %v786 = vunpack.c.l.b16 %v490
      %v787 = vunpack.c.l.b16 %v491
      %v788 = vunpack.c.l.b16 %v492
      %v789 = vunpack.c.l.b16 %v493
      %v790 = vunpack.c.l.b16 %v494
      %v791 = vunpack.c.l.b16 %v495
      %v792 = vunpack.c.l.b16 %v496
      %v793 = vunpack.c.l.b16 %v497
      %v794 = vunpack.c.l.b16 %v498
      %v795 = vunpack.c.l.b16 %v499
      %v796 = vunpack.c.l.b16 %v500
      %v797 = vunpack.c.l.b16 %v501
      %v798 = vunpack.c.l.b16 %v502
      %v799 = vunpack.c.l.b16 %v503
      %v800 = vunpack.c.l.b16 %v504
      %v801 = vpack.c.b16 %v658, %v657
      %v802 = vpack.c.b16 %v660, %v659
      %v803 = vpack.c.b16 %v662, %v661
      %v804 = vpack.c.b16 %v664, %v663
      %v805 = vpack.c.b16 %v666, %v665
      %v806 = vpack.c.b16 %v668, %v667
      %v807 = vpack.c.b16 %v670, %v669
      %v808 = vpack.c.b16 %v672, %v671
      %v809 = vpack.c.b16 %v674, %v673
      %v810 = vpack.c.b16 %v676, %v675
      %v811 = vpack.c.b16 %v678, %v677
      %v812 = vpack.c.b16 %v680, %v679
      %v813 = vpack.c.b16 %v682, %v681
      %v814 = vpack.c.b16 %v684, %v683
      %v815 = vpack.c.b16 %v686, %v685
      %v816 = vpack.c.b16 %v688, %v687
      %v817 = vpack.c.b16 %v690, %v689
      %v818 = vpack.c.b16 %v692, %v691
      %v819 = vpack.c.b16 %v694, %v693
      %v820 = vpack.c.b16 %v696, %v695
      %v821 = vpack.c.b16 %v698, %v697
      %v822 = vpack.c.b16 %v700, %v699
      %v823 = vpack.c.b16 %v702, %v701
      %v824 = vpack.c.b16 %v704, %v703
      %v825 = vpack.c.b16 %v706, %v705
      %v826 = vpack.c.b16 %v708, %v707
      %v827 = vpack.c.b16 %v710, %v709
      %v828 = vpack.c.b16 %v712, %v711
      %v829 = vpack.c.b16 %v714, %v713
      %v830 = vpack.c.b16 %v716, %v715
      %v831 = vpack.c.b16 %v718, %v717
      %v832 = vpack.c.b16 %v720, %v719
      %v833 = vpack.c.b16 %v722, %v721
      %v834 = vpack.c.b16 %v724, %v723
      %v835 = vpack.c.b16 %v726, %v725
      %v836 = vpack.c.b16 %v728, %v727
      %v837 = vpack.c.b16 %v730, %v729
      %v838 = vpack.c.b16 %v732, %v731
      %v839 = vpack.c.b16 %v734, %v733
      %v840 = vpack.c.b16 %v736, %v735
      %v841 = vpack.c.b16 %v738, %v737
      %v842 = vpack.c.b16 %v740, %v739
      %v843 = vpack.c.b16 %v742, %v741
      %v844 = vpack.c.b16 %v744, %v743
      %v845 = vpack.c.b16 %v746, %v745
      %v846 = vpack.c.b16 %v748, %v747
      %v847 = vpack.c.b16 %v750, %v749
      %v848 = vpack.c.b16 %v752, %v751
      %v849 = vpack.c.b16 %v754, %v753
      %v850 = vpack.c.b16 %v756, %v755
      %v851 = vpack.c.b16 %v758, %v757
      %v852 = vpack.c.b16 %v760, %v759
      %v853 = vpack.c.b16 %v762, %v761
      %v854 = vpack.c.b16 %v764, %v763
      %v855 = vpack.c.b16 %v766, %v765
      %v856 = vpack.c.b16 %v768, %v767
      %v857 = vpack.c.b16 %v770, %v769
      %v858 = vpack.c.b16 %v772, %v771
      %v859 = vpack.c.b16 %v774, %v773
      %v860 = vpack.c.b16 %v776, %v775
      %v861 = vpack.c.b16 %v778, %v777
      %v862 = vpack.c.b16 %v780, %v779
      %v863 = vpack.c.b16 %v782, %v781
      %v864 = vpack.c.b16 %v784, %v783
      %v865 = vpack.c.b16 %v786, %v785
      %v866 = vpack.c.b16 %v788, %v787
      %v867 = vpack.c.b16 %v790, %v789
      %v868 = vpack.c.b16 %v792, %v791
      %v869 = vpack.c.b16 %v794, %v793
      %v870 = vpack.c.b16 %v796, %v795
      %v871 = vpack.c.b16 %v798, %v797
      %v872 = vpack.c.b16 %v800, %v799
      %vm873 = vcmask 64512
      %v875 = vsel %vm873, %v801, 0
      %v878 = vsel %vm873, %v802, 0
      %v881 = vsel %vm873, %v803, 0
      %v884 = vsel %vm873, %v804, 0
      %v887 = vsel %vm873, %v805, 0
      %v890 = vsel %vm873, %v806, 0
      %v893 = vsel %vm873, %v807, 0
      %v896 = vsel %vm873, %v808, 0
      %v899 = vsel %vm873, %v809, 0
      %v902 = vsel %vm873, %v810, 0
      %v905 = vsel %vm873, %v811, 0
      %v908 = vsel %vm873, %v812, 0
      %v911 = vsel %vm873, %v813, 0
      %v914 = vsel %vm873, %v814, 0
      %v917 = vsel %vm873, %v815, 0
      %v920 = vsel %vm873, %v816, 0
      %v923 = vsel %vm873, %v817, 0
      %v926 = vsel %vm873, %v818, 0
      %v929 = vsel %vm873, %v819, 0
      %v932 = vsel %vm873, %v820, 0
      %v935 = vsel %vm873, %v821, 0
      %v938 = vsel %vm873, %v822, 0
      %v941 = vsel %vm873, %v823, 0
      %v944 = vsel %vm873, %v824, 0
      %v947 = vsel %vm873, %v825, 0
      %v950 = vsel %vm873, %v826, 0
      %v953 = vsel %vm873, %v827, 0
      %v956 = vsel %vm873, %v828, 0
      %v959 = vsel %vm873, %v829, 0
      %v962 = vsel %vm873, %v830, 0
      %v965 = vsel %vm873, %v831, 0
      %v968 = vsel %vm873, %v832, 0
      %v971 = vsel %vm873, %v833, 0
      %v974 = vsel %vm873, %v834, 0
      %v977 = vsel %vm873, %v835, 0
      %v980 = vsel %vm873, %v836, 0
      %v983 = vsel %vm873, %v837, 0
      %v986 = vsel %vm873, %v838, 0
      %v989 = vsel %vm873, %v839, 0
      %v992 = vsel %vm873, %v840, 0
      %v995 = vsel %vm873, %v841, 0
      %v998 = vsel %vm873, %v842, 0
      %v1001 = vsel %vm873, %v843, 0
      %v1004 = vsel %vm873, %v844, 0
      %v1007 = vsel %vm873, %v845, 0
      %v1010 = vsel %vm873, %v846, 0
      %v1013 = vsel %vm873, %v847, 0
      %v1016 = vsel %vm873, %v848, 0
      %v1019 = vsel %vm873, %v849, 0
      %v1022 = vsel %vm873, %v850, 0
      %v1025 = vsel %vm873, %v851, 0
      %v1028 = vsel %vm873, %v852, 0
      %v1031 = vsel %vm873, %v853, 0
      %v1034 = vsel %vm873, %v854, 0
      %v1037 = vsel %vm873, %v855, 0
      %v1040 = vsel %vm873, %v856, 0
      %v1043 = vsel %vm873, %v857, 0
      %v1046 = vsel %vm873, %v858, 0
      %v1049 = vsel %vm873, %v859, 0
      %v1052 = vsel %vm873, %v860, 0
      %v1055 = vsel %vm873, %v861, 0
      %v1058 = vsel %vm873, %v862, 0
      %v1061 = vsel %vm873, %v863, 0
      %v1064 = vsel %vm873, %v864, 0
      %v1067 = vsel %vm873, %v865, 0
      %v1070 = vsel %vm873, %v866, 0
      %v1073 = vsel %vm873, %v867, 0
      %v1076 = vsel %vm873, %v868, 0
      %v1079 = vsel %vm873, %v869, 0
      %v1082 = vsel %vm873, %v870, 0
      %v1085 = vsel %vm873, %v871, 0
      %v1088 = vsel %vm873, %v872, 0
      %vm1090 = vcmask 1043456
      %v1092 = vsel %vm1090, %v505, 0
      %1094 = vmatprep.subr.bf16.mxu0 0
      %1095 = vmatpush1.bf16.msra.mxu0 0
      %1096 = vmatprep.subr.bf16.mxu0 0
      %1097 = vmatpush1.bf16.msra.mxu0 0
      %1098 = vmatprep.subr.bf16.mxu0 0
      %1099 = vmatpush1.bf16.msra.mxu0 0
      %1100 = vmatprep.subr.bf16.mxu0 0
      %1101 = vmatpush1.bf16.msra.mxu0 0
      %1102 = vmatprep.subr.bf16.mxu0 0
      %1103 = vmatpush1.bf16.msra.mxu0 0
      %1104 = vmatprep.subr.bf16.mxu0 0
      %1105 = vmatpush1.bf16.msra.mxu0 0
      %1106 = vmatprep.subr.bf16.mxu0 0
      %1107 = vmatpush1.bf16.msra.mxu0 0
      %1108 = vmatprep.subr.bf16.mxu0 0
      %1109 = vmatpush1.bf16.msra.mxu0 %v1092
      %1110 = vmatprep.subr.bf16.mxu0 0
      %1111 = vmatpush2.bf16.msra.mxu0 0
      %1112 = vmatprep.subr.bf16.mxu0 0
      %1113 = vmatpush2.bf16.msra.mxu0 0
      %1114 = vmatprep.subr.bf16.mxu0 0
      %1115 = vmatpush2.bf16.msra.mxu0 0
      %1116 = vmatprep.subr.bf16.mxu0 0
      %1117 = vmatpush2.bf16.msra.mxu0 0
      %1118 = vmatprep.subr.bf16.mxu0 0
      %1119 = vmatpush2.bf16.msra.mxu0 0
      %1120 = vmatprep.subr.bf16.mxu0 0
      %1121 = vmatpush2.bf16.msra.mxu0 0
      %1122 = vmatprep.subr.bf16.mxu0 0
      %1123 = vmatpush2.bf16.msra.mxu0 0
      %1124 = vmatprep.subr.bf16.mxu0 0
      %1125 = vmatpush2.bf16.msra.mxu0 0
      %1126 = vmatprep.mubr.bf16.mxu0 0
      %1127 = vmatmul.mubr.bf16.gmra.mxu0 %v875
      %v1128 = vpop.f32.mrf.mxu0
      %v1129 = vadd.f32 %v511, %v1128
      %v1130 = vpop.f32.mrf.mxu0
      %v1131 = vpop.f32.mrf.mxu0
      %v1132 = vadd.f32 %v511, %v1131
      %v1133 = vpop.f32.mrf.mxu0
      %1134 = vmatprep.mubr.bf16.mxu0 0
      %1135 = vmatmul.mubr.bf16.gmra.mxu0 %v878
      %v1136 = vpop.f32.mrf.mxu0
      %v1137 = vadd.f32 %v511, %v1136
      %v1138 = vpop.f32.mrf.mxu0
      %v1139 = vpop.f32.mrf.mxu0
      %v1140 = vadd.f32 %v511, %v1139
      %v1141 = vpop.f32.mrf.mxu0
      %1142 = vmatprep.mubr.bf16.mxu0 0
      %1143 = vmatmul.mubr.bf16.gmra.mxu0 %v881
      %v1144 = vpop.f32.mrf.mxu0
      %v1145 = vadd.f32 %v511, %v1144
      %v1146 = vpop.f32.mrf.mxu0
      %v1147 = vpop.f32.mrf.mxu0
      %v1148 = vadd.f32 %v511, %v1147
      %v1149 = vpop.f32.mrf.mxu0
      %1150 = vmatprep.mubr.bf16.mxu0 0
      %1151 = vmatmul.mubr.bf16.gmra.mxu0 %v884
      %v1152 = vpop.f32.mrf.mxu0
      %v1153 = vadd.f32 %v511, %v1152
      %v1154 = vpop.f32.mrf.mxu0
      %v1155 = vpop.f32.mrf.mxu0
      %v1156 = vadd.f32 %v511, %v1155
      %v1157 = vpop.f32.mrf.mxu0
      %1158 = vmatprep.mubr.bf16.mxu0 0
      %1159 = vmatmul.mubr.bf16.gmra.mxu0 %v887
      %v1160 = vpop.f32.mrf.mxu0
      %v1161 = vadd.f32 %v511, %v1160
      %v1162 = vpop.f32.mrf.mxu0
      %v1163 = vpop.f32.mrf.mxu0
      %v1164 = vadd.f32 %v511, %v1163
      %v1165 = vpop.f32.mrf.mxu0
      %1166 = vmatprep.mubr.bf16.mxu0 0
      %1167 = vmatmul.mubr.bf16.gmra.mxu0 %v890
      %v1168 = vpop.f32.mrf.mxu0
      %v1169 = vadd.f32 %v511, %v1168
      %v1170 = vpop.f32.mrf.mxu0
      %v1171 = vpop.f32.mrf.mxu0
      %v1172 = vadd.f32 %v511, %v1171
      %v1173 = vpop.f32.mrf.mxu0
      %1174 = vmatprep.mubr.bf16.mxu0 0
      %1175 = vmatmul.mubr.bf16.gmra.mxu0 %v893
      %v1176 = vpop.f32.mrf.mxu0
      %v1177 = vadd.f32 %v511, %v1176
      %v1178 = vpop.f32.mrf.mxu0
      %v1179 = vpop.f32.mrf.mxu0
      %v1180 = vadd.f32 %v511, %v1179
      %v1181 = vpop.f32.mrf.mxu0
      %1182 = vmatprep.mubr.bf16.mxu0 0
      %1183 = vmatmul.mubr.bf16.gmra.mxu0 %v896
      %v1184 = vpop.f32.mrf.mxu0
      %v1185 = vadd.f32 %v511, %v1184
      %v1186 = vpop.f32.mrf.mxu0
      %v1187 = vpop.f32.mrf.mxu0
      %v1188 = vadd.f32 %v511, %v1187
      %v1189 = vpop.f32.mrf.mxu0
      %1190 = vmatprep.mubr.bf16.mxu0 0
      %1191 = vmatmul.mubr.bf16.gmra.mxu0 %v899
      %v1192 = vpop.f32.mrf.mxu0
      %v1193 = vadd.f32 %v511, %v1192
      %v1194 = vpop.f32.mrf.mxu0
      %v1195 = vpop.f32.mrf.mxu0
      %v1196 = vadd.f32 %v511, %v1195
      %v1197 = vpop.f32.mrf.mxu0
      %1198 = vmatprep.mubr.bf16.mxu0 0
      %1199 = vmatmul.mubr.bf16.gmra.mxu0 %v902
      %v1200 = vpop.f32.mrf.mxu0
      %v1201 = vadd.f32 %v511, %v1200
      %v1202 = vpop.f32.mrf.mxu0
      %v1203 = vpop.f32.mrf.mxu0
      %v1204 = vadd.f32 %v511, %v1203
      %v1205 = vpop.f32.mrf.mxu0
      %1206 = vmatprep.mubr.bf16.mxu0 0
      %1207 = vmatmul.mubr.bf16.gmra.mxu0 %v905
      %v1208 = vpop.f32.mrf.mxu0
      %v1209 = vadd.f32 %v511, %v1208
      %v1210 = vpop.f32.mrf.mxu0
      %v1211 = vpop.f32.mrf.mxu0
      %v1212 = vadd.f32 %v511, %v1211
      %v1213 = vpop.f32.mrf.mxu0
      %1214 = vmatprep.mubr.bf16.mxu0 0
      %1215 = vmatmul.mubr.bf16.gmra.mxu0 %v908
      %v1216 = vpop.f32.mrf.mxu0
      %v1217 = vadd.f32 %v511, %v1216
      %v1218 = vpop.f32.mrf.mxu0
      %v1219 = vpop.f32.mrf.mxu0
      %v1220 = vadd.f32 %v511, %v1219
      %v1221 = vpop.f32.mrf.mxu0
      %1222 = vmatprep.mubr.bf16.mxu0 0
      %1223 = vmatmul.mubr.bf16.gmra.mxu0 %v911
      %v1224 = vpop.f32.mrf.mxu0
      %v1225 = vadd.f32 %v511, %v1224
      %v1226 = vpop.f32.mrf.mxu0
      %v1227 = vpop.f32.mrf.mxu0
      %v1228 = vadd.f32 %v511, %v1227
      %v1229 = vpop.f32.mrf.mxu0
      %1230 = vmatprep.mubr.bf16.mxu0 0
      %1231 = vmatmul.mubr.bf16.gmra.mxu0 %v914
      %v1232 = vpop.f32.mrf.mxu0
      %v1233 = vadd.f32 %v511, %v1232
      %v1234 = vpop.f32.mrf.mxu0
      %v1235 = vpop.f32.mrf.mxu0
      %v1236 = vadd.f32 %v511, %v1235
      %v1237 = vpop.f32.mrf.mxu0
      %1238 = vmatprep.mubr.bf16.mxu0 0
      %1239 = vmatmul.mubr.bf16.gmra.mxu0 %v917
      %v1240 = vpop.f32.mrf.mxu0
      %v1241 = vadd.f32 %v511, %v1240
      %v1242 = vpop.f32.mrf.mxu0
      %v1243 = vpop.f32.mrf.mxu0
      %v1244 = vadd.f32 %v511, %v1243
      %v1245 = vpop.f32.mrf.mxu0
      %1246 = vmatprep.mubr.bf16.mxu0 0
      %1247 = vmatmul.mubr.bf16.gmra.mxu0 %v920
      %v1248 = vpop.f32.mrf.mxu0
      %v1249 = vadd.f32 %v511, %v1248
      %v1250 = vpop.f32.mrf.mxu0
      %v1251 = vpop.f32.mrf.mxu0
      %v1252 = vadd.f32 %v511, %v1251
      %v1253 = vpop.f32.mrf.mxu0
      %1254 = vmatprep.mubr.bf16.mxu0 0
      %1255 = vmatmul.mubr.bf16.gmra.mxu0 %v923
      %v1256 = vpop.f32.mrf.mxu0
      %v1257 = vadd.f32 %v511, %v1256
      %v1258 = vpop.f32.mrf.mxu0
      %v1259 = vpop.f32.mrf.mxu0
      %v1260 = vadd.f32 %v511, %v1259
      %v1261 = vpop.f32.mrf.mxu0
      %1262 = vmatprep.mubr.bf16.mxu0 0
      %1263 = vmatmul.mubr.bf16.gmra.mxu0 %v926
      %v1264 = vpop.f32.mrf.mxu0
      %v1265 = vadd.f32 %v511, %v1264
      %v1266 = vpop.f32.mrf.mxu0
      %v1267 = vpop.f32.mrf.mxu0
      %v1268 = vadd.f32 %v511, %v1267
      %v1269 = vpop.f32.mrf.mxu0
      %1270 = vmatprep.mubr.bf16.mxu0 0
      %1271 = vmatmul.mubr.bf16.gmra.mxu0 %v929
      %v1272 = vpop.f32.mrf.mxu0
      %v1273 = vadd.f32 %v511, %v1272
      %v1274 = vpop.f32.mrf.mxu0
      %v1275 = vpop.f32.mrf.mxu0
      %v1276 = vadd.f32 %v511, %v1275
      %v1277 = vpop.f32.mrf.mxu0
      %1278 = vmatprep.mubr.bf16.mxu0 0
      %1279 = vmatmul.mubr.bf16.gmra.mxu0 %v932
      %v1280 = vpop.f32.mrf.mxu0
      %v1281 = vadd.f32 %v511, %v1280
      %v1282 = vpop.f32.mrf.mxu0
      %v1283 = vpop.f32.mrf.mxu0
      %v1284 = vadd.f32 %v511, %v1283
      %v1285 = vpop.f32.mrf.mxu0
      %1286 = vmatprep.mubr.bf16.mxu0 0
      %1287 = vmatmul.mubr.bf16.gmra.mxu0 %v935
      %v1288 = vpop.f32.mrf.mxu0
      %v1289 = vadd.f32 %v511, %v1288
      %v1290 = vpop.f32.mrf.mxu0
      %v1291 = vpop.f32.mrf.mxu0
      %v1292 = vadd.f32 %v511, %v1291
      %v1293 = vpop.f32.mrf.mxu0
      %1294 = vmatprep.mubr.bf16.mxu0 0
      %1295 = vmatmul.mubr.bf16.gmra.mxu0 %v938
      %v1296 = vpop.f32.mrf.mxu0
      %v1297 = vadd.f32 %v511, %v1296
      %v1298 = vpop.f32.mrf.mxu0
      %v1299 = vpop.f32.mrf.mxu0
      %v1300 = vadd.f32 %v511, %v1299
      %v1301 = vpop.f32.mrf.mxu0
      %1302 = vmatprep.mubr.bf16.mxu0 0
      %1303 = vmatmul.mubr.bf16.gmra.mxu0 %v941
      %v1304 = vpop.f32.mrf.mxu0
      %v1305 = vadd.f32 %v511, %v1304
      %v1306 = vpop.f32.mrf.mxu0
      %v1307 = vpop.f32.mrf.mxu0
      %v1308 = vadd.f32 %v511, %v1307
      %v1309 = vpop.f32.mrf.mxu0
      %1310 = vmatprep.mubr.bf16.mxu0 0
      %1311 = vmatmul.mubr.bf16.gmra.mxu0 %v944
      %v1312 = vpop.f32.mrf.mxu0
      %v1313 = vadd.f32 %v511, %v1312
      %v1314 = vpop.f32.mrf.mxu0
      %v1315 = vpop.f32.mrf.mxu0
      %v1316 = vadd.f32 %v511, %v1315
      %v1317 = vpop.f32.mrf.mxu0
      %1318 = vmatprep.mubr.bf16.mxu0 0
      %1319 = vmatmul.mubr.bf16.gmra.mxu0 %v947
      %v1320 = vpop.f32.mrf.mxu0
      %v1321 = vadd.f32 %v511, %v1320
      %v1322 = vpop.f32.mrf.mxu0
      %v1323 = vpop.f32.mrf.mxu0
      %v1324 = vadd.f32 %v511, %v1323
      %v1325 = vpop.f32.mrf.mxu0
      %1326 = vmatprep.mubr.bf16.mxu0 0
      %1327 = vmatmul.mubr.bf16.gmra.mxu0 %v950
      %v1328 = vpop.f32.mrf.mxu0
      %v1329 = vadd.f32 %v511, %v1328
      %v1330 = vpop.f32.mrf.mxu0
      %v1331 = vpop.f32.mrf.mxu0
      %v1332 = vadd.f32 %v511, %v1331
      %v1333 = vpop.f32.mrf.mxu0
      %1334 = vmatprep.mubr.bf16.mxu0 0
      %1335 = vmatmul.mubr.bf16.gmra.mxu0 %v953
      %v1336 = vpop.f32.mrf.mxu0
      %v1337 = vadd.f32 %v511, %v1336
      %v1338 = vpop.f32.mrf.mxu0
      %v1339 = vpop.f32.mrf.mxu0
      %v1340 = vadd.f32 %v511, %v1339
      %v1341 = vpop.f32.mrf.mxu0
      %1342 = vmatprep.mubr.bf16.mxu0 0
      %1343 = vmatmul.mubr.bf16.gmra.mxu0 %v956
      %v1344 = vpop.f32.mrf.mxu0
      %v1345 = vadd.f32 %v511, %v1344
      %v1346 = vpop.f32.mrf.mxu0
      %v1347 = vpop.f32.mrf.mxu0
      %v1348 = vadd.f32 %v511, %v1347
      %v1349 = vpop.f32.mrf.mxu0
      %1350 = vmatprep.mubr.bf16.mxu0 0
      %1351 = vmatmul.mubr.bf16.gmra.mxu0 %v959
      %v1352 = vpop.f32.mrf.mxu0
      %v1353 = vadd.f32 %v511, %v1352
      %v1354 = vpop.f32.mrf.mxu0
      %v1355 = vpop.f32.mrf.mxu0
      %v1356 = vadd.f32 %v511, %v1355
      %v1357 = vpop.f32.mrf.mxu0
      %1358 = vmatprep.mubr.bf16.mxu0 0
      %1359 = vmatmul.mubr.bf16.gmra.mxu0 %v962
      %v1360 = vpop.f32.mrf.mxu0
      %v1361 = vadd.f32 %v511, %v1360
      %v1362 = vpop.f32.mrf.mxu0
      %v1363 = vpop.f32.mrf.mxu0
      %v1364 = vadd.f32 %v511, %v1363
      %v1365 = vpop.f32.mrf.mxu0
      %1366 = vmatprep.mubr.bf16.mxu0 0
      %1367 = vmatmul.mubr.bf16.gmra.mxu0 %v965
      %v1368 = vpop.f32.mrf.mxu0
      %v1369 = vadd.f32 %v511, %v1368
      %v1370 = vpop.f32.mrf.mxu0
      %v1371 = vpop.f32.mrf.mxu0
      %v1372 = vadd.f32 %v511, %v1371
      %v1373 = vpop.f32.mrf.mxu0
      %1374 = vmatprep.mubr.bf16.mxu0 0
      %1375 = vmatmul.mubr.bf16.gmra.mxu0 %v968
      %v1376 = vpop.f32.mrf.mxu0
      %v1377 = vadd.f32 %v511, %v1376
      %v1378 = vpop.f32.mrf.mxu0
      %v1379 = vpop.f32.mrf.mxu0
      %v1380 = vadd.f32 %v511, %v1379
      %v1381 = vpop.f32.mrf.mxu0
      %1382 = vmatprep.mubr.bf16.mxu0 0
      %1383 = vmatmul.mubr.bf16.gmra.mxu0 %v971
      %v1384 = vpop.f32.mrf.mxu0
      %v1385 = vadd.f32 %v511, %v1384
      %v1386 = vpop.f32.mrf.mxu0
      %v1387 = vpop.f32.mrf.mxu0
      %v1388 = vadd.f32 %v511, %v1387
      %v1389 = vpop.f32.mrf.mxu0
      %1390 = vmatprep.mubr.bf16.mxu0 0
      %1391 = vmatmul.mubr.bf16.gmra.mxu0 %v974
      %v1392 = vpop.f32.mrf.mxu0
      %v1393 = vadd.f32 %v511, %v1392
      %v1394 = vpop.f32.mrf.mxu0
      %v1395 = vpop.f32.mrf.mxu0
      %v1396 = vadd.f32 %v511, %v1395
      %v1397 = vpop.f32.mrf.mxu0
      %1398 = vmatprep.mubr.bf16.mxu0 0
      %1399 = vmatmul.mubr.bf16.gmra.mxu0 %v977
      %v1400 = vpop.f32.mrf.mxu0
      %v1401 = vadd.f32 %v511, %v1400
      %v1402 = vpop.f32.mrf.mxu0
      %v1403 = vpop.f32.mrf.mxu0
      %v1404 = vadd.f32 %v511, %v1403
      %v1405 = vpop.f32.mrf.mxu0
      %1406 = vmatprep.mubr.bf16.mxu0 0
      %1407 = vmatmul.mubr.bf16.gmra.mxu0 %v980
      %v1408 = vpop.f32.mrf.mxu0
      %v1409 = vadd.f32 %v511, %v1408
      %v1410 = vpop.f32.mrf.mxu0
      %v1411 = vpop.f32.mrf.mxu0
      %v1412 = vadd.f32 %v511, %v1411
      %v1413 = vpop.f32.mrf.mxu0
      %1414 = vmatprep.mubr.bf16.mxu0 0
      %1415 = vmatmul.mubr.bf16.gmra.mxu0 %v983
      %v1416 = vpop.f32.mrf.mxu0
      %v1417 = vadd.f32 %v511, %v1416
      %v1418 = vpop.f32.mrf.mxu0
      %v1419 = vpop.f32.mrf.mxu0
      %v1420 = vadd.f32 %v511, %v1419
      %v1421 = vpop.f32.mrf.mxu0
      %1422 = vmatprep.mubr.bf16.mxu0 0
      %1423 = vmatmul.mubr.bf16.gmra.mxu0 %v986
      %v1424 = vpop.f32.mrf.mxu0
      %v1425 = vadd.f32 %v511, %v1424
      %v1426 = vpop.f32.mrf.mxu0
      %v1427 = vpop.f32.mrf.mxu0
      %v1428 = vadd.f32 %v511, %v1427
      %v1429 = vpop.f32.mrf.mxu0
      %1430 = vmatprep.mubr.bf16.mxu0 0
      %1431 = vmatmul.mubr.bf16.gmra.mxu0 %v989
      %v1432 = vpop.f32.mrf.mxu0
      %v1433 = vadd.f32 %v511, %v1432
      %v1434 = vpop.f32.mrf.mxu0
      %v1435 = vpop.f32.mrf.mxu0
      %v1436 = vadd.f32 %v511, %v1435
      %v1437 = vpop.f32.mrf.mxu0
      %1438 = vmatprep.mubr.bf16.mxu0 0
      %1439 = vmatmul.mubr.bf16.gmra.mxu0 %v992
      %v1440 = vpop.f32.mrf.mxu0
      %v1441 = vadd.f32 %v511, %v1440
      %v1442 = vpop.f32.mrf.mxu0
      %v1443 = vpop.f32.mrf.mxu0
      %v1444 = vadd.f32 %v511, %v1443
      %v1445 = vpop.f32.mrf.mxu0
      %1446 = vmatprep.mubr.bf16.mxu0 0
      %1447 = vmatmul.mubr.bf16.gmra.mxu0 %v995
      %v1448 = vpop.f32.mrf.mxu0
      %v1449 = vadd.f32 %v511, %v1448
      %v1450 = vpop.f32.mrf.mxu0
      %v1451 = vpop.f32.mrf.mxu0
      %v1452 = vadd.f32 %v511, %v1451
      %v1453 = vpop.f32.mrf.mxu0
      %1454 = vmatprep.mubr.bf16.mxu0 0
      %1455 = vmatmul.mubr.bf16.gmra.mxu0 %v998
      %v1456 = vpop.f32.mrf.mxu0
      %v1457 = vadd.f32 %v511, %v1456
      %v1458 = vpop.f32.mrf.mxu0
      %v1459 = vpop.f32.mrf.mxu0
      %v1460 = vadd.f32 %v511, %v1459
      %v1461 = vpop.f32.mrf.mxu0
      %1462 = vmatprep.mubr.bf16.mxu0 0
      %1463 = vmatmul.mubr.bf16.gmra.mxu0 %v1001
      %v1464 = vpop.f32.mrf.mxu0
      %v1465 = vadd.f32 %v511, %v1464
      %v1466 = vpop.f32.mrf.mxu0
      %v1467 = vpop.f32.mrf.mxu0
      %v1468 = vadd.f32 %v511, %v1467
      %v1469 = vpop.f32.mrf.mxu0
      %1470 = vmatprep.mubr.bf16.mxu0 0
      %1471 = vmatmul.mubr.bf16.gmra.mxu0 %v1004
      %v1472 = vpop.f32.mrf.mxu0
      %v1473 = vadd.f32 %v511, %v1472
      %v1474 = vpop.f32.mrf.mxu0
      %v1475 = vpop.f32.mrf.mxu0
      %v1476 = vadd.f32 %v511, %v1475
      %v1477 = vpop.f32.mrf.mxu0
      %1478 = vmatprep.mubr.bf16.mxu0 0
      %1479 = vmatmul.mubr.bf16.gmra.mxu0 %v1007
      %v1480 = vpop.f32.mrf.mxu0
      %v1481 = vadd.f32 %v511, %v1480
      %v1482 = vpop.f32.mrf.mxu0
      %v1483 = vpop.f32.mrf.mxu0
      %v1484 = vadd.f32 %v511, %v1483
      %v1485 = vpop.f32.mrf.mxu0
      %1486 = vmatprep.mubr.bf16.mxu0 0
      %1487 = vmatmul.mubr.bf16.gmra.mxu0 %v1010
      %v1488 = vpop.f32.mrf.mxu0
      %v1489 = vadd.f32 %v511, %v1488
      %v1490 = vpop.f32.mrf.mxu0
      %v1491 = vpop.f32.mrf.mxu0
      %v1492 = vadd.f32 %v511, %v1491
      %v1493 = vpop.f32.mrf.mxu0
      %1494 = vmatprep.mubr.bf16.mxu0 0
      %1495 = vmatmul.mubr.bf16.gmra.mxu0 %v1013
      %v1496 = vpop.f32.mrf.mxu0
      %v1497 = vadd.f32 %v511, %v1496
      %v1498 = vpop.f32.mrf.mxu0
      %v1499 = vpop.f32.mrf.mxu0
      %v1500 = vadd.f32 %v511, %v1499
      %v1501 = vpop.f32.mrf.mxu0
      %1502 = vmatprep.mubr.bf16.mxu0 0
      %1503 = vmatmul.mubr.bf16.gmra.mxu0 %v1016
      %v1504 = vpop.f32.mrf.mxu0
      %v1505 = vadd.f32 %v511, %v1504
      %v1506 = vpop.f32.mrf.mxu0
      %v1507 = vpop.f32.mrf.mxu0
      %v1508 = vadd.f32 %v511, %v1507
      %v1509 = vpop.f32.mrf.mxu0
      %1510 = vmatprep.mubr.bf16.mxu0 0
      %1511 = vmatmul.mubr.bf16.gmra.mxu0 %v1019
      %v1512 = vpop.f32.mrf.mxu0
      %v1513 = vadd.f32 %v511, %v1512
      %v1514 = vpop.f32.mrf.mxu0
      %v1515 = vpop.f32.mrf.mxu0
      %v1516 = vadd.f32 %v511, %v1515
      %v1517 = vpop.f32.mrf.mxu0
      %1518 = vmatprep.mubr.bf16.mxu0 0
      %1519 = vmatmul.mubr.bf16.gmra.mxu0 %v1022
      %v1520 = vpop.f32.mrf.mxu0
      %v1521 = vadd.f32 %v511, %v1520
      %v1522 = vpop.f32.mrf.mxu0
      %v1523 = vpop.f32.mrf.mxu0
      %v1524 = vadd.f32 %v511, %v1523
      %v1525 = vpop.f32.mrf.mxu0
      %1526 = vmatprep.mubr.bf16.mxu0 0
      %1527 = vmatmul.mubr.bf16.gmra.mxu0 %v1025
      %v1528 = vpop.f32.mrf.mxu0
      %v1529 = vadd.f32 %v511, %v1528
      %v1530 = vpop.f32.mrf.mxu0
      %v1531 = vpop.f32.mrf.mxu0
      %v1532 = vadd.f32 %v511, %v1531
      %v1533 = vpop.f32.mrf.mxu0
      %1534 = vmatprep.mubr.bf16.mxu0 0
      %1535 = vmatmul.mubr.bf16.gmra.mxu0 %v1028
      %v1536 = vpop.f32.mrf.mxu0
      %v1537 = vadd.f32 %v511, %v1536
      %v1538 = vpop.f32.mrf.mxu0
      %v1539 = vpop.f32.mrf.mxu0
      %v1540 = vadd.f32 %v511, %v1539
      %v1541 = vpop.f32.mrf.mxu0
      %1542 = vmatprep.mubr.bf16.mxu0 0
      %1543 = vmatmul.mubr.bf16.gmra.mxu0 %v1031
      %v1544 = vpop.f32.mrf.mxu0
      %v1545 = vadd.f32 %v511, %v1544
      %v1546 = vpop.f32.mrf.mxu0
      %v1547 = vpop.f32.mrf.mxu0
      %v1548 = vadd.f32 %v511, %v1547
      %v1549 = vpop.f32.mrf.mxu0
      %1550 = vmatprep.mubr.bf16.mxu0 0
      %1551 = vmatmul.mubr.bf16.gmra.mxu0 %v1034
      %v1552 = vpop.f32.mrf.mxu0
      %v1553 = vadd.f32 %v511, %v1552
      %v1554 = vpop.f32.mrf.mxu0
      %v1555 = vpop.f32.mrf.mxu0
      %v1556 = vadd.f32 %v511, %v1555
      %v1557 = vpop.f32.mrf.mxu0
      %1558 = vmatprep.mubr.bf16.mxu0 0
      %1559 = vmatmul.mubr.bf16.gmra.mxu0 %v1037
      %v1560 = vpop.f32.mrf.mxu0
      %v1561 = vadd.f32 %v511, %v1560
      %v1562 = vpop.f32.mrf.mxu0
      %v1563 = vpop.f32.mrf.mxu0
      %v1564 = vadd.f32 %v511, %v1563
      %v1565 = vpop.f32.mrf.mxu0
      %1566 = vmatprep.mubr.bf16.mxu0 0
      %1567 = vmatmul.mubr.bf16.gmra.mxu0 %v1040
      %v1568 = vpop.f32.mrf.mxu0
      %v1569 = vadd.f32 %v511, %v1568
      %v1570 = vpop.f32.mrf.mxu0
      %v1571 = vpop.f32.mrf.mxu0
      %v1572 = vadd.f32 %v511, %v1571
      %v1573 = vpop.f32.mrf.mxu0
      %1574 = vmatprep.mubr.bf16.mxu0 0
      %1575 = vmatmul.mubr.bf16.gmra.mxu0 %v1043
      %v1576 = vpop.f32.mrf.mxu0
      %v1577 = vadd.f32 %v511, %v1576
      %v1578 = vpop.f32.mrf.mxu0
      %v1579 = vpop.f32.mrf.mxu0
      %v1580 = vadd.f32 %v511, %v1579
      %v1581 = vpop.f32.mrf.mxu0
      %1582 = vmatprep.mubr.bf16.mxu0 0
      %1583 = vmatmul.mubr.bf16.gmra.mxu0 %v1046
      %v1584 = vpop.f32.mrf.mxu0
      %v1585 = vadd.f32 %v511, %v1584
      %v1586 = vpop.f32.mrf.mxu0
      %v1587 = vpop.f32.mrf.mxu0
      %v1588 = vadd.f32 %v511, %v1587
      %v1589 = vpop.f32.mrf.mxu0
      %1590 = vmatprep.mubr.bf16.mxu0 0
      %1591 = vmatmul.mubr.bf16.gmra.mxu0 %v1049
      %v1592 = vpop.f32.mrf.mxu0
      %v1593 = vadd.f32 %v511, %v1592
      %v1594 = vpop.f32.mrf.mxu0
      %v1595 = vpop.f32.mrf.mxu0
      %v1596 = vadd.f32 %v511, %v1595
      %v1597 = vpop.f32.mrf.mxu0
      %1598 = vmatprep.mubr.bf16.mxu0 0
      %1599 = vmatmul.mubr.bf16.gmra.mxu0 %v1052
      %v1600 = vpop.f32.mrf.mxu0
      %v1601 = vadd.f32 %v511, %v1600
      %v1602 = vpop.f32.mrf.mxu0
      %v1603 = vpop.f32.mrf.mxu0
      %v1604 = vadd.f32 %v511, %v1603
      %v1605 = vpop.f32.mrf.mxu0
      %1606 = vmatprep.mubr.bf16.mxu0 0
      %1607 = vmatmul.mubr.bf16.gmra.mxu0 %v1055
      %v1608 = vpop.f32.mrf.mxu0
      %v1609 = vadd.f32 %v511, %v1608
      %v1610 = vpop.f32.mrf.mxu0
      %v1611 = vpop.f32.mrf.mxu0
      %v1612 = vadd.f32 %v511, %v1611
      %v1613 = vpop.f32.mrf.mxu0
      %1614 = vmatprep.mubr.bf16.mxu0 0
      %1615 = vmatmul.mubr.bf16.gmra.mxu0 %v1058
      %v1616 = vpop.f32.mrf.mxu0
      %v1617 = vadd.f32 %v511, %v1616
      %v1618 = vpop.f32.mrf.mxu0
      %v1619 = vpop.f32.mrf.mxu0
      %v1620 = vadd.f32 %v511, %v1619
      %v1621 = vpop.f32.mrf.mxu0
      %1622 = vmatprep.mubr.bf16.mxu0 0
      %1623 = vmatmul.mubr.bf16.gmra.mxu0 %v1061
      %v1624 = vpop.f32.mrf.mxu0
      %v1625 = vadd.f32 %v511, %v1624
      %v1626 = vpop.f32.mrf.mxu0
      %v1627 = vpop.f32.mrf.mxu0
      %v1628 = vadd.f32 %v511, %v1627
      %v1629 = vpop.f32.mrf.mxu0
      %1630 = vmatprep.mubr.bf16.mxu0 0
      %1631 = vmatmul.mubr.bf16.gmra.mxu0 %v1064
      %v1632 = vpop.f32.mrf.mxu0
      %v1633 = vadd.f32 %v511, %v1632
      %v1634 = vpop.f32.mrf.mxu0
      %v1635 = vpop.f32.mrf.mxu0
      %v1636 = vadd.f32 %v511, %v1635
      %v1637 = vpop.f32.mrf.mxu0
      %1638 = vmatprep.mubr.bf16.mxu0 0
      %1639 = vmatmul.mubr.bf16.gmra.mxu0 %v1067
      %v1640 = vpop.f32.mrf.mxu0
      %v1641 = vadd.f32 %v511, %v1640
      %v1642 = vpop.f32.mrf.mxu0
      %v1643 = vpop.f32.mrf.mxu0
      %v1644 = vadd.f32 %v511, %v1643
      %v1645 = vpop.f32.mrf.mxu0
      %1646 = vmatprep.mubr.bf16.mxu0 0
      %1647 = vmatmul.mubr.bf16.gmra.mxu0 %v1070
      %v1648 = vpop.f32.mrf.mxu0
      %v1649 = vadd.f32 %v511, %v1648
      %v1650 = vpop.f32.mrf.mxu0
      %v1651 = vpop.f32.mrf.mxu0
      %v1652 = vadd.f32 %v511, %v1651
      %v1653 = vpop.f32.mrf.mxu0
      %1654 = vmatprep.mubr.bf16.mxu0 0
      %1655 = vmatmul.mubr.bf16.gmra.mxu0 %v1073
      %v1656 = vpop.f32.mrf.mxu0
      %v1657 = vadd.f32 %v511, %v1656
      %v1658 = vpop.f32.mrf.mxu0
      %v1659 = vpop.f32.mrf.mxu0
      %v1660 = vadd.f32 %v511, %v1659
      %v1661 = vpop.f32.mrf.mxu0
      %1662 = vmatprep.mubr.bf16.mxu0 0
      %1663 = vmatmul.mubr.bf16.gmra.mxu0 %v1076
      %v1664 = vpop.f32.mrf.mxu0
      %v1665 = vadd.f32 %v511, %v1664
      %v1666 = vpop.f32.mrf.mxu0
      %v1667 = vpop.f32.mrf.mxu0
      %v1668 = vadd.f32 %v511, %v1667
      %v1669 = vpop.f32.mrf.mxu0
      %1670 = vmatprep.mubr.bf16.mxu0 0
      %1671 = vmatmul.mubr.bf16.gmra.mxu0 %v1079
      %v1672 = vpop.f32.mrf.mxu0
      %v1673 = vadd.f32 %v511, %v1672
      %v1674 = vpop.f32.mrf.mxu0
      %v1675 = vpop.f32.mrf.mxu0
      %v1676 = vadd.f32 %v511, %v1675
      %v1677 = vpop.f32.mrf.mxu0
      %1678 = vmatprep.mubr.bf16.mxu0 0
      %1679 = vmatmul.mubr.bf16.gmra.mxu0 %v1082
      %v1680 = vpop.f32.mrf.mxu0
      %v1681 = vadd.f32 %v511, %v1680
      %v1682 = vpop.f32.mrf.mxu0
      %v1683 = vpop.f32.mrf.mxu0
      %v1684 = vadd.f32 %v511, %v1683
      %v1685 = vpop.f32.mrf.mxu0
      %1686 = vmatprep.mubr.bf16.mxu0 0
      %1687 = vmatmul.mubr.bf16.gmra.mxu0 %v1085
      %v1688 = vpop.f32.mrf.mxu0
      %v1689 = vadd.f32 %v511, %v1688
      %v1690 = vpop.f32.mrf.mxu0
      %v1691 = vpop.f32.mrf.mxu0
      %v1692 = vadd.f32 %v511, %v1691
      %v1693 = vpop.f32.mrf.mxu0
      %1694 = vmatprep.mubr.bf16.mxu0 0
      %1695 = vmatmul.mubr.bf16.gmra.mxu0 %v1088
      %v1696 = vpop.f32.mrf.mxu0
      %v1697 = vadd.f32 %v511, %v1696
      %v1698 = vpop.f32.mrf.mxu0
      %v1699 = vpop.f32.mrf.mxu0
      %v1700 = vadd.f32 %v511, %v1699
      %v1701 = vpop.f32.mrf.mxu0
      %1702 = vdwg.mxu0
      %v1703 = vmax.f32 %v1129, 0.0
      %v1704 = vmax.f32 %v1132, 0.0
      %v1705 = vmax.f32 %v1137, 0.0
      %v1706 = vmax.f32 %v1140, 0.0
      %v1707 = vmax.f32 %v1145, 0.0
      %v1708 = vmax.f32 %v1148, 0.0
      %v1709 = vmax.f32 %v1153, 0.0
      %v1710 = vmax.f32 %v1156, 0.0
      %v1711 = vmax.f32 %v1161, 0.0
      %v1712 = vmax.f32 %v1164, 0.0
      %v1713 = vmax.f32 %v1169, 0.0
      %v1714 = vmax.f32 %v1172, 0.0
      %v1715 = vmax.f32 %v1177, 0.0
      %v1716 = vmax.f32 %v1180, 0.0
      %v1717 = vmax.f32 %v1185, 0.0
      %v1718 = vmax.f32 %v1188, 0.0
      %v1719 = vmax.f32 %v1193, 0.0
      %v1720 = vmax.f32 %v1196, 0.0
      %v1721 = vmax.f32 %v1201, 0.0
      %v1722 = vmax.f32 %v1204, 0.0
      %v1723 = vmax.f32 %v1209, 0.0
      %v1724 = vmax.f32 %v1212, 0.0
      %v1725 = vmax.f32 %v1217, 0.0
      %v1726 = vmax.f32 %v1220, 0.0
      %v1727 = vmax.f32 %v1225, 0.0
      %v1728 = vmax.f32 %v1228, 0.0
      %v1729 = vmax.f32 %v1233, 0.0
      %v1730 = vmax.f32 %v1236, 0.0
      %v1731 = vmax.f32 %v1241, 0.0
      %v1732 = vmax.f32 %v1244, 0.0
      %v1733 = vmax.f32 %v1249, 0.0
      %v1734 = vmax.f32 %v1252, 0.0
      %v1735 = vmax.f32 %v1257, 0.0
      %v1736 = vmax.f32 %v1260, 0.0
      %v1737 = vmax.f32 %v1265, 0.0
      %v1738 = vmax.f32 %v1268, 0.0
      %v1739 = vmax.f32 %v1273, 0.0
      %v1740 = vmax.f32 %v1276, 0.0
      %v1741 = vmax.f32 %v1281, 0.0
      %v1742 = vmax.f32 %v1284, 0.0
      %v1743 = vmax.f32 %v1289, 0.0
      %v1744 = vmax.f32 %v1292, 0.0
      %v1745 = vmax.f32 %v1297, 0.0
      %v1746 = vmax.f32 %v1300, 0.0
      %v1747 = vmax.f32 %v1305, 0.0
      %v1748 = vmax.f32 %v1308, 0.0
      %v1749 = vmax.f32 %v1313, 0.0
      %v1750 = vmax.f32 %v1316, 0.0
      %v1751 = vmax.f32 %v1321, 0.0
      %v1752 = vmax.f32 %v1324, 0.0
      %v1753 = vmax.f32 %v1329, 0.0
      %v1754 = vmax.f32 %v1332, 0.0
      %v1755 = vmax.f32 %v1337, 0.0
      %v1756 = vmax.f32 %v1340, 0.0
      %v1757 = vmax.f32 %v1345, 0.0
      %v1758 = vmax.f32 %v1348, 0.0
      %v1759 = vmax.f32 %v1353, 0.0
      %v1760 = vmax.f32 %v1356, 0.0
      %v1761 = vmax.f32 %v1361, 0.0
      %v1762 = vmax.f32 %v1364, 0.0
      %v1763 = vmax.f32 %v1369, 0.0
      %v1764 = vmax.f32 %v1372, 0.0
      %v1765 = vmax.f32 %v1377, 0.0
      %v1766 = vmax.f32 %v1380, 0.0
      %v1767 = vmax.f32 %v1385, 0.0
      %v1768 = vmax.f32 %v1388, 0.0
      %v1769 = vmax.f32 %v1393, 0.0
      %v1770 = vmax.f32 %v1396, 0.0
      %v1771 = vmax.f32 %v1401, 0.0
      %v1772 = vmax.f32 %v1404, 0.0
      %v1773 = vmax.f32 %v1409, 0.0
      %v1774 = vmax.f32 %v1412, 0.0
      %v1775 = vmax.f32 %v1417, 0.0
      %v1776 = vmax.f32 %v1420, 0.0
      %v1777 = vmax.f32 %v1425, 0.0
      %v1778 = vmax.f32 %v1428, 0.0
      %v1779 = vmax.f32 %v1433, 0.0
      %v1780 = vmax.f32 %v1436, 0.0
      %v1781 = vmax.f32 %v1441, 0.0
      %v1782 = vmax.f32 %v1444, 0.0
      %v1783 = vmax.f32 %v1449, 0.0
      %v1784 = vmax.f32 %v1452, 0.0
      %v1785 = vmax.f32 %v1457, 0.0
      %v1786 = vmax.f32 %v1460, 0.0
      %v1787 = vmax.f32 %v1465, 0.0
      %v1788 = vmax.f32 %v1468, 0.0
      %v1789 = vmax.f32 %v1473, 0.0
      %v1790 = vmax.f32 %v1476, 0.0
      %v1791 = vmax.f32 %v1481, 0.0
      %v1792 = vmax.f32 %v1484, 0.0
      %v1793 = vmax.f32 %v1489, 0.0
      %v1794 = vmax.f32 %v1492, 0.0
      %v1795 = vmax.f32 %v1497, 0.0
      %v1796 = vmax.f32 %v1500, 0.0
      %v1797 = vmax.f32 %v1505, 0.0
      %v1798 = vmax.f32 %v1508, 0.0
      %v1799 = vmax.f32 %v1513, 0.0
      %v1800 = vmax.f32 %v1516, 0.0
      %v1801 = vmax.f32 %v1521, 0.0
      %v1802 = vmax.f32 %v1524, 0.0
      %v1803 = vmax.f32 %v1529, 0.0
      %v1804 = vmax.f32 %v1532, 0.0
      %v1805 = vmax.f32 %v1537, 0.0
      %v1806 = vmax.f32 %v1540, 0.0
      %v1807 = vmax.f32 %v1545, 0.0
      %v1808 = vmax.f32 %v1548, 0.0
      %v1809 = vmax.f32 %v1553, 0.0
      %v1810 = vmax.f32 %v1556, 0.0
      %v1811 = vmax.f32 %v1561, 0.0
      %v1812 = vmax.f32 %v1564, 0.0
      %v1813 = vmax.f32 %v1569, 0.0
      %v1814 = vmax.f32 %v1572, 0.0
      %v1815 = vmax.f32 %v1577, 0.0
      %v1816 = vmax.f32 %v1580, 0.0
      %v1817 = vmax.f32 %v1585, 0.0
      %v1818 = vmax.f32 %v1588, 0.0
      %v1819 = vmax.f32 %v1593, 0.0
      %v1820 = vmax.f32 %v1596, 0.0
      %v1821 = vmax.f32 %v1601, 0.0
      %v1822 = vmax.f32 %v1604, 0.0
      %v1823 = vmax.f32 %v1609, 0.0
      %v1824 = vmax.f32 %v1612, 0.0
      %v1825 = vmax.f32 %v1617, 0.0
      %v1826 = vmax.f32 %v1620, 0.0
      %v1827 = vmax.f32 %v1625, 0.0
      %v1828 = vmax.f32 %v1628, 0.0
      %v1829 = vmax.f32 %v1633, 0.0
      %v1830 = vmax.f32 %v1636, 0.0
      %v1831 = vmax.f32 %v1641, 0.0
      %v1832 = vmax.f32 %v1644, 0.0
      %v1833 = vmax.f32 %v1649, 0.0
      %v1834 = vmax.f32 %v1652, 0.0
      %v1835 = vmax.f32 %v1657, 0.0
      %v1836 = vmax.f32 %v1660, 0.0
      %v1837 = vmax.f32 %v1665, 0.0
      %v1838 = vmax.f32 %v1668, 0.0
      %v1839 = vmax.f32 %v1673, 0.0
      %v1840 = vmax.f32 %v1676, 0.0
      %v1841 = vmax.f32 %v1681, 0.0
      %v1842 = vmax.f32 %v1684, 0.0
      %v1843 = vmax.f32 %v1689, 0.0
      %v1844 = vmax.f32 %v1692, 0.0
      %v1845 = vmax.f32 %v1697, 0.0
      %v1846 = vmax.f32 %v1700, 0.0
      %v1847 = vld [vmem:[%s1] sm:$0xff]
      %v1848 = vld [vmem:[%s1 + $0x8] sm:$0xff]
      %v1849 = vld [vmem:[%s1 + $0x10] sm:$0xff]
      %v1850 = vld [vmem:[%s1 + $0x18] sm:$0xff]
      %v1851 = vld [vmem:[%s1 + $0x20] sm:$0xff]
      %v1852 = vld [vmem:[%s1 + $0x28] sm:$0xff]
      %v1853 = vld [vmem:[%s1 + $0x30] sm:$0xff]
      %v1854 = vld [vmem:[%s1 + $0x38] sm:$0xff]
      %v1855 = vld [vmem:[%s1 + $0x40] sm:$0xff]
      %v1856 = vld [vmem:[%s1 + $0x48] sm:$0xff]
      %v1857 = vld [vmem:[%s1 + $0x50] sm:$0xff]
      %v1858 = vld [vmem:[%s1 + $0x58] sm:$0xff]
      %v1859 = vld [vmem:[%s1 + $0x60] sm:$0xff]
      %v1860 = vld [vmem:[%s1 + $0x68] sm:$0xff]
      %v1861 = vld [vmem:[%s1 + $0x70] sm:$0xff]
      %v1862 = vld [vmem:[%s1 + $0x78] sm:$0xff]
      %v1863 = vld [vmem:[%s1 + $0x80] sm:$0xff]
      %v1864 = vld [vmem:[%s1 + $0x88] sm:$0xff]
      %v1865 = vld [vmem:[%s1 + $0x90] sm:$0xff]
      %v1866 = vld [vmem:[%s1 + $0x98] sm:$0xff]
      %v1867 = vld [vmem:[%s1 + $0xa0] sm:$0xff]
      %v1868 = vld [vmem:[%s1 + $0xa8] sm:$0xff]
      %v1869 = vld [vmem:[%s1 + $0xb0] sm:$0xff]
      %v1870 = vld [vmem:[%s1 + $0xb8] sm:$0xff]
      %v1871 = vld [vmem:[%s1 + $0xc0] sm:$0xff]
      %v1872 = vld [vmem:[%s1 + $0xc8] sm:$0xff]
      %v1873 = vld [vmem:[%s1 + $0xd0] sm:$0xff]
      %v1874 = vld [vmem:[%s1 + $0xd8] sm:$0xff]
      %v1875 = vld [vmem:[%s1 + $0xe0] sm:$0xff]
      %v1876 = vld [vmem:[%s1 + $0xe8] sm:$0xff]
      %v1877 = vld [vmem:[%s1 + $0xf0] sm:$0xff]
      %v1878 = vld [vmem:[%s1 + $0xf8] sm:$0xff]
      %v1879 = vld [vmem:[%s1 + $0x100] sm:$0xff]
      %v1880 = vld [vmem:[%s1 + $0x108] sm:$0xff]
      %v1881 = vld [vmem:[%s1 + $0x110] sm:$0xff]
      %v1882 = vld [vmem:[%s1 + $0x118] sm:$0xff]
      %v1883 = vld [vmem:[%s1 + $0x120] sm:$0xff]
      %v1884 = vld [vmem:[%s1 + $0x128] sm:$0xff]
      %v1885 = vld [vmem:[%s1 + $0x130] sm:$0xff]
      %v1886 = vld [vmem:[%s1 + $0x138] sm:$0xff]
      %v1887 = vld [vmem:[%s1 + $0x140] sm:$0xff]
      %v1888 = vld [vmem:[%s1 + $0x148] sm:$0xff]
      %v1889 = vld [vmem:[%s1 + $0x150] sm:$0xff]
      %v1890 = vld [vmem:[%s1 + $0x158] sm:$0xff]
      %v1891 = vld [vmem:[%s1 + $0x160] sm:$0xff]
      %v1892 = vld [vmem:[%s1 + $0x168] sm:$0xff]
      %v1893 = vld [vmem:[%s1 + $0x170] sm:$0xff]
      %v1894 = vld [vmem:[%s1 + $0x178] sm:$0xff]
      %v1895 = vld [vmem:[%s1 + $0x180] sm:$0xff]
      %v1896 = vld [vmem:[%s1 + $0x188] sm:$0xff]
      %v1897 = vld [vmem:[%s1 + $0x190] sm:$0xff]
      %v1898 = vld [vmem:[%s1 + $0x198] sm:$0xff]
      %v1899 = vld [vmem:[%s1 + $0x1a0] sm:$0xff]
      %v1900 = vld [vmem:[%s1 + $0x1a8] sm:$0xff]
      %v1901 = vld [vmem:[%s1 + $0x1b0] sm:$0xff]
      %v1902 = vld [vmem:[%s1 + $0x1b8] sm:$0xff]
      %v1903 = vld [vmem:[%s1 + $0x1c0] sm:$0xff]
      %v1904 = vld [vmem:[%s1 + $0x1c8] sm:$0xff]
      %v1905 = vld [vmem:[%s1 + $0x1d0] sm:$0xff]
      %v1906 = vld [vmem:[%s1 + $0x1d8] sm:$0xff]
      %v1907 = vld [vmem:[%s1 + $0x1e0] sm:$0xff]
      %v1908 = vld [vmem:[%s1 + $0x1e8] sm:$0xff]
      %v1909 = vld [vmem:[%s1 + $0x1f0] sm:$0xff]
      %v1910 = vld [vmem:[%s1 + $0x1f8] sm:$0xff]
      %v1911 = vld [vmem:[%s1 + $0x200] sm:$0xff]
      %v1912 = vld [vmem:[%s1 + $0x208] sm:$0xff]
      %v1913 = vld [vmem:[%s1 + $0x210] sm:$0xff]
      %v1914 = vld [vmem:[%s1 + $0x218] sm:$0xff]
      %v1915 = vld [vmem:[%s1 + $0x220] sm:$0xff]
      %v1916 = vld [vmem:[%s1 + $0x228] sm:$0xff]
      %v1917 = vld [vmem:[%s1 + $0x230] sm:$0xff]
      %v1918 = vld [vmem:[%s1 + $0x238] sm:$0xff]
      %v1919 = vld [vmem:[%s1 + $0x240] sm:$0xff]
      %v1920 = vld [vmem:[%s1 + $0x248] sm:$0xff]
      %v1921 = vld [vmem:[%s1 + $0x250] sm:$0xff]
      %v1922 = vld [vmem:[%s1 + $0x258] sm:$0xff]
      %v1923 = vld [vmem:[%s1 + $0x260] sm:$0xff]
      %v1924 = vld [vmem:[%s1 + $0x268] sm:$0xff]
      %v1925 = vld [vmem:[%s1 + $0x270] sm:$0xff]
      %v1926 = vld [vmem:[%s1 + $0x278] sm:$0xff]
      %v1927 = vld [vmem:[%s1 + $0x280] sm:$0xff]
      %v1928 = vld [vmem:[%s1 + $0x288] sm:$0xff]
      %v1929 = vld [vmem:[%s1 + $0x290] sm:$0xff]
      %v1930 = vld [vmem:[%s1 + $0x298] sm:$0xff]
      %v1931 = vld [vmem:[%s1 + $0x2a0] sm:$0xff]
      %v1932 = vld [vmem:[%s1 + $0x2a8] sm:$0xff]
      %v1933 = vld [vmem:[%s1 + $0x2b0] sm:$0xff]
      %v1934 = vld [vmem:[%s1 + $0x2b8] sm:$0xff]
      %v1935 = vld [vmem:[%s1 + $0x2c0] sm:$0xff]
      %v1936 = vld [vmem:[%s1 + $0x2c8] sm:$0xff]
      %v1937 = vld [vmem:[%s1 + $0x2d0] sm:$0xff]
      %v1938 = vld [vmem:[%s1 + $0x2d8] sm:$0xff]
      %v1939 = vld [vmem:[%s1 + $0x2e0] sm:$0xff]
      %v1940 = vld [vmem:[%s1 + $0x2e8] sm:$0xff]
      %v1941 = vld [vmem:[%s1 + $0x2f0] sm:$0xff]
      %v1942 = vld [vmem:[%s1 + $0x2f8] sm:$0xff]
      %v1943 = vld [vmem:[%s1 + $0x300] sm:$0xff]
      %v1944 = vld [vmem:[%s1 + $0x308] sm:$0xff]
      %v1945 = vld [vmem:[%s1 + $0x310] sm:$0xff]
      %v1946 = vld [vmem:[%s1 + $0x318] sm:$0xff]
      %v1947 = vld [vmem:[%s1 + $0x320] sm:$0xff]
      %v1948 = vld [vmem:[%s1 + $0x328] sm:$0xff]
      %v1949 = vld [vmem:[%s1 + $0x330] sm:$0xff]
      %v1950 = vld [vmem:[%s1 + $0x338] sm:$0xff]
      %v1951 = vld [vmem:[%s1 + $0x340] sm:$0xff]
      %v1952 = vld [vmem:[%s1 + $0x348] sm:$0xff]
      %v1953 = vld [vmem:[%s1 + $0x350] sm:$0xff]
      %v1954 = vld [vmem:[%s1 + $0x358] sm:$0xff]
      %v1955 = vld [vmem:[%s1 + $0x360] sm:$0xff]
      %v1956 = vld [vmem:[%s1 + $0x368] sm:$0xff]
      %v1957 = vld [vmem:[%s1 + $0x370] sm:$0xff]
      %v1958 = vld [vmem:[%s1 + $0x378] sm:$0xff]
      %v1959 = vld [vmem:[%s1 + $0x380] sm:$0xff]
      %v1960 = vld [vmem:[%s1 + $0x388] sm:$0xff]
      %v1961 = vld [vmem:[%s1 + $0x390] sm:$0xff]
      %v1962 = vld [vmem:[%s1 + $0x398] sm:$0xff]
      %v1963 = vld [vmem:[%s1 + $0x3a0] sm:$0xff]
      %v1964 = vld [vmem:[%s1 + $0x3a8] sm:$0xff]
      %v1965 = vld [vmem:[%s1 + $0x3b0] sm:$0xff]
      %v1966 = vld [vmem:[%s1 + $0x3b8] sm:$0xff]
      %v1967 = vld [vmem:[%s1 + $0x3c0] sm:$0xff]
      %v1968 = vld [vmem:[%s1 + $0x3c8] sm:$0xff]
      %v1969 = vld [vmem:[%s1 + $0x3d0] sm:$0xff]
      %v1970 = vld [vmem:[%s1 + $0x3d8] sm:$0xff]
      %v1971 = vld [vmem:[%s1 + $0x3e0] sm:$0xff]
      %v1972 = vld [vmem:[%s1 + $0x3e8] sm:$0xff]
      %v1973 = vld [vmem:[%s1 + $0x3f0] sm:$0xff]
      %v1974 = vld [vmem:[%s1 + $0x3f8] sm:$0xff]
      %v1975 = vld [vmem:[%s1 + $0x400] sm:$0xff]
      %v1976 = vld [vmem:[%s1 + $0x408] sm:$0xff]
      %v1977 = vld [vmem:[%s1 + $0x410] sm:$0xff]
      %v1978 = vld [vmem:[%s1 + $0x418] sm:$0xff]
      %v1979 = vld [vmem:[%s1 + $0x420] sm:$0xff]
      %v1980 = vld [vmem:[%s1 + $0x428] sm:$0xff]
      %v1981 = vld [vmem:[%s1 + $0x430] sm:$0xff]
      %v1982 = vld [vmem:[%s1 + $0x438] sm:$0xff]
      %v1983 = vld [vmem:[%s1 + $0x440] sm:$0xff]
      %v1984 = vld [vmem:[%s1 + $0x448] sm:$0xff]
      %v1985 = vld [vmem:[%s1 + $0x450] sm:$0xff]
      %v1986 = vld [vmem:[%s1 + $0x458] sm:$0xff]
      %v1987 = vld [vmem:[%s1 + $0x460] sm:$0xff]
      %v1988 = vld [vmem:[%s1 + $0x468] sm:$0xff]
      %v1989 = vld [vmem:[%s1 + $0x470] sm:$0xff]
      %v1990 = vld [vmem:[%s1 + $0x478] sm:$0xff]
      %1992 = vset.pattern.permute.xlu0 0
      %1993 = vperm.xlu0 %1992, %v1847
      %v1994 = vpop.permute.xlu0 %1993
      %1997 = vset.pattern.permute.xlu0 0
      %1998 = vperm.xlu0 %1997, %v1848
      %v1999 = vpop.permute.xlu0 %1998
      %2002 = vset.pattern.permute.xlu0 0
      %2003 = vperm.xlu0 %2002, %v1849
      %v2004 = vpop.permute.xlu0 %2003
      %2007 = vset.pattern.permute.xlu0 0
      %2008 = vperm.xlu0 %2007, %v1850
      %v2009 = vpop.permute.xlu0 %2008
      %2012 = vset.pattern.permute.xlu0 0
      %2013 = vperm.xlu0 %2012, %v1851
      %v2014 = vpop.permute.xlu0 %2013
      %2017 = vset.pattern.permute.xlu0 0
      %2018 = vperm.xlu0 %2017, %v1852
      %v2019 = vpop.permute.xlu0 %2018
      %2022 = vset.pattern.permute.xlu0 0
      %2023 = vperm.xlu0 %2022, %v1853
      %v2024 = vpop.permute.xlu0 %2023
      %2027 = vset.pattern.permute.xlu0 0
      %2028 = vperm.xlu0 %2027, %v1854
      %v2029 = vpop.permute.xlu0 %2028
      %2032 = vset.pattern.permute.xlu0 0
      %2033 = vperm.xlu0 %2032, %v1855
      %v2034 = vpop.permute.xlu0 %2033
      %2037 = vset.pattern.permute.xlu0 0
      %2038 = vperm.xlu0 %2037, %v1856
      %v2039 = vpop.permute.xlu0 %2038
      %2042 = vset.pattern.permute.xlu0 0
      %2043 = vperm.xlu0 %2042, %v1857
      %v2044 = vpop.permute.xlu0 %2043
      %2047 = vset.pattern.permute.xlu0 0
      %2048 = vperm.xlu0 %2047, %v1858
      %v2049 = vpop.permute.xlu0 %2048
      %2052 = vset.pattern.permute.xlu0 0
      %2053 = vperm.xlu0 %2052, %v1859
      %v2054 = vpop.permute.xlu0 %2053
      %2057 = vset.pattern.permute.xlu0 0
      %2058 = vperm.xlu0 %2057, %v1860
      %v2059 = vpop.permute.xlu0 %2058
      %2062 = vset.pattern.permute.xlu0 0
      %2063 = vperm.xlu0 %2062, %v1861
      %v2064 = vpop.permute.xlu0 %2063
      %2067 = vset.pattern.permute.xlu0 0
      %2068 = vperm.xlu0 %2067, %v1862
      %v2069 = vpop.permute.xlu0 %2068
      %2072 = vset.pattern.permute.xlu0 0
      %2073 = vperm.xlu0 %2072, %v1863
      %v2074 = vpop.permute.xlu0 %2073
      %2077 = vset.pattern.permute.xlu0 0
      %2078 = vperm.xlu0 %2077, %v1864
      %v2079 = vpop.permute.xlu0 %2078
      %2082 = vset.pattern.permute.xlu0 0
      %2083 = vperm.xlu0 %2082, %v1865
      %v2084 = vpop.permute.xlu0 %2083
      %2087 = vset.pattern.permute.xlu0 0
      %2088 = vperm.xlu0 %2087, %v1866
      %v2089 = vpop.permute.xlu0 %2088
      %2092 = vset.pattern.permute.xlu0 0
      %2093 = vperm.xlu0 %2092, %v1867
      %v2094 = vpop.permute.xlu0 %2093
      %2097 = vset.pattern.permute.xlu0 0
      %2098 = vperm.xlu0 %2097, %v1868
      %v2099 = vpop.permute.xlu0 %2098
      %2102 = vset.pattern.permute.xlu0 0
      %2103 = vperm.xlu0 %2102, %v1869
      %v2104 = vpop.permute.xlu0 %2103
      %2107 = vset.pattern.permute.xlu0 0
      %2108 = vperm.xlu0 %2107, %v1870
      %v2109 = vpop.permute.xlu0 %2108
      %2112 = vset.pattern.permute.xlu0 0
      %2113 = vperm.xlu0 %2112, %v1871
      %v2114 = vpop.permute.xlu0 %2113
      %2117 = vset.pattern.permute.xlu0 0
      %2118 = vperm.xlu0 %2117, %v1872
      %v2119 = vpop.permute.xlu0 %2118
      %2122 = vset.pattern.permute.xlu0 0
      %2123 = vperm.xlu0 %2122, %v1873
      %v2124 = vpop.permute.xlu0 %2123
      %2127 = vset.pattern.permute.xlu0 0
      %2128 = vperm.xlu0 %2127, %v1874
      %v2129 = vpop.permute.xlu0 %2128
      %2132 = vset.pattern.permute.xlu0 0
      %2133 = vperm.xlu0 %2132, %v1875
      %v2134 = vpop.permute.xlu0 %2133
      %2137 = vset.pattern.permute.xlu0 0
      %2138 = vperm.xlu0 %2137, %v1876
      %v2139 = vpop.permute.xlu0 %2138
      %2142 = vset.pattern.permute.xlu0 0
      %2143 = vperm.xlu0 %2142, %v1877
      %v2144 = vpop.permute.xlu0 %2143
      %2147 = vset.pattern.permute.xlu0 0
      %2148 = vperm.xlu0 %2147, %v1878
      %v2149 = vpop.permute.xlu0 %2148
      %2152 = vset.pattern.permute.xlu0 0
      %2153 = vperm.xlu0 %2152, %v1879
      %v2154 = vpop.permute.xlu0 %2153
      %2157 = vset.pattern.permute.xlu0 0
      %2158 = vperm.xlu0 %2157, %v1880
      %v2159 = vpop.permute.xlu0 %2158
      %2162 = vset.pattern.permute.xlu0 0
      %2163 = vperm.xlu0 %2162, %v1881
      %v2164 = vpop.permute.xlu0 %2163
      %2167 = vset.pattern.permute.xlu0 0
      %2168 = vperm.xlu0 %2167, %v1882
      %v2169 = vpop.permute.xlu0 %2168
      %2172 = vset.pattern.permute.xlu0 0
      %2173 = vperm.xlu0 %2172, %v1883
      %v2174 = vpop.permute.xlu0 %2173
      %2177 = vset.pattern.permute.xlu0 0
      %2178 = vperm.xlu0 %2177, %v1884
      %v2179 = vpop.permute.xlu0 %2178
      %2182 = vset.pattern.permute.xlu0 0
      %2183 = vperm.xlu0 %2182, %v1885
      %v2184 = vpop.permute.xlu0 %2183
      %2187 = vset.pattern.permute.xlu0 0
      %2188 = vperm.xlu0 %2187, %v1886
      %v2189 = vpop.permute.xlu0 %2188
      %2192 = vset.pattern.permute.xlu0 0
      %2193 = vperm.xlu0 %2192, %v1887
      %v2194 = vpop.permute.xlu0 %2193
      %2197 = vset.pattern.permute.xlu0 0
      %2198 = vperm.xlu0 %2197, %v1888
      %v2199 = vpop.permute.xlu0 %2198
      %2202 = vset.pattern.permute.xlu0 0
      %2203 = vperm.xlu0 %2202, %v1889
      %v2204 = vpop.permute.xlu0 %2203
      %2207 = vset.pattern.permute.xlu0 0
      %2208 = vperm.xlu0 %2207, %v1890
      %v2209 = vpop.permute.xlu0 %2208
      %2212 = vset.pattern.permute.xlu0 0
      %2213 = vperm.xlu0 %2212, %v1891
      %v2214 = vpop.permute.xlu0 %2213
      %2217 = vset.pattern.permute.xlu0 0
      %2218 = vperm.xlu0 %2217, %v1892
      %v2219 = vpop.permute.xlu0 %2218
      %2222 = vset.pattern.permute.xlu0 0
      %2223 = vperm.xlu0 %2222, %v1893
      %v2224 = vpop.permute.xlu0 %2223
      %2227 = vset.pattern.permute.xlu0 0
      %2228 = vperm.xlu0 %2227, %v1894
      %v2229 = vpop.permute.xlu0 %2228
      %2232 = vset.pattern.permute.xlu0 0
      %2233 = vperm.xlu0 %2232, %v1895
      %v2234 = vpop.permute.xlu0 %2233
      %2237 = vset.pattern.permute.xlu0 0
      %2238 = vperm.xlu0 %2237, %v1896
      %v2239 = vpop.permute.xlu0 %2238
      %2242 = vset.pattern.permute.xlu0 0
      %2243 = vperm.xlu0 %2242, %v1897
      %v2244 = vpop.permute.xlu0 %2243
      %2247 = vset.pattern.permute.xlu0 0
      %2248 = vperm.xlu0 %2247, %v1898
      %v2249 = vpop.permute.xlu0 %2248
      %2252 = vset.pattern.permute.xlu0 0
      %2253 = vperm.xlu0 %2252, %v1899
      %v2254 = vpop.permute.xlu0 %2253
      %2257 = vset.pattern.permute.xlu0 0
      %2258 = vperm.xlu0 %2257, %v1900
      %v2259 = vpop.permute.xlu0 %2258
      %2262 = vset.pattern.permute.xlu0 0
      %2263 = vperm.xlu0 %2262, %v1901
      %v2264 = vpop.permute.xlu0 %2263
      %2267 = vset.pattern.permute.xlu0 0
      %2268 = vperm.xlu0 %2267, %v1902
      %v2269 = vpop.permute.xlu0 %2268
      %2272 = vset.pattern.permute.xlu0 0
      %2273 = vperm.xlu0 %2272, %v1903
      %v2274 = vpop.permute.xlu0 %2273
      %2277 = vset.pattern.permute.xlu0 0
      %2278 = vperm.xlu0 %2277, %v1904
      %v2279 = vpop.permute.xlu0 %2278
      %2282 = vset.pattern.permute.xlu0 0
      %2283 = vperm.xlu0 %2282, %v1905
      %v2284 = vpop.permute.xlu0 %2283
      %2287 = vset.pattern.permute.xlu0 0
      %2288 = vperm.xlu0 %2287, %v1906
      %v2289 = vpop.permute.xlu0 %2288
      %2292 = vset.pattern.permute.xlu0 0
      %2293 = vperm.xlu0 %2292, %v1907
      %v2294 = vpop.permute.xlu0 %2293
      %2297 = vset.pattern.permute.xlu0 0
      %2298 = vperm.xlu0 %2297, %v1908
      %v2299 = vpop.permute.xlu0 %2298
      %2302 = vset.pattern.permute.xlu0 0
      %2303 = vperm.xlu0 %2302, %v1909
      %v2304 = vpop.permute.xlu0 %2303
      %2307 = vset.pattern.permute.xlu0 0
      %2308 = vperm.xlu0 %2307, %v1910
      %v2309 = vpop.permute.xlu0 %2308
      %2312 = vset.pattern.permute.xlu0 0
      %2313 = vperm.xlu0 %2312, %v1911
      %v2314 = vpop.permute.xlu0 %2313
      %2317 = vset.pattern.permute.xlu0 0
      %2318 = vperm.xlu0 %2317, %v1912
      %v2319 = vpop.permute.xlu0 %2318
      %2322 = vset.pattern.permute.xlu0 0
      %2323 = vperm.xlu0 %2322, %v1913
      %v2324 = vpop.permute.xlu0 %2323
      %2327 = vset.pattern.permute.xlu0 0
      %2328 = vperm.xlu0 %2327, %v1914
      %v2329 = vpop.permute.xlu0 %2328
      %2332 = vset.pattern.permute.xlu0 0
      %2333 = vperm.xlu0 %2332, %v1915
      %v2334 = vpop.permute.xlu0 %2333
      %2337 = vset.pattern.permute.xlu0 0
      %2338 = vperm.xlu0 %2337, %v1916
      %v2339 = vpop.permute.xlu0 %2338
      %2342 = vset.pattern.permute.xlu0 0
      %2343 = vperm.xlu0 %2342, %v1917
      %v2344 = vpop.permute.xlu0 %2343
      %2347 = vset.pattern.permute.xlu0 0
      %2348 = vperm.xlu0 %2347, %v1918
      %v2349 = vpop.permute.xlu0 %2348
      %2352 = vset.pattern.permute.xlu0 0
      %2353 = vperm.xlu0 %2352, %v1919
      %v2354 = vpop.permute.xlu0 %2353
      %2357 = vset.pattern.permute.xlu0 0
      %2358 = vperm.xlu0 %2357, %v1920
      %v2359 = vpop.permute.xlu0 %2358
      %2362 = vset.pattern.permute.xlu0 0
      %2363 = vperm.xlu0 %2362, %v1921
      %v2364 = vpop.permute.xlu0 %2363
      %2367 = vset.pattern.permute.xlu0 0
      %2368 = vperm.xlu0 %2367, %v1922
      %v2369 = vpop.permute.xlu0 %2368
      %2372 = vset.pattern.permute.xlu0 0
      %2373 = vperm.xlu0 %2372, %v1923
      %v2374 = vpop.permute.xlu0 %2373
      %2377 = vset.pattern.permute.xlu0 0
      %2378 = vperm.xlu0 %2377, %v1924
      %v2379 = vpop.permute.xlu0 %2378
      %2382 = vset.pattern.permute.xlu0 0
      %2383 = vperm.xlu0 %2382, %v1925
      %v2384 = vpop.permute.xlu0 %2383
      %2387 = vset.pattern.permute.xlu0 0
      %2388 = vperm.xlu0 %2387, %v1926
      %v2389 = vpop.permute.xlu0 %2388
      %2392 = vset.pattern.permute.xlu0 0
      %2393 = vperm.xlu0 %2392, %v1927
      %v2394 = vpop.permute.xlu0 %2393
      %2397 = vset.pattern.permute.xlu0 0
      %2398 = vperm.xlu0 %2397, %v1928
      %v2399 = vpop.permute.xlu0 %2398
      %2402 = vset.pattern.permute.xlu0 0
      %2403 = vperm.xlu0 %2402, %v1929
      %v2404 = vpop.permute.xlu0 %2403
      %2407 = vset.pattern.permute.xlu0 0
      %2408 = vperm.xlu0 %2407, %v1930
      %v2409 = vpop.permute.xlu0 %2408
      %2412 = vset.pattern.permute.xlu0 0
      %2413 = vperm.xlu0 %2412, %v1931
      %v2414 = vpop.permute.xlu0 %2413
      %2417 = vset.pattern.permute.xlu0 0
      %2418 = vperm.xlu0 %2417, %v1932
      %v2419 = vpop.permute.xlu0 %2418
      %2422 = vset.pattern.permute.xlu0 0
      %2423 = vperm.xlu0 %2422, %v1933
      %v2424 = vpop.permute.xlu0 %2423
      %2427 = vset.pattern.permute.xlu0 0
      %2428 = vperm.xlu0 %2427, %v1934
      %v2429 = vpop.permute.xlu0 %2428
      %2432 = vset.pattern.permute.xlu0 0
      %2433 = vperm.xlu0 %2432, %v1935
      %v2434 = vpop.permute.xlu0 %2433
      %2437 = vset.pattern.permute.xlu0 0
      %2438 = vperm.xlu0 %2437, %v1936
      %v2439 = vpop.permute.xlu0 %2438
      %2442 = vset.pattern.permute.xlu0 0
      %2443 = vperm.xlu0 %2442, %v1937
      %v2444 = vpop.permute.xlu0 %2443
      %2447 = vset.pattern.permute.xlu0 0
      %2448 = vperm.xlu0 %2447, %v1938
      %v2449 = vpop.permute.xlu0 %2448
      %2452 = vset.pattern.permute.xlu0 0
      %2453 = vperm.xlu0 %2452, %v1939
      %v2454 = vpop.permute.xlu0 %2453
      %2457 = vset.pattern.permute.xlu0 0
      %2458 = vperm.xlu0 %2457, %v1940
      %v2459 = vpop.permute.xlu0 %2458
      %2462 = vset.pattern.permute.xlu0 0
      %2463 = vperm.xlu0 %2462, %v1941
      %v2464 = vpop.permute.xlu0 %2463
      %2467 = vset.pattern.permute.xlu0 0
      %2468 = vperm.xlu0 %2467, %v1942
      %v2469 = vpop.permute.xlu0 %2468
      %2472 = vset.pattern.permute.xlu0 0
      %2473 = vperm.xlu0 %2472, %v1943
      %v2474 = vpop.permute.xlu0 %2473
      %2477 = vset.pattern.permute.xlu0 0
      %2478 = vperm.xlu0 %2477, %v1944
      %v2479 = vpop.permute.xlu0 %2478
      %2482 = vset.pattern.permute.xlu0 0
      %2483 = vperm.xlu0 %2482, %v1945
      %v2484 = vpop.permute.xlu0 %2483
      %2487 = vset.pattern.permute.xlu0 0
      %2488 = vperm.xlu0 %2487, %v1946
      %v2489 = vpop.permute.xlu0 %2488
      %2492 = vset.pattern.permute.xlu0 0
      %2493 = vperm.xlu0 %2492, %v1947
      %v2494 = vpop.permute.xlu0 %2493
      %2497 = vset.pattern.permute.xlu0 0
      %2498 = vperm.xlu0 %2497, %v1948
      %v2499 = vpop.permute.xlu0 %2498
      %2502 = vset.pattern.permute.xlu0 0
      %2503 = vperm.xlu0 %2502, %v1949
      %v2504 = vpop.permute.xlu0 %2503
      %2507 = vset.pattern.permute.xlu0 0
      %2508 = vperm.xlu0 %2507, %v1950
      %v2509 = vpop.permute.xlu0 %2508
      %2512 = vset.pattern.permute.xlu0 0
      %2513 = vperm.xlu0 %2512, %v1951
      %v2514 = vpop.permute.xlu0 %2513
      %2517 = vset.pattern.permute.xlu0 0
      %2518 = vperm.xlu0 %2517, %v1952
      %v2519 = vpop.permute.xlu0 %2518
      %2522 = vset.pattern.permute.xlu0 0
      %2523 = vperm.xlu0 %2522, %v1953
      %v2524 = vpop.permute.xlu0 %2523
      %2527 = vset.pattern.permute.xlu0 0
      %2528 = vperm.xlu0 %2527, %v1954
      %v2529 = vpop.permute.xlu0 %2528
      %2532 = vset.pattern.permute.xlu0 0
      %2533 = vperm.xlu0 %2532, %v1955
      %v2534 = vpop.permute.xlu0 %2533
      %2537 = vset.pattern.permute.xlu0 0
      %2538 = vperm.xlu0 %2537, %v1956
      %v2539 = vpop.permute.xlu0 %2538
      %2542 = vset.pattern.permute.xlu0 0
      %2543 = vperm.xlu0 %2542, %v1957
      %v2544 = vpop.permute.xlu0 %2543
      %2547 = vset.pattern.permute.xlu0 0
      %2548 = vperm.xlu0 %2547, %v1958
      %v2549 = vpop.permute.xlu0 %2548
      %2552 = vset.pattern.permute.xlu0 0
      %2553 = vperm.xlu0 %2552, %v1959
      %v2554 = vpop.permute.xlu0 %2553
      %2557 = vset.pattern.permute.xlu0 0
      %2558 = vperm.xlu0 %2557, %v1960
      %v2559 = vpop.permute.xlu0 %2558
      %2562 = vset.pattern.permute.xlu0 0
      %2563 = vperm.xlu0 %2562, %v1961
      %v2564 = vpop.permute.xlu0 %2563
      %2567 = vset.pattern.permute.xlu0 0
      %2568 = vperm.xlu0 %2567, %v1962
      %v2569 = vpop.permute.xlu0 %2568
      %2572 = vset.pattern.permute.xlu0 0
      %2573 = vperm.xlu0 %2572, %v1963
      %v2574 = vpop.permute.xlu0 %2573
      %2577 = vset.pattern.permute.xlu0 0
      %2578 = vperm.xlu0 %2577, %v1964
      %v2579 = vpop.permute.xlu0 %2578
      %2582 = vset.pattern.permute.xlu0 0
      %2583 = vperm.xlu0 %2582, %v1965
      %v2584 = vpop.permute.xlu0 %2583
      %2587 = vset.pattern.permute.xlu0 0
      %2588 = vperm.xlu0 %2587, %v1966
      %v2589 = vpop.permute.xlu0 %2588
      %2592 = vset.pattern.permute.xlu0 0
      %2593 = vperm.xlu0 %2592, %v1967
      %v2594 = vpop.permute.xlu0 %2593
      %2597 = vset.pattern.permute.xlu0 0
      %2598 = vperm.xlu0 %2597, %v1968
      %v2599 = vpop.permute.xlu0 %2598
      %2602 = vset.pattern.permute.xlu0 0
      %2603 = vperm.xlu0 %2602, %v1969
      %v2604 = vpop.permute.xlu0 %2603
      %2607 = vset.pattern.permute.xlu0 0
      %2608 = vperm.xlu0 %2607, %v1970
      %v2609 = vpop.permute.xlu0 %2608
      %2612 = vset.pattern.permute.xlu0 0
      %2613 = vperm.xlu0 %2612, %v1971
      %v2614 = vpop.permute.xlu0 %2613
      %2617 = vset.pattern.permute.xlu0 0
      %2618 = vperm.xlu0 %2617, %v1972
      %v2619 = vpop.permute.xlu0 %2618
      %2622 = vset.pattern.permute.xlu0 0
      %2623 = vperm.xlu0 %2622, %v1973
      %v2624 = vpop.permute.xlu0 %2623
      %2627 = vset.pattern.permute.xlu0 0
      %2628 = vperm.xlu0 %2627, %v1974
      %v2629 = vpop.permute.xlu0 %2628
      %2632 = vset.pattern.permute.xlu0 0
      %2633 = vperm.xlu0 %2632, %v1975
      %v2634 = vpop.permute.xlu0 %2633
      %2637 = vset.pattern.permute.xlu0 0
      %2638 = vperm.xlu0 %2637, %v1976
      %v2639 = vpop.permute.xlu0 %2638
      %2642 = vset.pattern.permute.xlu0 0
      %2643 = vperm.xlu0 %2642, %v1977
      %v2644 = vpop.permute.xlu0 %2643
      %2647 = vset.pattern.permute.xlu0 0
      %2648 = vperm.xlu0 %2647, %v1978
      %v2649 = vpop.permute.xlu0 %2648
      %2652 = vset.pattern.permute.xlu0 0
      %2653 = vperm.xlu0 %2652, %v1979
      %v2654 = vpop.permute.xlu0 %2653
      %2657 = vset.pattern.permute.xlu0 0
      %2658 = vperm.xlu0 %2657, %v1980
      %v2659 = vpop.permute.xlu0 %2658
      %2662 = vset.pattern.permute.xlu0 0
      %2663 = vperm.xlu0 %2662, %v1981
      %v2664 = vpop.permute.xlu0 %2663
      %2667 = vset.pattern.permute.xlu0 0
      %2668 = vperm.xlu0 %2667, %v1982
      %v2669 = vpop.permute.xlu0 %2668
      %2672 = vset.pattern.permute.xlu0 0
      %2673 = vperm.xlu0 %2672, %v1983
      %v2674 = vpop.permute.xlu0 %2673
      %2677 = vset.pattern.permute.xlu0 0
      %2678 = vperm.xlu0 %2677, %v1984
      %v2679 = vpop.permute.xlu0 %2678
      %2682 = vset.pattern.permute.xlu0 0
      %2683 = vperm.xlu0 %2682, %v1985
      %v2684 = vpop.permute.xlu0 %2683
      %2687 = vset.pattern.permute.xlu0 0
      %2688 = vperm.xlu0 %2687, %v1986
      %v2689 = vpop.permute.xlu0 %2688
      %2692 = vset.pattern.permute.xlu0 0
      %2693 = vperm.xlu0 %2692, %v1987
      %v2694 = vpop.permute.xlu0 %2693
      %2697 = vset.pattern.permute.xlu0 0
      %2698 = vperm.xlu0 %2697, %v1988
      %v2699 = vpop.permute.xlu0 %2698
      %2702 = vset.pattern.permute.xlu0 0
      %2703 = vperm.xlu0 %2702, %v1989
      %v2704 = vpop.permute.xlu0 %2703
      %2707 = vset.pattern.permute.xlu0 0
      %2708 = vperm.xlu0 %2707, %v1990
      %v2709 = vpop.permute.xlu0 %2708
      %v2711 = vmul.f32 %v1703, %v1994
      %v2712 = vmul.f32 %v1704, %v1999
      %v2713 = vmul.f32 %v1705, %v2004
      %v2714 = vmul.f32 %v1706, %v2009
      %v2715 = vmul.f32 %v1707, %v2014
      %v2716 = vmul.f32 %v1708, %v2019
      %v2717 = vmul.f32 %v1709, %v2024
      %v2718 = vmul.f32 %v1710, %v2029
      %v2719 = vmul.f32 %v1711, %v2034
      %v2720 = vmul.f32 %v1712, %v2039
      %v2721 = vmul.f32 %v1713, %v2044
      %v2722 = vmul.f32 %v1714, %v2049
      %v2723 = vmul.f32 %v1715, %v2054
      %v2724 = vmul.f32 %v1716, %v2059
      %v2725 = vmul.f32 %v1717, %v2064
      %v2726 = vmul.f32 %v1718, %v2069
      %v2727 = vmul.f32 %v1719, %v2074
      %v2728 = vmul.f32 %v1720, %v2079
      %v2729 = vmul.f32 %v1721, %v2084
      %v2730 = vmul.f32 %v1722, %v2089
      %v2731 = vmul.f32 %v1723, %v2094
      %v2732 = vmul.f32 %v1724, %v2099
      %v2733 = vmul.f32 %v1725, %v2104
      %v2734 = vmul.f32 %v1726, %v2109
      %v2735 = vmul.f32 %v1727, %v2114
      %v2736 = vmul.f32 %v1728, %v2119
      %v2737 = vmul.f32 %v1729, %v2124
      %v2738 = vmul.f32 %v1730, %v2129
      %v2739 = vmul.f32 %v1731, %v2134
      %v2740 = vmul.f32 %v1732, %v2139
      %v2741 = vmul.f32 %v1733, %v2144
      %v2742 = vmul.f32 %v1734, %v2149
      %v2743 = vmul.f32 %v1735, %v2154
      %v2744 = vmul.f32 %v1736, %v2159
      %v2745 = vmul.f32 %v1737, %v2164
      %v2746 = vmul.f32 %v1738, %v2169
      %v2747 = vmul.f32 %v1739, %v2174
      %v2748 = vmul.f32 %v1740, %v2179
      %v2749 = vmul.f32 %v1741, %v2184
      %v2750 = vmul.f32 %v1742, %v2189
      %v2751 = vmul.f32 %v1743, %v2194
      %v2752 = vmul.f32 %v1744, %v2199
      %v2753 = vmul.f32 %v1745, %v2204
      %v2754 = vmul.f32 %v1746, %v2209
      %v2755 = vmul.f32 %v1747, %v2214
      %v2756 = vmul.f32 %v1748, %v2219
      %v2757 = vmul.f32 %v1749, %v2224
      %v2758 = vmul.f32 %v1750, %v2229
      %v2759 = vmul.f32 %v1751, %v2234
      %v2760 = vmul.f32 %v1752, %v2239
      %v2761 = vmul.f32 %v1753, %v2244
      %v2762 = vmul.f32 %v1754, %v2249
      %v2763 = vmul.f32 %v1755, %v2254
      %v2764 = vmul.f32 %v1756, %v2259
      %v2765 = vmul.f32 %v1757, %v2264
      %v2766 = vmul.f32 %v1758, %v2269
      %v2767 = vmul.f32 %v1759, %v2274
      %v2768 = vmul.f32 %v1760, %v2279
      %v2769 = vmul.f32 %v1761, %v2284
      %v2770 = vmul.f32 %v1762, %v2289
      %v2771 = vmul.f32 %v1763, %v2294
      %v2772 = vmul.f32 %v1764, %v2299
      %v2773 = vmul.f32 %v1765, %v2304
      %v2774 = vmul.f32 %v1766, %v2309
      %v2775 = vmul.f32 %v1767, %v2314
      %v2776 = vmul.f32 %v1768, %v2319
      %v2777 = vmul.f32 %v1769, %v2324
      %v2778 = vmul.f32 %v1770, %v2329
      %v2779 = vmul.f32 %v1771, %v2334
      %v2780 = vmul.f32 %v1772, %v2339
      %v2781 = vmul.f32 %v1773, %v2344
      %v2782 = vmul.f32 %v1774, %v2349
      %v2783 = vmul.f32 %v1775, %v2354
      %v2784 = vmul.f32 %v1776, %v2359
      %v2785 = vmul.f32 %v1777, %v2364
      %v2786 = vmul.f32 %v1778, %v2369
      %v2787 = vmul.f32 %v1779, %v2374
      %v2788 = vmul.f32 %v1780, %v2379
      %v2789 = vmul.f32 %v1781, %v2384
      %v2790 = vmul.f32 %v1782, %v2389
      %v2791 = vmul.f32 %v1783, %v2394
      %v2792 = vmul.f32 %v1784, %v2399
      %v2793 = vmul.f32 %v1785, %v2404
      %v2794 = vmul.f32 %v1786, %v2409
      %v2795 = vmul.f32 %v1787, %v2414
      %v2796 = vmul.f32 %v1788, %v2419
      %v2797 = vmul.f32 %v1789, %v2424
      %v2798 = vmul.f32 %v1790, %v2429
      %v2799 = vmul.f32 %v1791, %v2434
      %v2800 = vmul.f32 %v1792, %v2439
      %v2801 = vmul.f32 %v1793, %v2444
      %v2802 = vmul.f32 %v1794, %v2449
      %v2803 = vmul.f32 %v1795, %v2454
      %v2804 = vmul.f32 %v1796, %v2459
      %v2805 = vmul.f32 %v1797, %v2464
      %v2806 = vmul.f32 %v1798, %v2469
      %v2807 = vmul.f32 %v1799, %v2474
      %v2808 = vmul.f32 %v1800, %v2479
      %v2809 = vmul.f32 %v1801, %v2484
      %v2810 = vmul.f32 %v1802, %v2489
      %v2811 = vmul.f32 %v1803, %v2494
      %v2812 = vmul.f32 %v1804, %v2499
      %v2813 = vmul.f32 %v1805, %v2504
      %v2814 = vmul.f32 %v1806, %v2509
      %v2815 = vmul.f32 %v1807, %v2514
      %v2816 = vmul.f32 %v1808, %v2519
      %v2817 = vmul.f32 %v1809, %v2524
      %v2818 = vmul.f32 %v1810, %v2529
      %v2819 = vmul.f32 %v1811, %v2534
      %v2820 = vmul.f32 %v1812, %v2539
      %v2821 = vmul.f32 %v1813, %v2544
      %v2822 = vmul.f32 %v1814, %v2549
      %v2823 = vmul.f32 %v1815, %v2554
      %v2824 = vmul.f32 %v1816, %v2559
      %v2825 = vmul.f32 %v1817, %v2564
      %v2826 = vmul.f32 %v1818, %v2569
      %v2827 = vmul.f32 %v1819, %v2574
      %v2828 = vmul.f32 %v1820, %v2579
      %v2829 = vmul.f32 %v1821, %v2584
      %v2830 = vmul.f32 %v1822, %v2589
      %v2831 = vmul.f32 %v1823, %v2594
      %v2832 = vmul.f32 %v1824, %v2599
      %v2833 = vmul.f32 %v1825, %v2604
      %v2834 = vmul.f32 %v1826, %v2609
      %v2835 = vmul.f32 %v1827, %v2614
      %v2836 = vmul.f32 %v1828, %v2619
      %v2837 = vmul.f32 %v1829, %v2624
      %v2838 = vmul.f32 %v1830, %v2629
      %v2839 = vmul.f32 %v1831, %v2634
      %v2840 = vmul.f32 %v1832, %v2639
      %v2841 = vmul.f32 %v1833, %v2644
      %v2842 = vmul.f32 %v1834, %v2649
      %v2843 = vmul.f32 %v1835, %v2654
      %v2844 = vmul.f32 %v1836, %v2659
      %v2845 = vmul.f32 %v1837, %v2664
      %v2846 = vmul.f32 %v1838, %v2669
      %v2847 = vmul.f32 %v1839, %v2674
      %v2848 = vmul.f32 %v1840, %v2679
      %v2849 = vmul.f32 %v1841, %v2684
      %v2850 = vmul.f32 %v1842, %v2689
      %v2851 = vmul.f32 %v1843, %v2694
      %v2852 = vmul.f32 %v1844, %v2699
      %v2853 = vmul.f32 %v1845, %v2704
      %v2854 = vmul.f32 %v1846, %v2709
      %v2855 = vpack.c.bf16 %v2712, %v2711
      %v2856 = vpack.c.bf16 %v2714, %v2713
      %v2857 = vpack.c.bf16 %v2716, %v2715
      %v2858 = vpack.c.bf16 %v2718, %v2717
      %v2859 = vpack.c.bf16 %v2720, %v2719
      %v2860 = vpack.c.bf16 %v2722, %v2721
      %v2861 = vpack.c.bf16 %v2724, %v2723
      %v2862 = vpack.c.bf16 %v2726, %v2725
      %v2863 = vpack.c.bf16 %v2728, %v2727
      %v2864 = vpack.c.bf16 %v2730, %v2729
      %v2865 = vpack.c.bf16 %v2732, %v2731
      %v2866 = vpack.c.bf16 %v2734, %v2733
      %v2867 = vpack.c.bf16 %v2736, %v2735
      %v2868 = vpack.c.bf16 %v2738, %v2737
      %v2869 = vpack.c.bf16 %v2740, %v2739
      %v2870 = vpack.c.bf16 %v2742, %v2741
      %v2871 = vpack.c.bf16 %v2744, %v2743
      %v2872 = vpack.c.bf16 %v2746, %v2745
      %v2873 = vpack.c.bf16 %v2748, %v2747
      %v2874 = vpack.c.bf16 %v2750, %v2749
      %v2875 = vpack.c.bf16 %v2752, %v2751
      %v2876 = vpack.c.bf16 %v2754, %v2753
      %v2877 = vpack.c.bf16 %v2756, %v2755
      %v2878 = vpack.c.bf16 %v2758, %v2757
      %v2879 = vpack.c.bf16 %v2760, %v2759
      %v2880 = vpack.c.bf16 %v2762, %v2761
      %v2881 = vpack.c.bf16 %v2764, %v2763
      %v2882 = vpack.c.bf16 %v2766, %v2765
      %v2883 = vpack.c.bf16 %v2768, %v2767
      %v2884 = vpack.c.bf16 %v2770, %v2769
      %v2885 = vpack.c.bf16 %v2772, %v2771
      %v2886 = vpack.c.bf16 %v2774, %v2773
      %v2887 = vpack.c.bf16 %v2776, %v2775
      %v2888 = vpack.c.bf16 %v2778, %v2777
      %v2889 = vpack.c.bf16 %v2780, %v2779
      %v2890 = vpack.c.bf16 %v2782, %v2781
      %v2891 = vpack.c.bf16 %v2784, %v2783
      %v2892 = vpack.c.bf16 %v2786, %v2785
      %v2893 = vpack.c.bf16 %v2788, %v2787
      %v2894 = vpack.c.bf16 %v2790, %v2789
      %v2895 = vpack.c.bf16 %v2792, %v2791
      %v2896 = vpack.c.bf16 %v2794, %v2793
      %v2897 = vpack.c.bf16 %v2796, %v2795
      %v2898 = vpack.c.bf16 %v2798, %v2797
      %v2899 = vpack.c.bf16 %v2800, %v2799
      %v2900 = vpack.c.bf16 %v2802, %v2801
      %v2901 = vpack.c.bf16 %v2804, %v2803
      %v2902 = vpack.c.bf16 %v2806, %v2805
      %v2903 = vpack.c.bf16 %v2808, %v2807
      %v2904 = vpack.c.bf16 %v2810, %v2809
      %v2905 = vpack.c.bf16 %v2812, %v2811
      %v2906 = vpack.c.bf16 %v2814, %v2813
      %v2907 = vpack.c.bf16 %v2816, %v2815
      %v2908 = vpack.c.bf16 %v2818, %v2817
      %v2909 = vpack.c.bf16 %v2820, %v2819
      %v2910 = vpack.c.bf16 %v2822, %v2821
      %v2911 = vpack.c.bf16 %v2824, %v2823
      %v2912 = vpack.c.bf16 %v2826, %v2825
      %v2913 = vpack.c.bf16 %v2828, %v2827
      %v2914 = vpack.c.bf16 %v2830, %v2829
      %v2915 = vpack.c.bf16 %v2832, %v2831
      %v2916 = vpack.c.bf16 %v2834, %v2833
      %v2917 = vpack.c.bf16 %v2836, %v2835
      %v2918 = vpack.c.bf16 %v2838, %v2837
      %v2919 = vpack.c.bf16 %v2840, %v2839
      %v2920 = vpack.c.bf16 %v2842, %v2841
      %v2921 = vpack.c.bf16 %v2844, %v2843
      %v2922 = vpack.c.bf16 %v2846, %v2845
      %v2923 = vpack.c.bf16 %v2848, %v2847
      %v2924 = vpack.c.bf16 %v2850, %v2849
      %v2925 = vpack.c.bf16 %v2852, %v2851
      %v2926 = vpack.c.bf16 %v2854, %v2853
      %v2999 = vunpack.c.l.b16 %v2855
      %v3000 = vunpack.c.h.b16 %v2855
      %v3001 = vunpack.c.l.b16 %v2856
      %v3002 = vunpack.c.h.b16 %v2856
      %v3003 = vunpack.c.l.b16 %v2857
      %v3004 = vunpack.c.h.b16 %v2857
      %v3005 = vunpack.c.l.b16 %v2858
      %v3006 = vunpack.c.h.b16 %v2858
      %v3007 = vunpack.c.l.b16 %v2859
      %v3008 = vunpack.c.h.b16 %v2859
      %v3009 = vunpack.c.l.b16 %v2860
      %v3010 = vunpack.c.h.b16 %v2860
      %v3011 = vunpack.c.l.b16 %v2861
      %v3012 = vunpack.c.h.b16 %v2861
      %v3013 = vunpack.c.l.b16 %v2862
      %v3014 = vunpack.c.h.b16 %v2862
      %v3015 = vunpack.c.l.b16 %v2863
      %v3016 = vunpack.c.h.b16 %v2863
      %v3017 = vunpack.c.l.b16 %v2864
      %v3018 = vunpack.c.h.b16 %v2864
      %v3019 = vunpack.c.l.b16 %v2865
      %v3020 = vunpack.c.h.b16 %v2865
      %v3021 = vunpack.c.l.b16 %v2866
      %v3022 = vunpack.c.h.b16 %v2866
      %v3023 = vunpack.c.l.b16 %v2867
      %v3024 = vunpack.c.h.b16 %v2867
      %v3025 = vunpack.c.l.b16 %v2868
      %v3026 = vunpack.c.h.b16 %v2868
      %v3027 = vunpack.c.l.b16 %v2869
      %v3028 = vunpack.c.h.b16 %v2869
      %v3029 = vunpack.c.l.b16 %v2870
      %v3030 = vunpack.c.h.b16 %v2870
      %v3031 = vunpack.c.l.b16 %v2871
      %v3032 = vunpack.c.h.b16 %v2871
      %v3033 = vunpack.c.l.b16 %v2872
      %v3034 = vunpack.c.h.b16 %v2872
      %v3035 = vunpack.c.l.b16 %v2873
      %v3036 = vunpack.c.h.b16 %v2873
      %v3037 = vunpack.c.l.b16 %v2874
      %v3038 = vunpack.c.h.b16 %v2874
      %v3039 = vunpack.c.l.b16 %v2875
      %v3040 = vunpack.c.h.b16 %v2875
      %v3041 = vunpack.c.l.b16 %v2876
      %v3042 = vunpack.c.h.b16 %v2876
      %v3043 = vunpack.c.l.b16 %v2877
      %v3044 = vunpack.c.h.b16 %v2877
      %v3045 = vunpack.c.l.b16 %v2878
      %v3046 = vunpack.c.h.b16 %v2878
      %v3047 = vunpack.c.l.b16 %v2879
      %v3048 = vunpack.c.h.b16 %v2879
      %v3049 = vunpack.c.l.b16 %v2880
      %v3050 = vunpack.c.h.b16 %v2880
      %v3051 = vunpack.c.l.b16 %v2881
      %v3052 = vunpack.c.h.b16 %v2881
      %v3053 = vunpack.c.l.b16 %v2882
      %v3054 = vunpack.c.h.b16 %v2882
      %v3055 = vunpack.c.l.b16 %v2883
      %v3056 = vunpack.c.h.b16 %v2883
      %v3057 = vunpack.c.l.b16 %v2884
      %v3058 = vunpack.c.h.b16 %v2884
      %v3059 = vunpack.c.l.b16 %v2885
      %v3060 = vunpack.c.h.b16 %v2885
      %v3061 = vunpack.c.l.b16 %v2886
      %v3062 = vunpack.c.h.b16 %v2886
      %v3063 = vunpack.c.l.b16 %v2887
      %v3064 = vunpack.c.h.b16 %v2887
      %v3065 = vunpack.c.l.b16 %v2888
      %v3066 = vunpack.c.h.b16 %v2888
      %v3067 = vunpack.c.l.b16 %v2889
      %v3068 = vunpack.c.h.b16 %v2889
      %v3069 = vunpack.c.l.b16 %v2890
      %v3070 = vunpack.c.h.b16 %v2890
      %v3071 = vunpack.c.l.b16 %v2891
      %v3072 = vunpack.c.h.b16 %v2891
      %v3073 = vunpack.c.l.b16 %v2892
      %v3074 = vunpack.c.h.b16 %v2892
      %v3075 = vunpack.c.l.b16 %v2893
      %v3076 = vunpack.c.h.b16 %v2893
      %v3077 = vunpack.c.l.b16 %v2894
      %v3078 = vunpack.c.h.b16 %v2894
      %v3079 = vunpack.c.l.b16 %v2895
      %v3080 = vunpack.c.h.b16 %v2895
      %v3081 = vunpack.c.l.b16 %v2896
      %v3082 = vunpack.c.h.b16 %v2896
      %v3083 = vunpack.c.l.b16 %v2897
      %v3084 = vunpack.c.h.b16 %v2897
      %v3085 = vunpack.c.l.b16 %v2898
      %v3086 = vunpack.c.h.b16 %v2898
      %v3087 = vunpack.c.l.b16 %v2899
      %v3088 = vunpack.c.h.b16 %v2899
      %v3089 = vunpack.c.l.b16 %v2900
      %v3090 = vunpack.c.h.b16 %v2900
      %v3091 = vunpack.c.l.b16 %v2901
      %v3092 = vunpack.c.h.b16 %v2901
      %v3093 = vunpack.c.l.b16 %v2902
      %v3094 = vunpack.c.h.b16 %v2902
      %v3095 = vunpack.c.l.b16 %v2903
      %v3096 = vunpack.c.h.b16 %v2903
      %v3097 = vunpack.c.l.b16 %v2904
      %v3098 = vunpack.c.h.b16 %v2904
      %v3099 = vunpack.c.l.b16 %v2905
      %v3100 = vunpack.c.h.b16 %v2905
      %v3101 = vunpack.c.l.b16 %v2906
      %v3102 = vunpack.c.h.b16 %v2906
      %v3103 = vunpack.c.l.b16 %v2907
      %v3104 = vunpack.c.h.b16 %v2907
      %v3105 = vunpack.c.l.b16 %v2908
      %v3106 = vunpack.c.h.b16 %v2908
      %v3107 = vunpack.c.l.b16 %v2909
      %v3108 = vunpack.c.h.b16 %v2909
      %v3109 = vunpack.c.l.b16 %v2910
      %v3110 = vunpack.c.h.b16 %v2910
      %v3111 = vunpack.c.l.b16 %v2911
      %v3112 = vunpack.c.h.b16 %v2911
      %v3113 = vunpack.c.l.b16 %v2912
      %v3114 = vunpack.c.h.b16 %v2912
      %v3115 = vunpack.c.l.b16 %v2913
      %v3116 = vunpack.c.h.b16 %v2913
      %v3117 = vunpack.c.l.b16 %v2914
      %v3118 = vunpack.c.h.b16 %v2914
      %v3119 = vunpack.c.l.b16 %v2915
      %v3120 = vunpack.c.h.b16 %v2915
      %v3121 = vunpack.c.l.b16 %v2916
      %v3122 = vunpack.c.h.b16 %v2916
      %v3123 = vunpack.c.l.b16 %v2917
      %v3124 = vunpack.c.h.b16 %v2917
      %v3125 = vunpack.c.l.b16 %v2918
      %v3126 = vunpack.c.h.b16 %v2918
      %v3127 = vunpack.c.l.b16 %v2919
      %v3128 = vunpack.c.h.b16 %v2919
      %v3129 = vunpack.c.l.b16 %v2920
      %v3130 = vunpack.c.h.b16 %v2920
      %v3131 = vunpack.c.l.b16 %v2921
      %v3132 = vunpack.c.h.b16 %v2921
      %v3133 = vunpack.c.l.b16 %v2922
      %v3134 = vunpack.c.h.b16 %v2922
      %v3135 = vunpack.c.l.b16 %v2923
      %v3136 = vunpack.c.h.b16 %v2923
      %v3137 = vunpack.c.l.b16 %v2924
      %v3138 = vunpack.c.h.b16 %v2924
      %v3139 = vunpack.c.l.b16 %v2925
      %v3140 = vunpack.c.h.b16 %v2925
      %v3141 = vunpack.c.l.b16 %v2926
      %v3142 = vunpack.c.h.b16 %v2926
      %v3143 = vpack.c.b16 %v2999, %v2999
      %v3144 = vpack.c.b16 %v3000, %v3000
      %v3145 = vpack.c.b16 %v3001, %v3001
      %v3146 = vpack.c.b16 %v3002, %v3002
      %v3147 = vpack.c.b16 %v3003, %v3003
      %v3148 = vpack.c.b16 %v3004, %v3004
      %v3149 = vpack.c.b16 %v3005, %v3005
      %v3150 = vpack.c.b16 %v3006, %v3006
      %v3151 = vpack.c.b16 %v3007, %v3007
      %v3152 = vpack.c.b16 %v3008, %v3008
      %v3153 = vpack.c.b16 %v3009, %v3009
      %v3154 = vpack.c.b16 %v3010, %v3010
      %v3155 = vpack.c.b16 %v3011, %v3011
      %v3156 = vpack.c.b16 %v3012, %v3012
      %v3157 = vpack.c.b16 %v3013, %v3013
      %v3158 = vpack.c.b16 %v3014, %v3014
      %v3159 = vpack.c.b16 %v3015, %v3015
      %v3160 = vpack.c.b16 %v3016, %v3016
      %v3161 = vpack.c.b16 %v3017, %v3017
      %v3162 = vpack.c.b16 %v3018, %v3018
      %v3163 = vpack.c.b16 %v3019, %v3019
      %v3164 = vpack.c.b16 %v3020, %v3020
      %v3165 = vpack.c.b16 %v3021, %v3021
      %v3166 = vpack.c.b16 %v3022, %v3022
      %v3167 = vpack.c.b16 %v3023, %v3023
      %v3168 = vpack.c.b16 %v3024, %v3024
      %v3169 = vpack.c.b16 %v3025, %v3025
      %v3170 = vpack.c.b16 %v3026, %v3026
      %v3171 = vpack.c.b16 %v3027, %v3027
      %v3172 = vpack.c.b16 %v3028, %v3028
      %v3173 = vpack.c.b16 %v3029, %v3029
      %v3174 = vpack.c.b16 %v3030, %v3030
      %v3175 = vpack.c.b16 %v3031, %v3031
      %v3176 = vpack.c.b16 %v3032, %v3032
      %v3177 = vpack.c.b16 %v3033, %v3033
      %v3178 = vpack.c.b16 %v3034, %v3034
      %v3179 = vpack.c.b16 %v3035, %v3035
      %v3180 = vpack.c.b16 %v3036, %v3036
      %v3181 = vpack.c.b16 %v3037, %v3037
      %v3182 = vpack.c.b16 %v3038, %v3038
      %v3183 = vpack.c.b16 %v3039, %v3039
      %v3184 = vpack.c.b16 %v3040, %v3040
      %v3185 = vpack.c.b16 %v3041, %v3041
      %v3186 = vpack.c.b16 %v3042, %v3042
      %v3187 = vpack.c.b16 %v3043, %v3043
      %v3188 = vpack.c.b16 %v3044, %v3044
      %v3189 = vpack.c.b16 %v3045, %v3045
      %v3190 = vpack.c.b16 %v3046, %v3046
      %v3191 = vpack.c.b16 %v3047, %v3047
      %v3192 = vpack.c.b16 %v3048, %v3048
      %v3193 = vpack.c.b16 %v3049, %v3049
      %v3194 = vpack.c.b16 %v3050, %v3050
      %v3195 = vpack.c.b16 %v3051, %v3051
      %v3196 = vpack.c.b16 %v3052, %v3052
      %v3197 = vpack.c.b16 %v3053, %v3053
      %v3198 = vpack.c.b16 %v3054, %v3054
      %v3199 = vpack.c.b16 %v3055, %v3055
      %v3200 = vpack.c.b16 %v3056, %v3056
      %v3201 = vpack.c.b16 %v3057, %v3057
      %v3202 = vpack.c.b16 %v3058, %v3058
      %v3203 = vpack.c.b16 %v3059, %v3059
      %v3204 = vpack.c.b16 %v3060, %v3060
      %v3205 = vpack.c.b16 %v3061, %v3061
      %v3206 = vpack.c.b16 %v3062, %v3062
      %v3207 = vpack.c.b16 %v3063, %v3063
      %v3208 = vpack.c.b16 %v3064, %v3064
      %v3209 = vpack.c.b16 %v3065, %v3065
      %v3210 = vpack.c.b16 %v3066, %v3066
      %v3211 = vpack.c.b16 %v3067, %v3067
      %v3212 = vpack.c.b16 %v3068, %v3068
      %v3213 = vpack.c.b16 %v3069, %v3069
      %v3214 = vpack.c.b16 %v3070, %v3070
      %v3215 = vpack.c.b16 %v3071, %v3071
      %v3216 = vpack.c.b16 %v3072, %v3072
      %v3217 = vpack.c.b16 %v3073, %v3073
      %v3218 = vpack.c.b16 %v3074, %v3074
      %v3219 = vpack.c.b16 %v3075, %v3075
      %v3220 = vpack.c.b16 %v3076, %v3076
      %v3221 = vpack.c.b16 %v3077, %v3077
      %v3222 = vpack.c.b16 %v3078, %v3078
      %v3223 = vpack.c.b16 %v3079, %v3079
      %v3224 = vpack.c.b16 %v3080, %v3080
      %v3225 = vpack.c.b16 %v3081, %v3081
      %v3226 = vpack.c.b16 %v3082, %v3082
      %v3227 = vpack.c.b16 %v3083, %v3083
      %v3228 = vpack.c.b16 %v3084, %v3084
      %v3229 = vpack.c.b16 %v3085, %v3085
      %v3230 = vpack.c.b16 %v3086, %v3086
      %v3231 = vpack.c.b16 %v3087, %v3087
      %v3232 = vpack.c.b16 %v3088, %v3088
      %v3233 = vpack.c.b16 %v3089, %v3089
      %v3234 = vpack.c.b16 %v3090, %v3090
      %v3235 = vpack.c.b16 %v3091, %v3091
      %v3236 = vpack.c.b16 %v3092, %v3092
      %v3237 = vpack.c.b16 %v3093, %v3093
      %v3238 = vpack.c.b16 %v3094, %v3094
      %v3239 = vpack.c.b16 %v3095, %v3095
      %v3240 = vpack.c.b16 %v3096, %v3096
      %v3241 = vpack.c.b16 %v3097, %v3097
      %v3242 = vpack.c.b16 %v3098, %v3098
      %v3243 = vpack.c.b16 %v3099, %v3099
      %v3244 = vpack.c.b16 %v3100, %v3100
      %v3245 = vpack.c.b16 %v3101, %v3101
      %v3246 = vpack.c.b16 %v3102, %v3102
      %v3247 = vpack.c.b16 %v3103, %v3103
      %v3248 = vpack.c.b16 %v3104, %v3104
      %v3249 = vpack.c.b16 %v3105, %v3105
      %v3250 = vpack.c.b16 %v3106, %v3106
      %v3251 = vpack.c.b16 %v3107, %v3107
      %v3252 = vpack.c.b16 %v3108, %v3108
      %v3253 = vpack.c.b16 %v3109, %v3109
      %v3254 = vpack.c.b16 %v3110, %v3110
      %v3255 = vpack.c.b16 %v3111, %v3111
      %v3256 = vpack.c.b16 %v3112, %v3112
      %v3257 = vpack.c.b16 %v3113, %v3113
      %v3258 = vpack.c.b16 %v3114, %v3114
      %v3259 = vpack.c.b16 %v3115, %v3115
      %v3260 = vpack.c.b16 %v3116, %v3116
      %v3261 = vpack.c.b16 %v3117, %v3117
      %v3262 = vpack.c.b16 %v3118, %v3118
      %v3263 = vpack.c.b16 %v3119, %v3119
      %v3264 = vpack.c.b16 %v3120, %v3120
      %v3265 = vpack.c.b16 %v3121, %v3121
      %v3266 = vpack.c.b16 %v3122, %v3122
      %v3267 = vpack.c.b16 %v3123, %v3123
      %v3268 = vpack.c.b16 %v3124, %v3124
      %v3269 = vpack.c.b16 %v3125, %v3125
      %v3270 = vpack.c.b16 %v3126, %v3126
      %v3271 = vpack.c.b16 %v3127, %v3127
      %v3272 = vpack.c.b16 %v3128, %v3128
      %v3273 = vpack.c.b16 %v3129, %v3129
      %v3274 = vpack.c.b16 %v3130, %v3130
      %v3275 = vpack.c.b16 %v3131, %v3131
      %v3276 = vpack.c.b16 %v3132, %v3132
      %v3277 = vpack.c.b16 %v3133, %v3133
      %v3278 = vpack.c.b16 %v3134, %v3134
      %v3279 = vpack.c.b16 %v3135, %v3135
      %v3280 = vpack.c.b16 %v3136, %v3136
      %v3281 = vpack.c.b16 %v3137, %v3137
      %v3282 = vpack.c.b16 %v3138, %v3138
      %v3283 = vpack.c.b16 %v3139, %v3139
      %v3284 = vpack.c.b16 %v3140, %v3140
      %v3285 = vpack.c.b16 %v3141, %v3141
      %v3286 = vpack.c.b16 %v3142, %v3142
      %3431 = vst [vmem:[#allocation2] sm:$0xf] %v3143
      %3432 = vst [vmem:[#allocation2 + $0x4] sm:$0xf] %v3144
      %3433 = vst [vmem:[#allocation2 + $0x8] sm:$0xf] %v3145
      %3434 = vst [vmem:[#allocation2 + $0xc] sm:$0xf] %v3146
      %3435 = vst [vmem:[#allocation2 + $0x10] sm:$0xf] %v3147
      %3436 = vst [vmem:[#allocation2 + $0x14] sm:$0xf] %v3148
      %3437 = vst [vmem:[#allocation2 + $0x18] sm:$0xf] %v3149
      %3438 = vst [vmem:[#allocation2 + $0x1c] sm:$0xf] %v3150
      %3439 = vst [vmem:[#allocation2 + $0x20] sm:$0xf] %v3151
      %3440 = vst [vmem:[#allocation2 + $0x24] sm:$0xf] %v3152
      %3441 = vst [vmem:[#allocation2 + $0x28] sm:$0xf] %v3153
      %3442 = vst [vmem:[#allocation2 + $0x2c] sm:$0xf] %v3154
      %3443 = vst [vmem:[#allocation2 + $0x30] sm:$0xf] %v3155
      %3444 = vst [vmem:[#allocation2 + $0x34] sm:$0xf] %v3156
      %3445 = vst [vmem:[#allocation2 + $0x38] sm:$0xf] %v3157
      %3446 = vst [vmem:[#allocation2 + $0x3c] sm:$0xf] %v3158
      %3447 = vst [vmem:[#allocation2 + $0x40] sm:$0xf] %v3159
      %3448 = vst [vmem:[#allocation2 + $0x44] sm:$0xf] %v3160
      %3449 = vst [vmem:[#allocation2 + $0x48] sm:$0xf] %v3161
      %3450 = vst [vmem:[#allocation2 + $0x4c] sm:$0xf] %v3162
      %3451 = vst [vmem:[#allocation2 + $0x50] sm:$0xf] %v3163
      %3452 = vst [vmem:[#allocation2 + $0x54] sm:$0xf] %v3164
      %3453 = vst [vmem:[#allocation2 + $0x58] sm:$0xf] %v3165
      %3454 = vst [vmem:[#allocation2 + $0x5c] sm:$0xf] %v3166
      %3455 = vst [vmem:[#allocation2 + $0x60] sm:$0xf] %v3167
      %3456 = vst [vmem:[#allocation2 + $0x64] sm:$0xf] %v3168
      %3457 = vst [vmem:[#allocation2 + $0x68] sm:$0xf] %v3169
      %3458 = vst [vmem:[#allocation2 + $0x6c] sm:$0xf] %v3170
      %3459 = vst [vmem:[#allocation2 + $0x70] sm:$0xf] %v3171
      %3460 = vst [vmem:[#allocation2 + $0x74] sm:$0xf] %v3172
      %3461 = vst [vmem:[#allocation2 + $0x78] sm:$0xf] %v3173
      %3462 = vst [vmem:[#allocation2 + $0x7c] sm:$0xf] %v3174
      %3463 = vst [vmem:[#allocation2 + $0x80] sm:$0xf] %v3175
      %3464 = vst [vmem:[#allocation2 + $0x84] sm:$0xf] %v3176
      %3465 = vst [vmem:[#allocation2 + $0x88] sm:$0xf] %v3177
      %3466 = vst [vmem:[#allocation2 + $0x8c] sm:$0xf] %v3178
      %3467 = vst [vmem:[#allocation2 + $0x90] sm:$0xf] %v3179
      %3468 = vst [vmem:[#allocation2 + $0x94] sm:$0xf] %v3180
      %3469 = vst [vmem:[#allocation2 + $0x98] sm:$0xf] %v3181
      %3470 = vst [vmem:[#allocation2 + $0x9c] sm:$0xf] %v3182
      %3471 = vst [vmem:[#allocation2 + $0xa0] sm:$0xf] %v3183
      %3472 = vst [vmem:[#allocation2 + $0xa4] sm:$0xf] %v3184
      %3473 = vst [vmem:[#allocation2 + $0xa8] sm:$0xf] %v3185
      %3474 = vst [vmem:[#allocation2 + $0xac] sm:$0xf] %v3186
      %3475 = vst [vmem:[#allocation2 + $0xb0] sm:$0xf] %v3187
      %3476 = vst [vmem:[#allocation2 + $0xb4] sm:$0xf] %v3188
      %3477 = vst [vmem:[#allocation2 + $0xb8] sm:$0xf] %v3189
      %3478 = vst [vmem:[#allocation2 + $0xbc] sm:$0xf] %v3190
      %3479 = vst [vmem:[#allocation2 + $0xc0] sm:$0xf] %v3191
      %3480 = vst [vmem:[#allocation2 + $0xc4] sm:$0xf] %v3192
      %3481 = vst [vmem:[#allocation2 + $0xc8] sm:$0xf] %v3193
      %3482 = vst [vmem:[#allocation2 + $0xcc] sm:$0xf] %v3194
      %3483 = vst [vmem:[#allocation2 + $0xd0] sm:$0xf] %v3195
      %3484 = vst [vmem:[#allocation2 + $0xd4] sm:$0xf] %v3196
      %3485 = vst [vmem:[#allocation2 + $0xd8] sm:$0xf] %v3197
      %3486 = vst [vmem:[#allocation2 + $0xdc] sm:$0xf] %v3198
      %3487 = vst [vmem:[#allocation2 + $0xe0] sm:$0xf] %v3199
      %3488 = vst [vmem:[#allocation2 + $0xe4] sm:$0xf] %v3200
      %3489 = vst [vmem:[#allocation2 + $0xe8] sm:$0xf] %v3201
      %3490 = vst [vmem:[#allocation2 + $0xec] sm:$0xf] %v3202
      %3491 = vst [vmem:[#allocation2 + $0xf0] sm:$0xf] %v3203
      %3492 = vst [vmem:[#allocation2 + $0xf4] sm:$0xf] %v3204
      %3493 = vst [vmem:[#allocation2 + $0xf8] sm:$0xf] %v3205
      %3494 = vst [vmem:[#allocation2 + $0xfc] sm:$0xf] %v3206
      %3495 = vst [vmem:[#allocation2 + $0x100] sm:$0xf] %v3207
      %3496 = vst [vmem:[#allocation2 + $0x104] sm:$0xf] %v3208
      %3497 = vst [vmem:[#allocation2 + $0x108] sm:$0xf] %v3209
      %3498 = vst [vmem:[#allocation2 + $0x10c] sm:$0xf] %v3210
      %3499 = vst [vmem:[#allocation2 + $0x110] sm:$0xf] %v3211
      %3500 = vst [vmem:[#allocation2 + $0x114] sm:$0xf] %v3212
      %3501 = vst [vmem:[#allocation2 + $0x118] sm:$0xf] %v3213
      %3502 = vst [vmem:[#allocation2 + $0x11c] sm:$0xf] %v3214
      %3503 = vst [vmem:[#allocation2 + $0x120] sm:$0xf] %v3215
      %3504 = vst [vmem:[#allocation2 + $0x124] sm:$0xf] %v3216
      %3505 = vst [vmem:[#allocation2 + $0x128] sm:$0xf] %v3217
      %3506 = vst [vmem:[#allocation2 + $0x12c] sm:$0xf] %v3218
      %3507 = vst [vmem:[#allocation2 + $0x130] sm:$0xf] %v3219
      %3508 = vst [vmem:[#allocation2 + $0x134] sm:$0xf] %v3220
      %3509 = vst [vmem:[#allocation2 + $0x138] sm:$0xf] %v3221
      %3510 = vst [vmem:[#allocation2 + $0x13c] sm:$0xf] %v3222
      %3511 = vst [vmem:[#allocation2 + $0x140] sm:$0xf] %v3223
      %3512 = vst [vmem:[#allocation2 + $0x144] sm:$0xf] %v3224
      %3513 = vst [vmem:[#allocation2 + $0x148] sm:$0xf] %v3225
      %3514 = vst [vmem:[#allocation2 + $0x14c] sm:$0xf] %v3226
      %3515 = vst [vmem:[#allocation2 + $0x150] sm:$0xf] %v3227
      %3516 = vst [vmem:[#allocation2 + $0x154] sm:$0xf] %v3228
      %3517 = vst [vmem:[#allocation2 + $0x158] sm:$0xf] %v3229
      %3518 = vst [vmem:[#allocation2 + $0x15c] sm:$0xf] %v3230
      %3519 = vst [vmem:[#allocation2 + $0x160] sm:$0xf] %v3231
      %3520 = vst [vmem:[#allocation2 + $0x164] sm:$0xf] %v3232
      %3521 = vst [vmem:[#allocation2 + $0x168] sm:$0xf] %v3233
      %3522 = vst [vmem:[#allocation2 + $0x16c] sm:$0xf] %v3234
      %3523 = vst [vmem:[#allocation2 + $0x170] sm:$0xf] %v3235
      %3524 = vst [vmem:[#allocation2 + $0x174] sm:$0xf] %v3236
      %3525 = vst [vmem:[#allocation2 + $0x178] sm:$0xf] %v3237
      %3526 = vst [vmem:[#allocation2 + $0x17c] sm:$0xf] %v3238
      %3527 = vst [vmem:[#allocation2 + $0x180] sm:$0xf] %v3239
      %3528 = vst [vmem:[#allocation2 + $0x184] sm:$0xf] %v3240
      %3529 = vst [vmem:[#allocation2 + $0x188] sm:$0xf] %v3241
      %3530 = vst [vmem:[#allocation2 + $0x18c] sm:$0xf] %v3242
      %3531 = vst [vmem:[#allocation2 + $0x190] sm:$0xf] %v3243
      %3532 = vst [vmem:[#allocation2 + $0x194] sm:$0xf] %v3244
      %3533 = vst [vmem:[#allocation2 + $0x198] sm:$0xf] %v3245
      %3534 = vst [vmem:[#allocation2 + $0x19c] sm:$0xf] %v3246
      %3535 = vst [vmem:[#allocation2 + $0x1a0] sm:$0xf] %v3247
      %3536 = vst [vmem:[#allocation2 + $0x1a4] sm:$0xf] %v3248
      %3537 = vst [vmem:[#allocation2 + $0x1a8] sm:$0xf] %v3249
      %3538 = vst [vmem:[#allocation2 + $0x1ac] sm:$0xf] %v3250
      %3539 = vst [vmem:[#allocation2 + $0x1b0] sm:$0xf] %v3251
      %3540 = vst [vmem:[#allocation2 + $0x1b4] sm:$0xf] %v3252
      %3541 = vst [vmem:[#allocation2 + $0x1b8] sm:$0xf] %v3253
      %3542 = vst [vmem:[#allocation2 + $0x1bc] sm:$0xf] %v3254
      %3543 = vst [vmem:[#allocation2 + $0x1c0] sm:$0xf] %v3255
      %3544 = vst [vmem:[#allocation2 + $0x1c4] sm:$0xf] %v3256
      %3545 = vst [vmem:[#allocation2 + $0x1c8] sm:$0xf] %v3257
      %3546 = vst [vmem:[#allocation2 + $0x1cc] sm:$0xf] %v3258
      %3547 = vst [vmem:[#allocation2 + $0x1d0] sm:$0xf] %v3259
      %3548 = vst [vmem:[#allocation2 + $0x1d4] sm:$0xf] %v3260
      %3549 = vst [vmem:[#allocation2 + $0x1d8] sm:$0xf] %v3261
      %3550 = vst [vmem:[#allocation2 + $0x1dc] sm:$0xf] %v3262
      %3551 = vst [vmem:[#allocation2 + $0x1e0] sm:$0xf] %v3263
      %3552 = vst [vmem:[#allocation2 + $0x1e4] sm:$0xf] %v3264
      %3553 = vst [vmem:[#allocation2 + $0x1e8] sm:$0xf] %v3265
      %3554 = vst [vmem:[#allocation2 + $0x1ec] sm:$0xf] %v3266
      %3555 = vst [vmem:[#allocation2 + $0x1f0] sm:$0xf] %v3267
      %3556 = vst [vmem:[#allocation2 + $0x1f4] sm:$0xf] %v3268
      %3557 = vst [vmem:[#allocation2 + $0x1f8] sm:$0xf] %v3269
      %3558 = vst [vmem:[#allocation2 + $0x1fc] sm:$0xf] %v3270
      %3559 = vst [vmem:[#allocation2 + $0x200] sm:$0xf] %v3271
      %3560 = vst [vmem:[#allocation2 + $0x204] sm:$0xf] %v3272
      %3561 = vst [vmem:[#allocation2 + $0x208] sm:$0xf] %v3273
      %3562 = vst [vmem:[#allocation2 + $0x20c] sm:$0xf] %v3274
      %3563 = vst [vmem:[#allocation2 + $0x210] sm:$0xf] %v3275
      %3564 = vst [vmem:[#allocation2 + $0x214] sm:$0xf] %v3276
      %3565 = vst [vmem:[#allocation2 + $0x218] sm:$0xf] %v3277
      %3566 = vst [vmem:[#allocation2 + $0x21c] sm:$0xf] %v3278
      %3567 = vst [vmem:[#allocation2 + $0x220] sm:$0xf] %v3279
      %3568 = vst [vmem:[#allocation2 + $0x224] sm:$0xf] %v3280
      %3569 = vst [vmem:[#allocation2 + $0x228] sm:$0xf] %v3281
      %3570 = vst [vmem:[#allocation2 + $0x22c] sm:$0xf] %v3282
      %3571 = vst [vmem:[#allocation2 + $0x230] sm:$0xf] %v3283
      %3572 = vst [vmem:[#allocation2 + $0x234] sm:$0xf] %v3284
      %3573 = vst [vmem:[#allocation2 + $0x238] sm:$0xf] %v3285
      %3574 = vst [vmem:[#allocation2 + $0x23c] sm:$0xf] %v3286
      %v3575 = vld [vmem:[#allocation2] sm:$0xf]
      %v3576 = vld [vmem:[#allocation2 + $0x4] sm:$0xf]
      %v3577 = vld [vmem:[#allocation2 + $0x10] sm:$0xf]
      %v3578 = vld [vmem:[#allocation2 + $0x14] sm:$0xf]
      %v3579 = vld [vmem:[#allocation2 + $0x20] sm:$0xf]
      %v3580 = vld [vmem:[#allocation2 + $0x24] sm:$0xf]
      %v3581 = vld [vmem:[#allocation2 + $0x30] sm:$0xf]
      %v3582 = vld [vmem:[#allocation2 + $0x34] sm:$0xf]
      %v3583 = vld [vmem:[#allocation2 + $0x40] sm:$0xf]
      %v3584 = vld [vmem:[#allocation2 + $0x44] sm:$0xf]
      %v3585 = vld [vmem:[#allocation2 + $0x50] sm:$0xf]
      %v3586 = vld [vmem:[#allocation2 + $0x54] sm:$0xf]
      %v3587 = vld [vmem:[#allocation2 + $0x60] sm:$0xf]
      %v3588 = vld [vmem:[#allocation2 + $0x64] sm:$0xf]
      %v3589 = vld [vmem:[#allocation2 + $0x70] sm:$0xf]
      %v3590 = vld [vmem:[#allocation2 + $0x74] sm:$0xf]
      %v3591 = vld [vmem:[%s4] sm:$0xf]
      %v3592 = vld [vmem:[%s4 + $0x4] sm:$0xf]
      %v3593 = vld [vmem:[%s4 + $0x8] sm:$0xf]
      %v3594 = vld [vmem:[%s4 + $0xc] sm:$0xf]
      %v3595 = vld [vmem:[%s4 + $0x10] sm:$0xf]
      %v3596 = vld [vmem:[%s4 + $0x14] sm:$0xf]
      %v3597 = vld [vmem:[%s4 + $0x18] sm:$0xf]
      %v3598 = vld [vmem:[%s4 + $0x1c] sm:$0xf]
      %v3599 = vld [vmem:[%s4 + $0x20] sm:$0xf]
      %v3600 = vld [vmem:[%s4 + $0x24] sm:$0xf]
      %v3601 = vld [vmem:[%s4 + $0x28] sm:$0xf]
      %v3602 = vld [vmem:[%s4 + $0x2c] sm:$0xf]
      %v3603 = vld [vmem:[%s4 + $0x30] sm:$0xf]
      %v3604 = vld [vmem:[%s4 + $0x34] sm:$0xf]
      %v3605 = vld [vmem:[%s4 + $0x38] sm:$0xf]
      %v3606 = vld [vmem:[%s4 + $0x3c] sm:$0xf]
      %s3607 = scalar_lea.vmem [#allocation2], 144
      %v3608 = vld [vmem:[%s3607] sm:$0xf]
      %v3609 = vld [vmem:[%s3607 + $0x4] sm:$0xf]
      %v3610 = vld [vmem:[%s3607 + $0x10] sm:$0xf]
      %v3611 = vld [vmem:[%s3607 + $0x14] sm:$0xf]
      %v3612 = vld [vmem:[%s3607 + $0x20] sm:$0xf]
      %v3613 = vld [vmem:[%s3607 + $0x24] sm:$0xf]
      %v3614 = vld [vmem:[%s3607 + $0x30] sm:$0xf]
      %v3615 = vld [vmem:[%s3607 + $0x34] sm:$0xf]
      %v3616 = vld [vmem:[%s3607 + $0x40] sm:$0xf]
      %v3617 = vld [vmem:[%s3607 + $0x44] sm:$0xf]
      %v3618 = vld [vmem:[%s3607 + $0x50] sm:$0xf]
      %v3619 = vld [vmem:[%s3607 + $0x54] sm:$0xf]
      %v3620 = vld [vmem:[%s3607 + $0x60] sm:$0xf]
      %v3621 = vld [vmem:[%s3607 + $0x64] sm:$0xf]
      %v3622 = vld [vmem:[%s3607 + $0x70] sm:$0xf]
      %v3623 = vld [vmem:[%s3607 + $0x74] sm:$0xf]
      %s3624 = scalar_lea.vmem %s4, 64
      %v3625 = vld [vmem:[%s3624] sm:$0xf]
      %v3626 = vld [vmem:[%s3624 + $0x4] sm:$0xf]
      %v3627 = vld [vmem:[%s3624 + $0x8] sm:$0xf]
      %v3628 = vld [vmem:[%s3624 + $0xc] sm:$0xf]
      %v3629 = vld [vmem:[%s3624 + $0x10] sm:$0xf]
      %v3630 = vld [vmem:[%s3624 + $0x14] sm:$0xf]
      %v3631 = vld [vmem:[%s3624 + $0x18] sm:$0xf]
      %v3632 = vld [vmem:[%s3624 + $0x1c] sm:$0xf]
      %v3633 = vld [vmem:[%s3624 + $0x20] sm:$0xf]
      %v3634 = vld [vmem:[%s3624 + $0x24] sm:$0xf]
      %v3635 = vld [vmem:[%s3624 + $0x28] sm:$0xf]
      %v3636 = vld [vmem:[%s3624 + $0x2c] sm:$0xf]
      %v3637 = vld [vmem:[%s3624 + $0x30] sm:$0xf]
      %v3638 = vld [vmem:[%s3624 + $0x34] sm:$0xf]
      %v3639 = vld [vmem:[%s3624 + $0x38] sm:$0xf]
      %v3640 = vld [vmem:[%s3624 + $0x3c] sm:$0xf]
      %v3657 = vunpack.c.l.b16 %v3608
      %v3658 = vunpack.c.l.b16 %v3609
      %v3659 = vunpack.c.l.b16 %v3610
      %v3660 = vunpack.c.l.b16 %v3611
      %v3661 = vunpack.c.l.b16 %v3612
      %v3662 = vunpack.c.l.b16 %v3613
      %v3663 = vunpack.c.l.b16 %v3614
      %v3664 = vunpack.c.l.b16 %v3615
      %v3665 = vunpack.c.l.b16 %v3616
      %v3666 = vunpack.c.l.b16 %v3617
      %v3667 = vunpack.c.l.b16 %v3618
      %v3668 = vunpack.c.l.b16 %v3619
      %v3669 = vunpack.c.l.b16 %v3620
      %v3670 = vunpack.c.l.b16 %v3621
      %v3671 = vunpack.c.l.b16 %v3622
      %v3672 = vunpack.c.l.b16 %v3623
      %v3673 = vpack.c.b16 %v3658, %v3657
      %v3674 = vpack.c.b16 %v3660, %v3659
      %v3675 = vpack.c.b16 %v3662, %v3661
      %v3676 = vpack.c.b16 %v3664, %v3663
      %v3677 = vpack.c.b16 %v3666, %v3665
      %v3678 = vpack.c.b16 %v3668, %v3667
      %v3679 = vpack.c.b16 %v3670, %v3669
      %v3680 = vpack.c.b16 %v3672, %v3671
      %v3705 = vunpack.c.l.b16 %v3625
      %v3706 = vunpack.c.l.b16 %v3626
      %v3707 = vunpack.c.l.b16 %v3627
      %v3708 = vunpack.c.l.b16 %v3628
      %v3709 = vunpack.c.l.b16 %v3629
      %v3710 = vunpack.c.l.b16 %v3630
      %v3711 = vunpack.c.l.b16 %v3631
      %v3712 = vunpack.c.l.b16 %v3632
      %v3713 = vunpack.c.l.b16 %v3633
      %v3714 = vunpack.c.l.b16 %v3634
      %v3715 = vunpack.c.l.b16 %v3635
      %v3716 = vunpack.c.l.b16 %v3636
      %v3717 = vunpack.c.l.b16 %v3637
      %v3718 = vunpack.c.l.b16 %v3638
      %v3719 = vunpack.c.l.b16 %v3639
      %v3720 = vunpack.c.l.b16 %v3640
      %v3721 = vpack.c.b16 %v3706, %v3705
      %v3722 = vpack.c.b16 %v3708, %v3707
      %v3723 = vpack.c.b16 %v3710, %v3709
      %v3724 = vpack.c.b16 %v3712, %v3711
      %v3725 = vpack.c.b16 %v3714, %v3713
      %v3726 = vpack.c.b16 %v3716, %v3715
      %v3727 = vpack.c.b16 %v3718, %v3717
      %v3728 = vpack.c.b16 %v3720, %v3719
      %3737 = vmatprep.subr.bf16.mxu0 0
      %3738 = vmatpush1.bf16.msra.mxu0 %v3728
      %3739 = vmatprep.subr.bf16.mxu0 0
      %3740 = vmatpush1.bf16.msra.mxu0 %v3727
      %3741 = vmatprep.subr.bf16.mxu0 0
      %3742 = vmatpush1.bf16.msra.mxu0 %v3726
      %3743 = vmatprep.subr.bf16.mxu0 0
      %3744 = vmatpush1.bf16.msra.mxu0 %v3725
      %3745 = vmatprep.subr.bf16.mxu0 0
      %3746 = vmatpush1.bf16.msra.mxu0 %v3724
      %3747 = vmatprep.subr.bf16.mxu0 0
      %3748 = vmatpush1.bf16.msra.mxu0 %v3723
      %3749 = vmatprep.subr.bf16.mxu0 0
      %3750 = vmatpush1.bf16.msra.mxu0 %v3722
      %3751 = vmatprep.subr.bf16.mxu0 0
      %3752 = vmatpush1.bf16.msra.mxu0 %v3721
      %3753 = vmatprep.subr.bf16.mxu0 0
      %3754 = vmatpush2.bf16.msra.mxu0 0
      %3755 = vmatprep.subr.bf16.mxu0 0
      %3756 = vmatpush2.bf16.msra.mxu0 0
      %3757 = vmatprep.subr.bf16.mxu0 0
      %3758 = vmatpush2.bf16.msra.mxu0 0
      %3759 = vmatprep.subr.bf16.mxu0 0
      %3760 = vmatpush2.bf16.msra.mxu0 0
      %3761 = vmatprep.subr.bf16.mxu0 0
      %3762 = vmatpush2.bf16.msra.mxu0 0
      %3763 = vmatprep.subr.bf16.mxu0 0
      %3764 = vmatpush2.bf16.msra.mxu0 0
      %3765 = vmatprep.subr.bf16.mxu0 0
      %3766 = vmatpush2.bf16.msra.mxu0 0
      %3767 = vmatprep.subr.bf16.mxu0 0
      %3768 = vmatpush2.bf16.msra.mxu0 0
      %3769 = vmatprep.mubr.bf16.mxu0 0
      %3770 = vmatmul.mubr.bf16.gmra.mxu0 %v3673
      %v3771 = vpop.f32.mrf.mxu0
      %v3772 = vadd.f32 0.0, %v3771
      %v3773 = vpop.f32.mrf.mxu0
      %v3774 = vpop.f32.mrf.mxu0
      %v3775 = vadd.f32 0.0, %v3774
      %v3776 = vpop.f32.mrf.mxu0
      %3777 = vmatprep.mubr.bf16.mxu0 0
      %3778 = vmatmul.mubr.bf16.gmra.mxu0 %v3674
      %v3779 = vpop.f32.mrf.mxu0
      %v3780 = vadd.f32 0.0, %v3779
      %v3781 = vpop.f32.mrf.mxu0
      %v3782 = vpop.f32.mrf.mxu0
      %v3783 = vadd.f32 0.0, %v3782
      %v3784 = vpop.f32.mrf.mxu0
      %3785 = vmatprep.mubr.bf16.mxu0 0
      %3786 = vmatmul.mubr.bf16.gmra.mxu0 %v3675
      %v3787 = vpop.f32.mrf.mxu0
      %v3788 = vadd.f32 0.0, %v3787
      %v3789 = vpop.f32.mrf.mxu0
      %v3790 = vpop.f32.mrf.mxu0
      %v3791 = vadd.f32 0.0, %v3790
      %v3792 = vpop.f32.mrf.mxu0
      %3793 = vmatprep.mubr.bf16.mxu0 0
      %3794 = vmatmul.mubr.bf16.gmra.mxu0 %v3676
      %v3795 = vpop.f32.mrf.mxu0
      %v3796 = vadd.f32 0.0, %v3795
      %v3797 = vpop.f32.mrf.mxu0
      %v3798 = vpop.f32.mrf.mxu0
      %v3799 = vadd.f32 0.0, %v3798
      %v3800 = vpop.f32.mrf.mxu0
      %3801 = vmatprep.mubr.bf16.mxu0 0
      %3802 = vmatmul.mubr.bf16.gmra.mxu0 %v3677
      %v3803 = vpop.f32.mrf.mxu0
      %v3804 = vadd.f32 0.0, %v3803
      %v3805 = vpop.f32.mrf.mxu0
      %v3806 = vpop.f32.mrf.mxu0
      %v3807 = vadd.f32 0.0, %v3806
      %v3808 = vpop.f32.mrf.mxu0
      %3809 = vmatprep.mubr.bf16.mxu0 0
      %3810 = vmatmul.mubr.bf16.gmra.mxu0 %v3678
      %v3811 = vpop.f32.mrf.mxu0
      %v3812 = vadd.f32 0.0, %v3811
      %v3813 = vpop.f32.mrf.mxu0
      %v3814 = vpop.f32.mrf.mxu0
      %v3815 = vadd.f32 0.0, %v3814
      %v3816 = vpop.f32.mrf.mxu0
      %3817 = vmatprep.mubr.bf16.mxu0 0
      %3818 = vmatmul.mubr.bf16.gmra.mxu0 %v3679
      %v3819 = vpop.f32.mrf.mxu0
      %v3820 = vadd.f32 0.0, %v3819
      %v3821 = vpop.f32.mrf.mxu0
      %v3822 = vpop.f32.mrf.mxu0
      %v3823 = vadd.f32 0.0, %v3822
      %v3824 = vpop.f32.mrf.mxu0
      %3825 = vmatprep.mubr.bf16.mxu0 0
      %3826 = vmatmul.mubr.bf16.gmra.mxu0 %v3680
      %v3827 = vpop.f32.mrf.mxu0
      %v3828 = vadd.f32 0.0, %v3827
      %v3829 = vpop.f32.mrf.mxu0
      %v3830 = vpop.f32.mrf.mxu0
      %v3831 = vadd.f32 0.0, %v3830
      %v3832 = vpop.f32.mrf.mxu0
      %3833 = vdwg.mxu0
      %v3850 = vunpack.c.l.b16 %v3575
      %v3851 = vunpack.c.l.b16 %v3576
      %v3852 = vunpack.c.l.b16 %v3577
      %v3853 = vunpack.c.l.b16 %v3578
      %v3854 = vunpack.c.l.b16 %v3579
      %v3855 = vunpack.c.l.b16 %v3580
      %v3856 = vunpack.c.l.b16 %v3581
      %v3857 = vunpack.c.l.b16 %v3582
      %v3858 = vunpack.c.l.b16 %v3583
      %v3859 = vunpack.c.l.b16 %v3584
      %v3860 = vunpack.c.l.b16 %v3585
      %v3861 = vunpack.c.l.b16 %v3586
      %v3862 = vunpack.c.l.b16 %v3587
      %v3863 = vunpack.c.l.b16 %v3588
      %v3864 = vunpack.c.l.b16 %v3589
      %v3865 = vunpack.c.l.b16 %v3590
      %v3866 = vpack.c.b16 %v3851, %v3850
      %v3867 = vpack.c.b16 %v3853, %v3852
      %v3868 = vpack.c.b16 %v3855, %v3854
      %v3869 = vpack.c.b16 %v3857, %v3856
      %v3870 = vpack.c.b16 %v3859, %v3858
      %v3871 = vpack.c.b16 %v3861, %v3860
      %v3872 = vpack.c.b16 %v3863, %v3862
      %v3873 = vpack.c.b16 %v3865, %v3864
      %v3898 = vunpack.c.l.b16 %v3591
      %v3899 = vunpack.c.l.b16 %v3592
      %v3900 = vunpack.c.l.b16 %v3593
      %v3901 = vunpack.c.l.b16 %v3594
      %v3902 = vunpack.c.l.b16 %v3595
      %v3903 = vunpack.c.l.b16 %v3596
      %v3904 = vunpack.c.l.b16 %v3597
      %v3905 = vunpack.c.l.b16 %v3598
      %v3906 = vunpack.c.l.b16 %v3599
      %v3907 = vunpack.c.l.b16 %v3600
      %v3908 = vunpack.c.l.b16 %v3601
      %v3909 = vunpack.c.l.b16 %v3602
      %v3910 = vunpack.c.l.b16 %v3603
      %v3911 = vunpack.c.l.b16 %v3604
      %v3912 = vunpack.c.l.b16 %v3605
      %v3913 = vunpack.c.l.b16 %v3606
      %v3914 = vpack.c.b16 %v3899, %v3898
      %v3915 = vpack.c.b16 %v3901, %v3900
      %v3916 = vpack.c.b16 %v3903, %v3902
      %v3917 = vpack.c.b16 %v3905, %v3904
      %v3918 = vpack.c.b16 %v3907, %v3906
      %v3919 = vpack.c.b16 %v3909, %v3908
      %v3920 = vpack.c.b16 %v3911, %v3910
      %v3921 = vpack.c.b16 %v3913, %v3912
      %3930 = vmatprep.subr.bf16.mxu0 0
      %3931 = vmatpush1.bf16.msra.mxu0 %v3921
      %3932 = vmatprep.subr.bf16.mxu0 0
      %3933 = vmatpush1.bf16.msra.mxu0 %v3920
      %3934 = vmatprep.subr.bf16.mxu0 0
      %3935 = vmatpush1.bf16.msra.mxu0 %v3919
      %3936 = vmatprep.subr.bf16.mxu0 0
      %3937 = vmatpush1.bf16.msra.mxu0 %v3918
      %3938 = vmatprep.subr.bf16.mxu0 0
      %3939 = vmatpush1.bf16.msra.mxu0 %v3917
      %3940 = vmatprep.subr.bf16.mxu0 0
      %3941 = vmatpush1.bf16.msra.mxu0 %v3916
      %3942 = vmatprep.subr.bf16.mxu0 0
      %3943 = vmatpush1.bf16.msra.mxu0 %v3915
      %3944 = vmatprep.subr.bf16.mxu0 0
      %3945 = vmatpush1.bf16.msra.mxu0 %v3914
      %3946 = vmatprep.subr.bf16.mxu0 0
      %3947 = vmatpush2.bf16.msra.mxu0 0
      %3948 = vmatprep.subr.bf16.mxu0 0
      %3949 = vmatpush2.bf16.msra.mxu0 0
      %3950 = vmatprep.subr.bf16.mxu0 0
      %3951 = vmatpush2.bf16.msra.mxu0 0
      %3952 = vmatprep.subr.bf16.mxu0 0
      %3953 = vmatpush2.bf16.msra.mxu0 0
      %3954 = vmatprep.subr.bf16.mxu0 0
      %3955 = vmatpush2.bf16.msra.mxu0 0
      %3956 = vmatprep.subr.bf16.mxu0 0
      %3957 = vmatpush2.bf16.msra.mxu0 0
      %3958 = vmatprep.subr.bf16.mxu0 0
      %3959 = vmatpush2.bf16.msra.mxu0 0
      %3960 = vmatprep.subr.bf16.mxu0 0
      %3961 = vmatpush2.bf16.msra.mxu0 0
      %3962 = vmatprep.mubr.bf16.mxu0 0
      %3963 = vmatmul.mubr.bf16.gmra.mxu0 %v3866
      %v3964 = vpop.f32.mrf.mxu0
      %v3965 = vadd.f32 %v3772, %v3964
      %v3966 = vpop.f32.mrf.mxu0
      %v3967 = vpop.f32.mrf.mxu0
      %v3968 = vadd.f32 %v3775, %v3967
      %v3969 = vpop.f32.mrf.mxu0
      %3970 = vmatprep.mubr.bf16.mxu0 0
      %3971 = vmatmul.mubr.bf16.gmra.mxu0 %v3867
      %v3972 = vpop.f32.mrf.mxu0
      %v3973 = vadd.f32 %v3780, %v3972
      %v3974 = vpop.f32.mrf.mxu0
      %v3975 = vpop.f32.mrf.mxu0
      %v3976 = vadd.f32 %v3783, %v3975
      %v3977 = vpop.f32.mrf.mxu0
      %3978 = vmatprep.mubr.bf16.mxu0 0
      %3979 = vmatmul.mubr.bf16.gmra.mxu0 %v3868
      %v3980 = vpop.f32.mrf.mxu0
      %v3981 = vadd.f32 %v3788, %v3980
      %v3982 = vpop.f32.mrf.mxu0
      %v3983 = vpop.f32.mrf.mxu0
      %v3984 = vadd.f32 %v3791, %v3983
      %v3985 = vpop.f32.mrf.mxu0
      %3986 = vmatprep.mubr.bf16.mxu0 0
      %3987 = vmatmul.mubr.bf16.gmra.mxu0 %v3869
      %v3988 = vpop.f32.mrf.mxu0
      %v3989 = vadd.f32 %v3796, %v3988
      %v3990 = vpop.f32.mrf.mxu0
      %v3991 = vpop.f32.mrf.mxu0
      %v3992 = vadd.f32 %v3799, %v3991
      %v3993 = vpop.f32.mrf.mxu0
      %3994 = vmatprep.mubr.bf16.mxu0 0
      %3995 = vmatmul.mubr.bf16.gmra.mxu0 %v3870
      %v3996 = vpop.f32.mrf.mxu0
      %v3997 = vadd.f32 %v3804, %v3996
      %v3998 = vpop.f32.mrf.mxu0
      %v3999 = vpop.f32.mrf.mxu0
      %v4000 = vadd.f32 %v3807, %v3999
      %v4001 = vpop.f32.mrf.mxu0
      %4002 = vmatprep.mubr.bf16.mxu0 0
      %4003 = vmatmul.mubr.bf16.gmra.mxu0 %v3871
      %v4004 = vpop.f32.mrf.mxu0
      %v4005 = vadd.f32 %v3812, %v4004
      %v4006 = vpop.f32.mrf.mxu0
      %v4007 = vpop.f32.mrf.mxu0
      %v4008 = vadd.f32 %v3815, %v4007
      %v4009 = vpop.f32.mrf.mxu0
      %4010 = vmatprep.mubr.bf16.mxu0 0
      %4011 = vmatmul.mubr.bf16.gmra.mxu0 %v3872
      %v4012 = vpop.f32.mrf.mxu0
      %v4013 = vadd.f32 %v3820, %v4012
      %v4014 = vpop.f32.mrf.mxu0
      %v4015 = vpop.f32.mrf.mxu0
      %v4016 = vadd.f32 %v3823, %v4015
      %v4017 = vpop.f32.mrf.mxu0
      %4018 = vmatprep.mubr.bf16.mxu0 0
      %4019 = vmatmul.mubr.bf16.gmra.mxu0 %v3873
      %v4020 = vpop.f32.mrf.mxu0
      %v4021 = vadd.f32 %v3828, %v4020
      %v4022 = vpop.f32.mrf.mxu0
      %v4023 = vpop.f32.mrf.mxu0
      %v4024 = vadd.f32 %v3831, %v4023
      %v4025 = vpop.f32.mrf.mxu0
      %4026 = vdwg.mxu0
      %v4027 = vld [vmem:[#allocation2] sm:$0xf]
      %v4028 = vld [vmem:[#allocation2 + $0x4] sm:$0xf]
      %v4029 = vld [vmem:[#allocation2 + $0x8] sm:$0x1]
      %v4030 = vld [vmem:[#allocation2 + $0x10] sm:$0xf]
      %v4031 = vld [vmem:[#allocation2 + $0x14] sm:$0xf]
      %v4032 = vld [vmem:[#allocation2 + $0x18] sm:$0x1]
      %v4033 = vld [vmem:[#allocation2 + $0x20] sm:$0xf]
      %v4034 = vld [vmem:[#allocation2 + $0x24] sm:$0xf]
      %v4035 = vld [vmem:[#allocation2 + $0x28] sm:$0x1]
      %v4036 = vld [vmem:[#allocation2 + $0x30] sm:$0xf]
      %v4037 = vld [vmem:[#allocation2 + $0x34] sm:$0xf]
      %v4038 = vld [vmem:[#allocation2 + $0x38] sm:$0x1]
      %v4039 = vld [vmem:[#allocation2 + $0x40] sm:$0xf]
      %v4040 = vld [vmem:[#allocation2 + $0x44] sm:$0xf]
      %v4041 = vld [vmem:[#allocation2 + $0x48] sm:$0x1]
      %v4042 = vld [vmem:[#allocation2 + $0x50] sm:$0xf]
      %v4043 = vld [vmem:[#allocation2 + $0x54] sm:$0xf]
      %v4044 = vld [vmem:[#allocation2 + $0x58] sm:$0x1]
      %v4045 = vld [vmem:[#allocation2 + $0x60] sm:$0xf]
      %v4046 = vld [vmem:[#allocation2 + $0x64] sm:$0xf]
      %v4047 = vld [vmem:[#allocation2 + $0x68] sm:$0x1]
      %v4048 = vld [vmem:[#allocation2 + $0x70] sm:$0xf]
      %v4049 = vld [vmem:[#allocation2 + $0x74] sm:$0xf]
      %v4050 = vld [vmem:[#allocation2 + $0x78] sm:$0x1]
      %vm4051 = vsmask.f32 3328
      %vm4052 = vsmask.f32 7440
      %vm4053 = vmor %vm4051, %vm4052
      %v4055 = vshrl.u32 %v4027, 16
      %v4057 = vrot.slane %v4055, 4
      %v4058 = vshll.u32 %v4027, 16
      %v4060 = vrot.slane %v4058, 5
      %v4061 = vor.u32 %v4057, %v4060
      %v4062 = vrot.slane %v4061, 4
      %v4064 = vshll.u32 %v4028, 16
      %v4066 = vrot.slane %v4064, 5
      %v4067 = vsel %vm4053, %v4062, %v4066
      %v4068 = vshrl.u32 %v4028, 16
      %v4070 = vrot.slane %v4068, 4
      %v4071 = vor.u32 %v4070, %v4066
      %v4072 = vrot.slane %v4071, 4
      %v4074 = vshll.u32 %v4029, 16
      %v4076 = vrot.slane %v4074, 5
      %v4077 = vsel %vm4053, %v4072, %v4076
      %v4079 = vshrl.u32 %v4030, 16
      %v4081 = vrot.slane %v4079, 4
      %v4082 = vshll.u32 %v4030, 16
      %v4084 = vrot.slane %v4082, 5
      %v4085 = vor.u32 %v4081, %v4084
      %v4086 = vrot.slane %v4085, 4
      %v4088 = vshll.u32 %v4031, 16
      %v4090 = vrot.slane %v4088, 5
      %v4091 = vsel %vm4053, %v4086, %v4090
      %v4092 = vshrl.u32 %v4031, 16
      %v4094 = vrot.slane %v4092, 4
      %v4095 = vor.u32 %v4094, %v4090
      %v4096 = vrot.slane %v4095, 4
      %v4098 = vshll.u32 %v4032, 16
      %v4100 = vrot.slane %v4098, 5
      %v4101 = vsel %vm4053, %v4096, %v4100
      %v4103 = vshrl.u32 %v4033, 16
      %v4105 = vrot.slane %v4103, 4
      %v4106 = vshll.u32 %v4033, 16
      %v4108 = vrot.slane %v4106, 5
      %v4109 = vor.u32 %v4105, %v4108
      %v4110 = vrot.slane %v4109, 4
      %v4112 = vshll.u32 %v4034, 16
      %v4114 = vrot.slane %v4112, 5
      %v4115 = vsel %vm4053, %v4110, %v4114
      %v4116 = vshrl.u32 %v4034, 16
      %v4118 = vrot.slane %v4116, 4
      %v4119 = vor.u32 %v4118, %v4114
      %v4120 = vrot.slane %v4119, 4
      %v4122 = vshll.u32 %v4035, 16
      %v4124 = vrot.slane %v4122, 5
      %v4125 = vsel %vm4053, %v4120, %v4124
      %v4127 = vshrl.u32 %v4036, 16
      %v4129 = vrot.slane %v4127, 4
      %v4130 = vshll.u32 %v4036, 16
      %v4132 = vrot.slane %v4130, 5
      %v4133 = vor.u32 %v4129, %v4132
      %v4134 = vrot.slane %v4133, 4
      %v4136 = vshll.u32 %v4037, 16
      %v4138 = vrot.slane %v4136, 5
      %v4139 = vsel %vm4053, %v4134, %v4138
      %v4140 = vshrl.u32 %v4037, 16
      %v4142 = vrot.slane %v4140, 4
      %v4143 = vor.u32 %v4142, %v4138
      %v4144 = vrot.slane %v4143, 4
      %v4146 = vshll.u32 %v4038, 16
      %v4148 = vrot.slane %v4146, 5
      %v4149 = vsel %vm4053, %v4144, %v4148
      %v4151 = vshrl.u32 %v4039, 16
      %v4153 = vrot.slane %v4151, 4
      %v4154 = vshll.u32 %v4039, 16
      %v4156 = vrot.slane %v4154, 5
      %v4157 = vor.u32 %v4153, %v4156
      %v4158 = vrot.slane %v4157, 4
      %v4160 = vshll.u32 %v4040, 16
      %v4162 = vrot.slane %v4160, 5
      %v4163 = vsel %vm4053, %v4158, %v4162
      %v4164 = vshrl.u32 %v4040, 16
      %v4166 = vrot.slane %v4164, 4
      %v4167 = vor.u32 %v4166, %v4162
      %v4168 = vrot.slane %v4167, 4
      %v4170 = vshll.u32 %v4041, 16
      %v4172 = vrot.slane %v4170, 5
      %v4173 = vsel %vm4053, %v4168, %v4172
      %v4175 = vshrl.u32 %v4042, 16
      %v4177 = vrot.slane %v4175, 4
      %v4178 = vshll.u32 %v4042, 16
      %v4180 = vrot.slane %v4178, 5
      %v4181 = vor.u32 %v4177, %v4180
      %v4182 = vrot.slane %v4181, 4
      %v4184 = vshll.u32 %v4043, 16
      %v4186 = vrot.slane %v4184, 5
      %v4187 = vsel %vm4053, %v4182, %v4186
      %v4188 = vshrl.u32 %v4043, 16
      %v4190 = vrot.slane %v4188, 4
      %v4191 = vor.u32 %v4190, %v4186
      %v4192 = vrot.slane %v4191, 4
      %v4194 = vshll.u32 %v4044, 16
      %v4196 = vrot.slane %v4194, 5
      %v4197 = vsel %vm4053, %v4192, %v4196
      %v4199 = vshrl.u32 %v4045, 16
      %v4201 = vrot.slane %v4199, 4
      %v4202 = vshll.u32 %v4045, 16
      %v4204 = vrot.slane %v4202, 5
      %v4205 = vor.u32 %v4201, %v4204
      %v4206 = vrot.slane %v4205, 4
      %v4208 = vshll.u32 %v4046, 16
      %v4210 = vrot.slane %v4208, 5
      %v4211 = vsel %vm4053, %v4206, %v4210
      %v4212 = vshrl.u32 %v4046, 16
      %v4214 = vrot.slane %v4212, 4
      %v4215 = vor.u32 %v4214, %v4210
      %v4216 = vrot.slane %v4215, 4
      %v4218 = vshll.u32 %v4047, 16
      %v4220 = vrot.slane %v4218, 5
      %v4221 = vsel %vm4053, %v4216, %v4220
      %v4223 = vshrl.u32 %v4048, 16
      %v4225 = vrot.slane %v4223, 4
      %v4226 = vshll.u32 %v4048, 16
      %v4228 = vrot.slane %v4226, 5
      %v4229 = vor.u32 %v4225, %v4228
      %v4230 = vrot.slane %v4229, 4
      %v4232 = vshll.u32 %v4049, 16
      %v4234 = vrot.slane %v4232, 5
      %v4235 = vsel %vm4053, %v4230, %v4234
      %v4236 = vshrl.u32 %v4049, 16
      %v4238 = vrot.slane %v4236, 4
      %v4239 = vor.u32 %v4238, %v4234
      %v4240 = vrot.slane %v4239, 4
      %v4242 = vshll.u32 %v4050, 16
      %v4244 = vrot.slane %v4242, 5
      %v4245 = vsel %vm4053, %v4240, %v4244
      %s4246 = scalar_lea.vmem %s4, 128
      %v4247 = vld [vmem:[%s4246] sm:$0xf]
      %v4248 = vld [vmem:[%s4246 + $0x4] sm:$0xf]
      %v4249 = vld [vmem:[%s4246 + $0x8] sm:$0xf]
      %v4250 = vld [vmem:[%s4246 + $0xc] sm:$0xf]
      %v4251 = vld [vmem:[%s4246 + $0x10] sm:$0xf]
      %v4252 = vld [vmem:[%s4246 + $0x14] sm:$0xf]
      %v4253 = vld [vmem:[%s4246 + $0x18] sm:$0xf]
      %v4254 = vld [vmem:[%s4246 + $0x1c] sm:$0xf]
      %v4255 = vld [vmem:[%s4246 + $0x20] sm:$0xf]
      %v4256 = vld [vmem:[%s4246 + $0x24] sm:$0xf]
      %v4257 = vld [vmem:[%s4246 + $0x28] sm:$0xf]
      %v4258 = vld [vmem:[%s4246 + $0x2c] sm:$0xf]
      %v4259 = vld [vmem:[%s4246 + $0x30] sm:$0xf]
      %v4260 = vld [vmem:[%s4246 + $0x34] sm:$0xf]
      %v4261 = vld [vmem:[%s4246 + $0x38] sm:$0xf]
      %v4262 = vld [vmem:[%s4246 + $0x3c] sm:$0xf]
      %v4263 = vunpack.c.l.b16 %v4067
      %v4264 = vunpack.c.l.b16 %v4077
      %v4265 = vunpack.c.l.b16 %v4091
      %v4266 = vunpack.c.l.b16 %v4101
      %v4267 = vunpack.c.l.b16 %v4115
      %v4268 = vunpack.c.l.b16 %v4125
      %v4269 = vunpack.c.l.b16 %v4139
      %v4270 = vunpack.c.l.b16 %v4149
      %v4271 = vunpack.c.l.b16 %v4163
      %v4272 = vunpack.c.l.b16 %v4173
      %v4273 = vunpack.c.l.b16 %v4187
      %v4274 = vunpack.c.l.b16 %v4197
      %v4275 = vunpack.c.l.b16 %v4211
      %v4276 = vunpack.c.l.b16 %v4221
      %v4277 = vunpack.c.l.b16 %v4235
      %v4278 = vunpack.c.l.b16 %v4245
      %v4279 = vpack.c.b16 %v4264, %v4263
      %v4280 = vpack.c.b16 %v4266, %v4265
      %v4281 = vpack.c.b16 %v4268, %v4267
      %v4282 = vpack.c.b16 %v4270, %v4269
      %v4283 = vpack.c.b16 %v4272, %v4271
      %v4284 = vpack.c.b16 %v4274, %v4273
      %v4285 = vpack.c.b16 %v4276, %v4275
      %v4286 = vpack.c.b16 %v4278, %v4277
      %v4311 = vunpack.c.l.b16 %v4247
      %v4312 = vunpack.c.l.b16 %v4248
      %v4313 = vunpack.c.l.b16 %v4249
      %v4314 = vunpack.c.l.b16 %v4250
      %v4315 = vunpack.c.l.b16 %v4251
      %v4316 = vunpack.c.l.b16 %v4252
      %v4317 = vunpack.c.l.b16 %v4253
      %v4318 = vunpack.c.l.b16 %v4254
      %v4319 = vunpack.c.l.b16 %v4255
      %v4320 = vunpack.c.l.b16 %v4256
      %v4321 = vunpack.c.l.b16 %v4257
      %v4322 = vunpack.c.l.b16 %v4258
      %v4323 = vunpack.c.l.b16 %v4259
      %v4324 = vunpack.c.l.b16 %v4260
      %v4325 = vunpack.c.l.b16 %v4261
      %v4326 = vunpack.c.l.b16 %v4262
      %v4327 = vpack.c.b16 %v4312, %v4311
      %v4328 = vpack.c.b16 %v4314, %v4313
      %v4329 = vpack.c.b16 %v4316, %v4315
      %v4330 = vpack.c.b16 %v4318, %v4317
      %v4331 = vpack.c.b16 %v4320, %v4319
      %v4332 = vpack.c.b16 %v4322, %v4321
      %v4333 = vpack.c.b16 %v4324, %v4323
      %v4334 = vpack.c.b16 %v4326, %v4325
      %4343 = vmatprep.subr.bf16.mxu0 0
      %4344 = vmatpush1.bf16.msra.mxu0 %v4334
      %4345 = vmatprep.subr.bf16.mxu0 0
      %4346 = vmatpush1.bf16.msra.mxu0 %v4333
      %4347 = vmatprep.subr.bf16.mxu0 0
      %4348 = vmatpush1.bf16.msra.mxu0 %v4332
      %4349 = vmatprep.subr.bf16.mxu0 0
      %4350 = vmatpush1.bf16.msra.mxu0 %v4331
      %4351 = vmatprep.subr.bf16.mxu0 0
      %4352 = vmatpush1.bf16.msra.mxu0 %v4330
      %4353 = vmatprep.subr.bf16.mxu0 0
      %4354 = vmatpush1.bf16.msra.mxu0 %v4329
      %4355 = vmatprep.subr.bf16.mxu0 0
      %4356 = vmatpush1.bf16.msra.mxu0 %v4328
      %4357 = vmatprep.subr.bf16.mxu0 0
      %4358 = vmatpush1.bf16.msra.mxu0 %v4327
      %4359 = vmatprep.subr.bf16.mxu0 0
      %4360 = vmatpush2.bf16.msra.mxu0 0
      %4361 = vmatprep.subr.bf16.mxu0 0
      %4362 = vmatpush2.bf16.msra.mxu0 0
      %4363 = vmatprep.subr.bf16.mxu0 0
      %4364 = vmatpush2.bf16.msra.mxu0 0
      %4365 = vmatprep.subr.bf16.mxu0 0
      %4366 = vmatpush2.bf16.msra.mxu0 0
      %4367 = vmatprep.subr.bf16.mxu0 0
      %4368 = vmatpush2.bf16.msra.mxu0 0
      %4369 = vmatprep.subr.bf16.mxu0 0
      %4370 = vmatpush2.bf16.msra.mxu0 0
      %4371 = vmatprep.subr.bf16.mxu0 0
      %4372 = vmatpush2.bf16.msra.mxu0 0
      %4373 = vmatprep.subr.bf16.mxu0 0
      %4374 = vmatpush2.bf16.msra.mxu0 0
      %4375 = vmatprep.mubr.bf16.mxu0 0
      %4376 = vmatmul.mubr.bf16.gmra.mxu0 %v4279
      %v4377 = vpop.f32.mrf.mxu0
      %v4378 = vadd.f32 0.0, %v4377
      %v4379 = vpop.f32.mrf.mxu0
      %v4380 = vpop.f32.mrf.mxu0
      %v4381 = vadd.f32 0.0, %v4380
      %v4382 = vpop.f32.mrf.mxu0
      %4383 = vmatprep.mubr.bf16.mxu0 0
      %4384 = vmatmul.mubr.bf16.gmra.mxu0 %v4280
      %v4385 = vpop.f32.mrf.mxu0
      %v4386 = vadd.f32 0.0, %v4385
      %v4387 = vpop.f32.mrf.mxu0
      %v4388 = vpop.f32.mrf.mxu0
      %v4389 = vadd.f32 0.0, %v4388
      %v4390 = vpop.f32.mrf.mxu0
      %4391 = vmatprep.mubr.bf16.mxu0 0
      %4392 = vmatmul.mubr.bf16.gmra.mxu0 %v4281
      %v4393 = vpop.f32.mrf.mxu0
      %v4394 = vadd.f32 0.0, %v4393
      %v4395 = vpop.f32.mrf.mxu0
      %v4396 = vpop.f32.mrf.mxu0
      %v4397 = vadd.f32 0.0, %v4396
      %v4398 = vpop.f32.mrf.mxu0
      %4399 = vmatprep.mubr.bf16.mxu0 0
      %4400 = vmatmul.mubr.bf16.gmra.mxu0 %v4282
      %v4401 = vpop.f32.mrf.mxu0
      %v4402 = vadd.f32 0.0, %v4401
      %v4403 = vpop.f32.mrf.mxu0
      %v4404 = vpop.f32.mrf.mxu0
      %v4405 = vadd.f32 0.0, %v4404
      %v4406 = vpop.f32.mrf.mxu0
      %4407 = vmatprep.mubr.bf16.mxu0 0
      %4408 = vmatmul.mubr.bf16.gmra.mxu0 %v4283
      %v4409 = vpop.f32.mrf.mxu0
      %v4410 = vadd.f32 0.0, %v4409
      %v4411 = vpop.f32.mrf.mxu0
      %v4412 = vpop.f32.mrf.mxu0
      %v4413 = vadd.f32 0.0, %v4412
      %v4414 = vpop.f32.mrf.mxu0
      %4415 = vmatprep.mubr.bf16.mxu0 0
      %4416 = vmatmul.mubr.bf16.gmra.mxu0 %v4284
      %v4417 = vpop.f32.mrf.mxu0
      %v4418 = vadd.f32 0.0, %v4417
      %v4419 = vpop.f32.mrf.mxu0
      %v4420 = vpop.f32.mrf.mxu0
      %v4421 = vadd.f32 0.0, %v4420
      %v4422 = vpop.f32.mrf.mxu0
      %4423 = vmatprep.mubr.bf16.mxu0 0
      %4424 = vmatmul.mubr.bf16.gmra.mxu0 %v4285
      %v4425 = vpop.f32.mrf.mxu0
      %v4426 = vadd.f32 0.0, %v4425
      %v4427 = vpop.f32.mrf.mxu0
      %v4428 = vpop.f32.mrf.mxu0
      %v4429 = vadd.f32 0.0, %v4428
      %v4430 = vpop.f32.mrf.mxu0
      %4431 = vmatprep.mubr.bf16.mxu0 0
      %4432 = vmatmul.mubr.bf16.gmra.mxu0 %v4286
      %v4433 = vpop.f32.mrf.mxu0
      %v4434 = vadd.f32 0.0, %v4433
      %v4435 = vpop.f32.mrf.mxu0
      %v4436 = vpop.f32.mrf.mxu0
      %v4437 = vadd.f32 0.0, %v4436
      %v4438 = vpop.f32.mrf.mxu0
      %4439 = vdwg.mxu0
      %v4440 = vadd.f32 %v3965, %v4378
      %v4441 = vadd.f32 %v3968, %v4381
      %v4442 = vadd.f32 %v3973, %v4386
      %v4443 = vadd.f32 %v3976, %v4389
      %v4444 = vadd.f32 %v3981, %v4394
      %v4445 = vadd.f32 %v3984, %v4397
      %v4446 = vadd.f32 %v3989, %v4402
      %v4447 = vadd.f32 %v3992, %v4405
      %v4448 = vadd.f32 %v3997, %v4410
      %v4449 = vadd.f32 %v4000, %v4413
      %v4450 = vadd.f32 %v4005, %v4418
      %v4451 = vadd.f32 %v4008, %v4421
      %v4452 = vadd.f32 %v4013, %v4426
      %v4453 = vadd.f32 %v4016, %v4429
      %v4454 = vadd.f32 %v4021, %v4434
      %v4455 = vadd.f32 %v4024, %v4437
      %s4456 = scalar_lea.vmem [#allocation2], 288
      %v4457 = vld [vmem:[%s4456] sm:$0xf]
      %v4458 = vld [vmem:[%s4456 + $0x4] sm:$0xf]
      %v4459 = vld [vmem:[%s4456 + $0x10] sm:$0xf]
      %v4460 = vld [vmem:[%s4456 + $0x14] sm:$0xf]
      %v4461 = vld [vmem:[%s4456 + $0x20] sm:$0xf]
      %v4462 = vld [vmem:[%s4456 + $0x24] sm:$0xf]
      %v4463 = vld [vmem:[%s4456 + $0x30] sm:$0xf]
      %v4464 = vld [vmem:[%s4456 + $0x34] sm:$0xf]
      %v4465 = vld [vmem:[%s4456 + $0x40] sm:$0xf]
      %v4466 = vld [vmem:[%s4456 + $0x44] sm:$0xf]
      %v4467 = vld [vmem:[%s4456 + $0x50] sm:$0xf]
      %v4468 = vld [vmem:[%s4456 + $0x54] sm:$0xf]
      %v4469 = vld [vmem:[%s4456 + $0x60] sm:$0xf]
      %v4470 = vld [vmem:[%s4456 + $0x64] sm:$0xf]
      %v4471 = vld [vmem:[%s4456 + $0x70] sm:$0xf]
      %v4472 = vld [vmem:[%s4456 + $0x74] sm:$0xf]
      %s4473 = scalar_lea.vmem %s4, 192
      %v4474 = vld [vmem:[%s4473] sm:$0xf]
      %v4475 = vld [vmem:[%s4473 + $0x4] sm:$0xf]
      %v4476 = vld [vmem:[%s4473 + $0x8] sm:$0xf]
      %v4477 = vld [vmem:[%s4473 + $0xc] sm:$0xf]
      %v4478 = vld [vmem:[%s4473 + $0x10] sm:$0xf]
      %v4479 = vld [vmem:[%s4473 + $0x14] sm:$0xf]
      %v4480 = vld [vmem:[%s4473 + $0x18] sm:$0xf]
      %v4481 = vld [vmem:[%s4473 + $0x1c] sm:$0xf]
      %v4482 = vld [vmem:[%s4473 + $0x20] sm:$0xf]
      %v4483 = vld [vmem:[%s4473 + $0x24] sm:$0xf]
      %v4484 = vld [vmem:[%s4473 + $0x28] sm:$0xf]
      %v4485 = vld [vmem:[%s4473 + $0x2c] sm:$0xf]
      %v4486 = vld [vmem:[%s4473 + $0x30] sm:$0xf]
      %v4487 = vld [vmem:[%s4473 + $0x34] sm:$0xf]
      %v4488 = vld [vmem:[%s4473 + $0x38] sm:$0xf]
      %v4489 = vld [vmem:[%s4473 + $0x3c] sm:$0xf]
      %v4506 = vunpack.c.l.b16 %v4457
      %v4507 = vunpack.c.l.b16 %v4458
      %v4508 = vunpack.c.l.b16 %v4459
      %v4509 = vunpack.c.l.b16 %v4460
      %v4510 = vunpack.c.l.b16 %v4461
      %v4511 = vunpack.c.l.b16 %v4462
      %v4512 = vunpack.c.l.b16 %v4463
      %v4513 = vunpack.c.l.b16 %v4464
      %v4514 = vunpack.c.l.b16 %v4465
      %v4515 = vunpack.c.l.b16 %v4466
      %v4516 = vunpack.c.l.b16 %v4467
      %v4517 = vunpack.c.l.b16 %v4468
      %v4518 = vunpack.c.l.b16 %v4469
      %v4519 = vunpack.c.l.b16 %v4470
      %v4520 = vunpack.c.l.b16 %v4471
      %v4521 = vunpack.c.l.b16 %v4472
      %v4522 = vpack.c.b16 %v4507, %v4506
      %v4523 = vpack.c.b16 %v4509, %v4508
      %v4524 = vpack.c.b16 %v4511, %v4510
      %v4525 = vpack.c.b16 %v4513, %v4512
      %v4526 = vpack.c.b16 %v4515, %v4514
      %v4527 = vpack.c.b16 %v4517, %v4516
      %v4528 = vpack.c.b16 %v4519, %v4518
      %v4529 = vpack.c.b16 %v4521, %v4520
      %v4554 = vunpack.c.l.b16 %v4474
      %v4555 = vunpack.c.l.b16 %v4475
      %v4556 = vunpack.c.l.b16 %v4476
      %v4557 = vunpack.c.l.b16 %v4477
      %v4558 = vunpack.c.l.b16 %v4478
      %v4559 = vunpack.c.l.b16 %v4479
      %v4560 = vunpack.c.l.b16 %v4480
      %v4561 = vunpack.c.l.b16 %v4481
      %v4562 = vunpack.c.l.b16 %v4482
      %v4563 = vunpack.c.l.b16 %v4483
      %v4564 = vunpack.c.l.b16 %v4484
      %v4565 = vunpack.c.l.b16 %v4485
      %v4566 = vunpack.c.l.b16 %v4486
      %v4567 = vunpack.c.l.b16 %v4487
      %v4568 = vunpack.c.l.b16 %v4488
      %v4569 = vunpack.c.l.b16 %v4489
      %v4570 = vpack.c.b16 %v4555, %v4554
      %v4571 = vpack.c.b16 %v4557, %v4556
      %v4572 = vpack.c.b16 %v4559, %v4558
      %v4573 = vpack.c.b16 %v4561, %v4560
      %v4574 = vpack.c.b16 %v4563, %v4562
      %v4575 = vpack.c.b16 %v4565, %v4564
      %v4576 = vpack.c.b16 %v4567, %v4566
      %v4577 = vpack.c.b16 %v4569, %v4568
      %4586 = vmatprep.subr.bf16.mxu0 0
      %4587 = vmatpush1.bf16.msra.mxu0 %v4577
      %4588 = vmatprep.subr.bf16.mxu0 0
      %4589 = vmatpush1.bf16.msra.mxu0 %v4576
      %4590 = vmatprep.subr.bf16.mxu0 0
      %4591 = vmatpush1.bf16.msra.mxu0 %v4575
      %4592 = vmatprep.subr.bf16.mxu0 0
      %4593 = vmatpush1.bf16.msra.mxu0 %v4574
      %4594 = vmatprep.subr.bf16.mxu0 0
      %4595 = vmatpush1.bf16.msra.mxu0 %v4573
      %4596 = vmatprep.subr.bf16.mxu0 0
      %4597 = vmatpush1.bf16.msra.mxu0 %v4572
      %4598 = vmatprep.subr.bf16.mxu0 0
      %4599 = vmatpush1.bf16.msra.mxu0 %v4571
      %4600 = vmatprep.subr.bf16.mxu0 0
      %4601 = vmatpush1.bf16.msra.mxu0 %v4570
      %4602 = vmatprep.subr.bf16.mxu0 0
      %4603 = vmatpush2.bf16.msra.mxu0 0
      %4604 = vmatprep.subr.bf16.mxu0 0
      %4605 = vmatpush2.bf16.msra.mxu0 0
      %4606 = vmatprep.subr.bf16.mxu0 0
      %4607 = vmatpush2.bf16.msra.mxu0 0
      %4608 = vmatprep.subr.bf16.mxu0 0
      %4609 = vmatpush2.bf16.msra.mxu0 0
      %4610 = vmatprep.subr.bf16.mxu0 0
      %4611 = vmatpush2.bf16.msra.mxu0 0
      %4612 = vmatprep.subr.bf16.mxu0 0
      %4613 = vmatpush2.bf16.msra.mxu0 0
      %4614 = vmatprep.subr.bf16.mxu0 0
      %4615 = vmatpush2.bf16.msra.mxu0 0
      %4616 = vmatprep.subr.bf16.mxu0 0
      %4617 = vmatpush2.bf16.msra.mxu0 0
      %4618 = vmatprep.mubr.bf16.mxu0 0
      %4619 = vmatmul.mubr.bf16.gmra.mxu0 %v4522
      %v4620 = vpop.f32.mrf.mxu0
      %v4621 = vadd.f32 0.0, %v4620
      %v4622 = vpop.f32.mrf.mxu0
      %v4623 = vpop.f32.mrf.mxu0
      %v4624 = vadd.f32 0.0, %v4623
      %v4625 = vpop.f32.mrf.mxu0
      %4626 = vmatprep.mubr.bf16.mxu0 0
      %4627 = vmatmul.mubr.bf16.gmra.mxu0 %v4523
      %v4628 = vpop.f32.mrf.mxu0
      %v4629 = vadd.f32 0.0, %v4628
      %v4630 = vpop.f32.mrf.mxu0
      %v4631 = vpop.f32.mrf.mxu0
      %v4632 = vadd.f32 0.0, %v4631
      %v4633 = vpop.f32.mrf.mxu0
      %4634 = vmatprep.mubr.bf16.mxu0 0
      %4635 = vmatmul.mubr.bf16.gmra.mxu0 %v4524
      %v4636 = vpop.f32.mrf.mxu0
      %v4637 = vadd.f32 0.0, %v4636
      %v4638 = vpop.f32.mrf.mxu0
      %v4639 = vpop.f32.mrf.mxu0
      %v4640 = vadd.f32 0.0, %v4639
      %v4641 = vpop.f32.mrf.mxu0
      %4642 = vmatprep.mubr.bf16.mxu0 0
      %4643 = vmatmul.mubr.bf16.gmra.mxu0 %v4525
      %v4644 = vpop.f32.mrf.mxu0
      %v4645 = vadd.f32 0.0, %v4644
      %v4646 = vpop.f32.mrf.mxu0
      %v4647 = vpop.f32.mrf.mxu0
      %v4648 = vadd.f32 0.0, %v4647
      %v4649 = vpop.f32.mrf.mxu0
      %4650 = vmatprep.mubr.bf16.mxu0 0
      %4651 = vmatmul.mubr.bf16.gmra.mxu0 %v4526
      %v4652 = vpop.f32.mrf.mxu0
      %v4653 = vadd.f32 0.0, %v4652
      %v4654 = vpop.f32.mrf.mxu0
      %v4655 = vpop.f32.mrf.mxu0
      %v4656 = vadd.f32 0.0, %v4655
      %v4657 = vpop.f32.mrf.mxu0
      %4658 = vmatprep.mubr.bf16.mxu0 0
      %4659 = vmatmul.mubr.bf16.gmra.mxu0 %v4527
      %v4660 = vpop.f32.mrf.mxu0
      %v4661 = vadd.f32 0.0, %v4660
      %v4662 = vpop.f32.mrf.mxu0
      %v4663 = vpop.f32.mrf.mxu0
      %v4664 = vadd.f32 0.0, %v4663
      %v4665 = vpop.f32.mrf.mxu0
      %4666 = vmatprep.mubr.bf16.mxu0 0
      %4667 = vmatmul.mubr.bf16.gmra.mxu0 %v4528
      %v4668 = vpop.f32.mrf.mxu0
      %v4669 = vadd.f32 0.0, %v4668
      %v4670 = vpop.f32.mrf.mxu0
      %v4671 = vpop.f32.mrf.mxu0
      %v4672 = vadd.f32 0.0, %v4671
      %v4673 = vpop.f32.mrf.mxu0
      %4674 = vmatprep.mubr.bf16.mxu0 0
      %4675 = vmatmul.mubr.bf16.gmra.mxu0 %v4529
      %v4676 = vpop.f32.mrf.mxu0
      %v4677 = vadd.f32 0.0, %v4676
      %v4678 = vpop.f32.mrf.mxu0
      %v4679 = vpop.f32.mrf.mxu0
      %v4680 = vadd.f32 0.0, %v4679
      %v4681 = vpop.f32.mrf.mxu0
      %4682 = vdwg.mxu0
      %v4683 = vadd.f32 %v4440, %v4621
      %v4684 = vadd.f32 %v4441, %v4624
      %v4685 = vadd.f32 %v4442, %v4629
      %v4686 = vadd.f32 %v4443, %v4632
      %v4687 = vadd.f32 %v4444, %v4637
      %v4688 = vadd.f32 %v4445, %v4640
      %v4689 = vadd.f32 %v4446, %v4645
      %v4690 = vadd.f32 %v4447, %v4648
      %v4691 = vadd.f32 %v4448, %v4653
      %v4692 = vadd.f32 %v4449, %v4656
      %v4693 = vadd.f32 %v4450, %v4661
      %v4694 = vadd.f32 %v4451, %v4664
      %v4695 = vadd.f32 %v4452, %v4669
      %v4696 = vadd.f32 %v4453, %v4672
      %v4697 = vadd.f32 %v4454, %v4677
      %v4698 = vadd.f32 %v4455, %v4680
      %s4699 = scalar_lea.vmem [#allocation2], 432
      %v4700 = vld [vmem:[%s4699] sm:$0xf]
      %v4701 = vld [vmem:[%s4699 + $0x4] sm:$0xf]
      %v4702 = vld [vmem:[%s4699 + $0x10] sm:$0xf]
      %v4703 = vld [vmem:[%s4699 + $0x14] sm:$0xf]
      %v4704 = vld [vmem:[%s4699 + $0x20] sm:$0xf]
      %v4705 = vld [vmem:[%s4699 + $0x24] sm:$0xf]
      %v4706 = vld [vmem:[%s4699 + $0x30] sm:$0xf]
      %v4707 = vld [vmem:[%s4699 + $0x34] sm:$0xf]
      %v4708 = vld [vmem:[%s4699 + $0x40] sm:$0xf]
      %v4709 = vld [vmem:[%s4699 + $0x44] sm:$0xf]
      %v4710 = vld [vmem:[%s4699 + $0x50] sm:$0xf]
      %v4711 = vld [vmem:[%s4699 + $0x54] sm:$0xf]
      %v4712 = vld [vmem:[%s4699 + $0x60] sm:$0xf]
      %v4713 = vld [vmem:[%s4699 + $0x64] sm:$0xf]
      %v4714 = vld [vmem:[%s4699 + $0x70] sm:$0xf]
      %v4715 = vld [vmem:[%s4699 + $0x74] sm:$0xf]
      %s4716 = scalar_lea.vmem %s4, 256
      %v4717 = vld [vmem:[%s4716] sm:$0xf]
      %v4718 = vld [vmem:[%s4716 + $0x4] sm:$0xf]
      %v4719 = vld [vmem:[%s4716 + $0x8] sm:$0xf]
      %v4720 = vld [vmem:[%s4716 + $0xc] sm:$0xf]
      %v4721 = vld [vmem:[%s4716 + $0x10] sm:$0xf]
      %v4722 = vld [vmem:[%s4716 + $0x14] sm:$0xf]
      %v4723 = vld [vmem:[%s4716 + $0x18] sm:$0xf]
      %v4724 = vld [vmem:[%s4716 + $0x1c] sm:$0xf]
      %v4725 = vld [vmem:[%s4716 + $0x20] sm:$0xf]
      %v4726 = vld [vmem:[%s4716 + $0x24] sm:$0xf]
      %v4727 = vld [vmem:[%s4716 + $0x28] sm:$0xf]
      %v4728 = vld [vmem:[%s4716 + $0x2c] sm:$0xf]
      %v4729 = vld [vmem:[%s4716 + $0x30] sm:$0xf]
      %v4730 = vld [vmem:[%s4716 + $0x34] sm:$0xf]
      %v4731 = vld [vmem:[%s4716 + $0x38] sm:$0xf]
      %v4732 = vld [vmem:[%s4716 + $0x3c] sm:$0xf]
      %v4749 = vunpack.c.l.b16 %v4700
      %v4750 = vunpack.c.l.b16 %v4701
      %v4751 = vunpack.c.l.b16 %v4702
      %v4752 = vunpack.c.l.b16 %v4703
      %v4753 = vunpack.c.l.b16 %v4704
      %v4754 = vunpack.c.l.b16 %v4705
      %v4755 = vunpack.c.l.b16 %v4706
      %v4756 = vunpack.c.l.b16 %v4707
      %v4757 = vunpack.c.l.b16 %v4708
      %v4758 = vunpack.c.l.b16 %v4709
      %v4759 = vunpack.c.l.b16 %v4710
      %v4760 = vunpack.c.l.b16 %v4711
      %v4761 = vunpack.c.l.b16 %v4712
      %v4762 = vunpack.c.l.b16 %v4713
      %v4763 = vunpack.c.l.b16 %v4714
      %v4764 = vunpack.c.l.b16 %v4715
      %v4765 = vpack.c.b16 %v4750, %v4749
      %v4766 = vpack.c.b16 %v4752, %v4751
      %v4767 = vpack.c.b16 %v4754, %v4753
      %v4768 = vpack.c.b16 %v4756, %v4755
      %v4769 = vpack.c.b16 %v4758, %v4757
      %v4770 = vpack.c.b16 %v4760, %v4759
      %v4771 = vpack.c.b16 %v4762, %v4761
      %v4772 = vpack.c.b16 %v4764, %v4763
      %v4797 = vunpack.c.l.b16 %v4717
      %v4798 = vunpack.c.l.b16 %v4718
      %v4799 = vunpack.c.l.b16 %v4719
      %v4800 = vunpack.c.l.b16 %v4720
      %v4801 = vunpack.c.l.b16 %v4721
      %v4802 = vunpack.c.l.b16 %v4722
      %v4803 = vunpack.c.l.b16 %v4723
      %v4804 = vunpack.c.l.b16 %v4724
      %v4805 = vunpack.c.l.b16 %v4725
      %v4806 = vunpack.c.l.b16 %v4726
      %v4807 = vunpack.c.l.b16 %v4727
      %v4808 = vunpack.c.l.b16 %v4728
      %v4809 = vunpack.c.l.b16 %v4729
      %v4810 = vunpack.c.l.b16 %v4730
      %v4811 = vunpack.c.l.b16 %v4731
      %v4812 = vunpack.c.l.b16 %v4732
      %v4813 = vpack.c.b16 %v4798, %v4797
      %v4814 = vpack.c.b16 %v4800, %v4799
      %v4815 = vpack.c.b16 %v4802, %v4801
      %v4816 = vpack.c.b16 %v4804, %v4803
      %v4817 = vpack.c.b16 %v4806, %v4805
      %v4818 = vpack.c.b16 %v4808, %v4807
      %v4819 = vpack.c.b16 %v4810, %v4809
      %v4820 = vpack.c.b16 %v4812, %v4811
      %4829 = vmatprep.subr.bf16.mxu0 0
      %4830 = vmatpush1.bf16.msra.mxu0 %v4820
      %4831 = vmatprep.subr.bf16.mxu0 0
      %4832 = vmatpush1.bf16.msra.mxu0 %v4819
      %4833 = vmatprep.subr.bf16.mxu0 0
      %4834 = vmatpush1.bf16.msra.mxu0 %v4818
      %4835 = vmatprep.subr.bf16.mxu0 0
      %4836 = vmatpush1.bf16.msra.mxu0 %v4817
      %4837 = vmatprep.subr.bf16.mxu0 0
      %4838 = vmatpush1.bf16.msra.mxu0 %v4816
      %4839 = vmatprep.subr.bf16.mxu0 0
      %4840 = vmatpush1.bf16.msra.mxu0 %v4815
      %4841 = vmatprep.subr.bf16.mxu0 0
      %4842 = vmatpush1.bf16.msra.mxu0 %v4814
      %4843 = vmatprep.subr.bf16.mxu0 0
      %4844 = vmatpush1.bf16.msra.mxu0 %v4813
      %4845 = vmatprep.subr.bf16.mxu0 0
      %4846 = vmatpush2.bf16.msra.mxu0 0
      %4847 = vmatprep.subr.bf16.mxu0 0
      %4848 = vmatpush2.bf16.msra.mxu0 0
      %4849 = vmatprep.subr.bf16.mxu0 0
      %4850 = vmatpush2.bf16.msra.mxu0 0
      %4851 = vmatprep.subr.bf16.mxu0 0
      %4852 = vmatpush2.bf16.msra.mxu0 0
      %4853 = vmatprep.subr.bf16.mxu0 0
      %4854 = vmatpush2.bf16.msra.mxu0 0
      %4855 = vmatprep.subr.bf16.mxu0 0
      %4856 = vmatpush2.bf16.msra.mxu0 0
      %4857 = vmatprep.subr.bf16.mxu0 0
      %4858 = vmatpush2.bf16.msra.mxu0 0
      %4859 = vmatprep.subr.bf16.mxu0 0
      %4860 = vmatpush2.bf16.msra.mxu0 0
      %4861 = vmatprep.mubr.bf16.mxu0 0
      %4862 = vmatmul.mubr.bf16.gmra.mxu0 %v4765
      %v4863 = vpop.f32.mrf.mxu0
      %v4864 = vadd.f32 0.0, %v4863
      %v4865 = vpop.f32.mrf.mxu0
      %v4866 = vpop.f32.mrf.mxu0
      %v4867 = vadd.f32 0.0, %v4866
      %v4868 = vpop.f32.mrf.mxu0
      %4869 = vmatprep.mubr.bf16.mxu0 0
      %4870 = vmatmul.mubr.bf16.gmra.mxu0 %v4766
      %v4871 = vpop.f32.mrf.mxu0
      %v4872 = vadd.f32 0.0, %v4871
      %v4873 = vpop.f32.mrf.mxu0
      %v4874 = vpop.f32.mrf.mxu0
      %v4875 = vadd.f32 0.0, %v4874
      %v4876 = vpop.f32.mrf.mxu0
      %4877 = vmatprep.mubr.bf16.mxu0 0
      %4878 = vmatmul.mubr.bf16.gmra.mxu0 %v4767
      %v4879 = vpop.f32.mrf.mxu0
      %v4880 = vadd.f32 0.0, %v4879
      %v4881 = vpop.f32.mrf.mxu0
      %v4882 = vpop.f32.mrf.mxu0
      %v4883 = vadd.f32 0.0, %v4882
      %v4884 = vpop.f32.mrf.mxu0
      %4885 = vmatprep.mubr.bf16.mxu0 0
      %4886 = vmatmul.mubr.bf16.gmra.mxu0 %v4768
      %v4887 = vpop.f32.mrf.mxu0
      %v4888 = vadd.f32 0.0, %v4887
      %v4889 = vpop.f32.mrf.mxu0
      %v4890 = vpop.f32.mrf.mxu0
      %v4891 = vadd.f32 0.0, %v4890
      %v4892 = vpop.f32.mrf.mxu0
      %4893 = vmatprep.mubr.bf16.mxu0 0
      %4894 = vmatmul.mubr.bf16.gmra.mxu0 %v4769
      %v4895 = vpop.f32.mrf.mxu0
      %v4896 = vadd.f32 0.0, %v4895
      %v4897 = vpop.f32.mrf.mxu0
      %v4898 = vpop.f32.mrf.mxu0
      %v4899 = vadd.f32 0.0, %v4898
      %v4900 = vpop.f32.mrf.mxu0
      %4901 = vmatprep.mubr.bf16.mxu0 0
      %4902 = vmatmul.mubr.bf16.gmra.mxu0 %v4770
      %v4903 = vpop.f32.mrf.mxu0
      %v4904 = vadd.f32 0.0, %v4903
      %v4905 = vpop.f32.mrf.mxu0
      %v4906 = vpop.f32.mrf.mxu0
      %v4907 = vadd.f32 0.0, %v4906
      %v4908 = vpop.f32.mrf.mxu0
      %4909 = vmatprep.mubr.bf16.mxu0 0
      %4910 = vmatmul.mubr.bf16.gmra.mxu0 %v4771
      %v4911 = vpop.f32.mrf.mxu0
      %v4912 = vadd.f32 0.0, %v4911
      %v4913 = vpop.f32.mrf.mxu0
      %v4914 = vpop.f32.mrf.mxu0
      %v4915 = vadd.f32 0.0, %v4914
      %v4916 = vpop.f32.mrf.mxu0
      %4917 = vmatprep.mubr.bf16.mxu0 0
      %4918 = vmatmul.mubr.bf16.gmra.mxu0 %v4772
      %v4919 = vpop.f32.mrf.mxu0
      %v4920 = vadd.f32 0.0, %v4919
      %v4921 = vpop.f32.mrf.mxu0
      %v4922 = vpop.f32.mrf.mxu0
      %v4923 = vadd.f32 0.0, %v4922
      %v4924 = vpop.f32.mrf.mxu0
      %4925 = vdwg.mxu0
      %v4926 = vadd.f32 %v4683, %v4864
      %v4927 = vadd.f32 %v4684, %v4867
      %v4928 = vadd.f32 %v4685, %v4872
      %v4929 = vadd.f32 %v4686, %v4875
      %v4930 = vadd.f32 %v4687, %v4880
      %v4931 = vadd.f32 %v4688, %v4883
      %v4932 = vadd.f32 %v4689, %v4888
      %v4933 = vadd.f32 %v4690, %v4891
      %v4934 = vadd.f32 %v4691, %v4896
      %v4935 = vadd.f32 %v4692, %v4899
      %v4936 = vadd.f32 %v4693, %v4904
      %v4937 = vadd.f32 %v4694, %v4907
      %v4938 = vadd.f32 %v4695, %v4912
      %v4939 = vadd.f32 %v4696, %v4915
      %v4940 = vadd.f32 %v4697, %v4920
      %v4941 = vadd.f32 %v4698, %v4923
      %v4942 = vld [vmem:[%s4456] sm:$0xf]
      %v4943 = vld [vmem:[%s4456 + $0x4] sm:$0xf]
      %v4944 = vld [vmem:[%s4456 + $0x8] sm:$0x1]
      %v4945 = vld [vmem:[%s4456 + $0x10] sm:$0xf]
      %v4946 = vld [vmem:[%s4456 + $0x14] sm:$0xf]
      %v4947 = vld [vmem:[%s4456 + $0x18] sm:$0x1]
      %v4948 = vld [vmem:[%s4456 + $0x20] sm:$0xf]
      %v4949 = vld [vmem:[%s4456 + $0x24] sm:$0xf]
      %v4950 = vld [vmem:[%s4456 + $0x28] sm:$0x1]
      %v4951 = vld [vmem:[%s4456 + $0x30] sm:$0xf]
      %v4952 = vld [vmem:[%s4456 + $0x34] sm:$0xf]
      %v4953 = vld [vmem:[%s4456 + $0x38] sm:$0x1]
      %v4954 = vld [vmem:[%s4456 + $0x40] sm:$0xf]
      %v4955 = vld [vmem:[%s4456 + $0x44] sm:$0xf]
      %v4956 = vld [vmem:[%s4456 + $0x48] sm:$0x1]
      %v4957 = vld [vmem:[%s4456 + $0x50] sm:$0xf]
      %v4958 = vld [vmem:[%s4456 + $0x54] sm:$0xf]
      %v4959 = vld [vmem:[%s4456 + $0x58] sm:$0x1]
      %v4960 = vld [vmem:[%s4456 + $0x60] sm:$0xf]
      %v4961 = vld [vmem:[%s4456 + $0x64] sm:$0xf]
      %v4962 = vld [vmem:[%s4456 + $0x68] sm:$0x1]
      %v4963 = vld [vmem:[%s4456 + $0x70] sm:$0xf]
      %v4964 = vld [vmem:[%s4456 + $0x74] sm:$0xf]
      %v4965 = vld [vmem:[%s4456 + $0x78] sm:$0x1]
      %v4967 = vshrl.u32 %v4942, 16
      %v4969 = vrot.slane %v4967, 4
      %v4970 = vshll.u32 %v4942, 16
      %v4972 = vrot.slane %v4970, 5
      %v4973 = vor.u32 %v4969, %v4972
      %v4974 = vrot.slane %v4973, 4
      %v4976 = vshll.u32 %v4943, 16
      %v4978 = vrot.slane %v4976, 5
      %v4979 = vsel %vm4053, %v4974, %v4978
      %v4980 = vshrl.u32 %v4943, 16
      %v4982 = vrot.slane %v4980, 4
      %v4983 = vor.u32 %v4982, %v4978
      %v4984 = vrot.slane %v4983, 4
      %v4986 = vshll.u32 %v4944, 16
      %v4988 = vrot.slane %v4986, 5
      %v4989 = vsel %vm4053, %v4984, %v4988
      %v4991 = vshrl.u32 %v4945, 16
      %v4993 = vrot.slane %v4991, 4
      %v4994 = vshll.u32 %v4945, 16
      %v4996 = vrot.slane %v4994, 5
      %v4997 = vor.u32 %v4993, %v4996
      %v4998 = vrot.slane %v4997, 4
      %v5000 = vshll.u32 %v4946, 16
      %v5002 = vrot.slane %v5000, 5
      %v5003 = vsel %vm4053, %v4998, %v5002
      %v5004 = vshrl.u32 %v4946, 16
      %v5006 = vrot.slane %v5004, 4
      %v5007 = vor.u32 %v5006, %v5002
      %v5008 = vrot.slane %v5007, 4
      %v5010 = vshll.u32 %v4947, 16
      %v5012 = vrot.slane %v5010, 5
      %v5013 = vsel %vm4053, %v5008, %v5012
      %v5015 = vshrl.u32 %v4948, 16
      %v5017 = vrot.slane %v5015, 4
      %v5018 = vshll.u32 %v4948, 16
      %v5020 = vrot.slane %v5018, 5
      %v5021 = vor.u32 %v5017, %v5020
      %v5022 = vrot.slane %v5021, 4
      %v5024 = vshll.u32 %v4949, 16
      %v5026 = vrot.slane %v5024, 5
      %v5027 = vsel %vm4053, %v5022, %v5026
      %v5028 = vshrl.u32 %v4949, 16
      %v5030 = vrot.slane %v5028, 4
      %v5031 = vor.u32 %v5030, %v5026
      %v5032 = vrot.slane %v5031, 4
      %v5034 = vshll.u32 %v4950, 16
      %v5036 = vrot.slane %v5034, 5
      %v5037 = vsel %vm4053, %v5032, %v5036
      %v5039 = vshrl.u32 %v4951, 16
      %v5041 = vrot.slane %v5039, 4
      %v5042 = vshll.u32 %v4951, 16
      %v5044 = vrot.slane %v5042, 5
      %v5045 = vor.u32 %v5041, %v5044
      %v5046 = vrot.slane %v5045, 4
      %v5048 = vshll.u32 %v4952, 16
      %v5050 = vrot.slane %v5048, 5
      %v5051 = vsel %vm4053, %v5046, %v5050
      %v5052 = vshrl.u32 %v4952, 16
      %v5054 = vrot.slane %v5052, 4
      %v5055 = vor.u32 %v5054, %v5050
      %v5056 = vrot.slane %v5055, 4
      %v5058 = vshll.u32 %v4953, 16
      %v5060 = vrot.slane %v5058, 5
      %v5061 = vsel %vm4053, %v5056, %v5060
      %v5063 = vshrl.u32 %v4954, 16
      %v5065 = vrot.slane %v5063, 4
      %v5066 = vshll.u32 %v4954, 16
      %v5068 = vrot.slane %v5066, 5
      %v5069 = vor.u32 %v5065, %v5068
      %v5070 = vrot.slane %v5069, 4
      %v5072 = vshll.u32 %v4955, 16
      %v5074 = vrot.slane %v5072, 5
      %v5075 = vsel %vm4053, %v5070, %v5074
      %v5076 = vshrl.u32 %v4955, 16
      %v5078 = vrot.slane %v5076, 4
      %v5079 = vor.u32 %v5078, %v5074
      %v5080 = vrot.slane %v5079, 4
      %v5082 = vshll.u32 %v4956, 16
      %v5084 = vrot.slane %v5082, 5
      %v5085 = vsel %vm4053, %v5080, %v5084
      %v5087 = vshrl.u32 %v4957, 16
      %v5089 = vrot.slane %v5087, 4
      %v5090 = vshll.u32 %v4957, 16
      %v5092 = vrot.slane %v5090, 5
      %v5093 = vor.u32 %v5089, %v5092
      %v5094 = vrot.slane %v5093, 4
      %v5096 = vshll.u32 %v4958, 16
      %v5098 = vrot.slane %v5096, 5
      %v5099 = vsel %vm4053, %v5094, %v5098
      %v5100 = vshrl.u32 %v4958, 16
      %v5102 = vrot.slane %v5100, 4
      %v5103 = vor.u32 %v5102, %v5098
      %v5104 = vrot.slane %v5103, 4
      %v5106 = vshll.u32 %v4959, 16
      %v5108 = vrot.slane %v5106, 5
      %v5109 = vsel %vm4053, %v5104, %v5108
      %v5111 = vshrl.u32 %v4960, 16
      %v5113 = vrot.slane %v5111, 4
      %v5114 = vshll.u32 %v4960, 16
      %v5116 = vrot.slane %v5114, 5
      %v5117 = vor.u32 %v5113, %v5116
      %v5118 = vrot.slane %v5117, 4
      %v5120 = vshll.u32 %v4961, 16
      %v5122 = vrot.slane %v5120, 5
      %v5123 = vsel %vm4053, %v5118, %v5122
      %v5124 = vshrl.u32 %v4961, 16
      %v5126 = vrot.slane %v5124, 4
      %v5127 = vor.u32 %v5126, %v5122
      %v5128 = vrot.slane %v5127, 4
      %v5130 = vshll.u32 %v4962, 16
      %v5132 = vrot.slane %v5130, 5
      %v5133 = vsel %vm4053, %v5128, %v5132
      %v5135 = vshrl.u32 %v4963, 16
      %v5137 = vrot.slane %v5135, 4
      %v5138 = vshll.u32 %v4963, 16
      %v5140 = vrot.slane %v5138, 5
      %v5141 = vor.u32 %v5137, %v5140
      %v5142 = vrot.slane %v5141, 4
      %v5144 = vshll.u32 %v4964, 16
      %v5146 = vrot.slane %v5144, 5
      %v5147 = vsel %vm4053, %v5142, %v5146
      %v5148 = vshrl.u32 %v4964, 16
      %v5150 = vrot.slane %v5148, 4
      %v5151 = vor.u32 %v5150, %v5146
      %v5152 = vrot.slane %v5151, 4
      %v5154 = vshll.u32 %v4965, 16
      %v5156 = vrot.slane %v5154, 5
      %v5157 = vsel %vm4053, %v5152, %v5156
      %s5158 = scalar_lea.vmem %s4, 320
      %v5159 = vld [vmem:[%s5158] sm:$0xf]
      %v5160 = vld [vmem:[%s5158 + $0x4] sm:$0xf]
      %v5161 = vld [vmem:[%s5158 + $0x8] sm:$0xf]
      %v5162 = vld [vmem:[%s5158 + $0xc] sm:$0xf]
      %v5163 = vld [vmem:[%s5158 + $0x10] sm:$0xf]
      %v5164 = vld [vmem:[%s5158 + $0x14] sm:$0xf]
      %v5165 = vld [vmem:[%s5158 + $0x18] sm:$0xf]
      %v5166 = vld [vmem:[%s5158 + $0x1c] sm:$0xf]
      %v5167 = vld [vmem:[%s5158 + $0x20] sm:$0xf]
      %v5168 = vld [vmem:[%s5158 + $0x24] sm:$0xf]
      %v5169 = vld [vmem:[%s5158 + $0x28] sm:$0xf]
      %v5170 = vld [vmem:[%s5158 + $0x2c] sm:$0xf]
      %v5171 = vld [vmem:[%s5158 + $0x30] sm:$0xf]
      %v5172 = vld [vmem:[%s5158 + $0x34] sm:$0xf]
      %v5173 = vld [vmem:[%s5158 + $0x38] sm:$0xf]
      %v5174 = vld [vmem:[%s5158 + $0x3c] sm:$0xf]
      %v5175 = vunpack.c.l.b16 %v4979
      %v5176 = vunpack.c.l.b16 %v4989
      %v5177 = vunpack.c.l.b16 %v5003
      %v5178 = vunpack.c.l.b16 %v5013
      %v5179 = vunpack.c.l.b16 %v5027
      %v5180 = vunpack.c.l.b16 %v5037
      %v5181 = vunpack.c.l.b16 %v5051
      %v5182 = vunpack.c.l.b16 %v5061
      %v5183 = vunpack.c.l.b16 %v5075
      %v5184 = vunpack.c.l.b16 %v5085
      %v5185 = vunpack.c.l.b16 %v5099
      %v5186 = vunpack.c.l.b16 %v5109
      %v5187 = vunpack.c.l.b16 %v5123
      %v5188 = vunpack.c.l.b16 %v5133
      %v5189 = vunpack.c.l.b16 %v5147
      %v5190 = vunpack.c.l.b16 %v5157
      %v5191 = vpack.c.b16 %v5176, %v5175
      %v5192 = vpack.c.b16 %v5178, %v5177
      %v5193 = vpack.c.b16 %v5180, %v5179
      %v5194 = vpack.c.b16 %v5182, %v5181
      %v5195 = vpack.c.b16 %v5184, %v5183
      %v5196 = vpack.c.b16 %v5186, %v5185
      %v5197 = vpack.c.b16 %v5188, %v5187
      %v5198 = vpack.c.b16 %v5190, %v5189
      %v5223 = vunpack.c.l.b16 %v5159
      %v5224 = vunpack.c.l.b16 %v5160
      %v5225 = vunpack.c.l.b16 %v5161
      %v5226 = vunpack.c.l.b16 %v5162
      %v5227 = vunpack.c.l.b16 %v5163
      %v5228 = vunpack.c.l.b16 %v5164
      %v5229 = vunpack.c.l.b16 %v5165
      %v5230 = vunpack.c.l.b16 %v5166
      %v5231 = vunpack.c.l.b16 %v5167
      %v5232 = vunpack.c.l.b16 %v5168
      %v5233 = vunpack.c.l.b16 %v5169
      %v5234 = vunpack.c.l.b16 %v5170
      %v5235 = vunpack.c.l.b16 %v5171
      %v5236 = vunpack.c.l.b16 %v5172
      %v5237 = vunpack.c.l.b16 %v5173
      %v5238 = vunpack.c.l.b16 %v5174
      %v5239 = vpack.c.b16 %v5224, %v5223
      %v5240 = vpack.c.b16 %v5226, %v5225
      %v5241 = vpack.c.b16 %v5228, %v5227
      %v5242 = vpack.c.b16 %v5230, %v5229
      %v5243 = vpack.c.b16 %v5232, %v5231
      %v5244 = vpack.c.b16 %v5234, %v5233
      %v5245 = vpack.c.b16 %v5236, %v5235
      %v5246 = vpack.c.b16 %v5238, %v5237
      %5255 = vmatprep.subr.bf16.mxu0 0
      %5256 = vmatpush1.bf16.msra.mxu0 %v5246
      %5257 = vmatprep.subr.bf16.mxu0 0
      %5258 = vmatpush1.bf16.msra.mxu0 %v5245
      %5259 = vmatprep.subr.bf16.mxu0 0
      %5260 = vmatpush1.bf16.msra.mxu0 %v5244
      %5261 = vmatprep.subr.bf16.mxu0 0
      %5262 = vmatpush1.bf16.msra.mxu0 %v5243
      %5263 = vmatprep.subr.bf16.mxu0 0
      %5264 = vmatpush1.bf16.msra.mxu0 %v5242
      %5265 = vmatprep.subr.bf16.mxu0 0
      %5266 = vmatpush1.bf16.msra.mxu0 %v5241
      %5267 = vmatprep.subr.bf16.mxu0 0
      %5268 = vmatpush1.bf16.msra.mxu0 %v5240
      %5269 = vmatprep.subr.bf16.mxu0 0
      %5270 = vmatpush1.bf16.msra.mxu0 %v5239
      %5271 = vmatprep.subr.bf16.mxu0 0
      %5272 = vmatpush2.bf16.msra.mxu0 0
      %5273 = vmatprep.subr.bf16.mxu0 0
      %5274 = vmatpush2.bf16.msra.mxu0 0
      %5275 = vmatprep.subr.bf16.mxu0 0
      %5276 = vmatpush2.bf16.msra.mxu0 0
      %5277 = vmatprep.subr.bf16.mxu0 0
      %5278 = vmatpush2.bf16.msra.mxu0 0
      %5279 = vmatprep.subr.bf16.mxu0 0
      %5280 = vmatpush2.bf16.msra.mxu0 0
      %5281 = vmatprep.subr.bf16.mxu0 0
      %5282 = vmatpush2.bf16.msra.mxu0 0
      %5283 = vmatprep.subr.bf16.mxu0 0
      %5284 = vmatpush2.bf16.msra.mxu0 0
      %5285 = vmatprep.subr.bf16.mxu0 0
      %5286 = vmatpush2.bf16.msra.mxu0 0
      %5287 = vmatprep.mubr.bf16.mxu0 0
      %5288 = vmatmul.mubr.bf16.gmra.mxu0 %v5191
      %v5289 = vpop.f32.mrf.mxu0
      %v5290 = vadd.f32 0.0, %v5289
      %v5291 = vpop.f32.mrf.mxu0
      %v5292 = vpop.f32.mrf.mxu0
      %v5293 = vadd.f32 0.0, %v5292
      %v5294 = vpop.f32.mrf.mxu0
      %5295 = vmatprep.mubr.bf16.mxu0 0
      %5296 = vmatmul.mubr.bf16.gmra.mxu0 %v5192
      %v5297 = vpop.f32.mrf.mxu0
      %v5298 = vadd.f32 0.0, %v5297
      %v5299 = vpop.f32.mrf.mxu0
      %v5300 = vpop.f32.mrf.mxu0
      %v5301 = vadd.f32 0.0, %v5300
      %v5302 = vpop.f32.mrf.mxu0
      %5303 = vmatprep.mubr.bf16.mxu0 0
      %5304 = vmatmul.mubr.bf16.gmra.mxu0 %v5193
      %v5305 = vpop.f32.mrf.mxu0
      %v5306 = vadd.f32 0.0, %v5305
      %v5307 = vpop.f32.mrf.mxu0
      %v5308 = vpop.f32.mrf.mxu0
      %v5309 = vadd.f32 0.0, %v5308
      %v5310 = vpop.f32.mrf.mxu0
      %5311 = vmatprep.mubr.bf16.mxu0 0
      %5312 = vmatmul.mubr.bf16.gmra.mxu0 %v5194
      %v5313 = vpop.f32.mrf.mxu0
      %v5314 = vadd.f32 0.0, %v5313
      %v5315 = vpop.f32.mrf.mxu0
      %v5316 = vpop.f32.mrf.mxu0
      %v5317 = vadd.f32 0.0, %v5316
      %v5318 = vpop.f32.mrf.mxu0
      %5319 = vmatprep.mubr.bf16.mxu0 0
      %5320 = vmatmul.mubr.bf16.gmra.mxu0 %v5195
      %v5321 = vpop.f32.mrf.mxu0
      %v5322 = vadd.f32 0.0, %v5321
      %v5323 = vpop.f32.mrf.mxu0
      %v5324 = vpop.f32.mrf.mxu0
      %v5325 = vadd.f32 0.0, %v5324
      %v5326 = vpop.f32.mrf.mxu0
      %5327 = vmatprep.mubr.bf16.mxu0 0
      %5328 = vmatmul.mubr.bf16.gmra.mxu0 %v5196
      %v5329 = vpop.f32.mrf.mxu0
      %v5330 = vadd.f32 0.0, %v5329
      %v5331 = vpop.f32.mrf.mxu0
      %v5332 = vpop.f32.mrf.mxu0
      %v5333 = vadd.f32 0.0, %v5332
      %v5334 = vpop.f32.mrf.mxu0
      %5335 = vmatprep.mubr.bf16.mxu0 0
      %5336 = vmatmul.mubr.bf16.gmra.mxu0 %v5197
      %v5337 = vpop.f32.mrf.mxu0
      %v5338 = vadd.f32 0.0, %v5337
      %v5339 = vpop.f32.mrf.mxu0
      %v5340 = vpop.f32.mrf.mxu0
      %v5341 = vadd.f32 0.0, %v5340
      %v5342 = vpop.f32.mrf.mxu0
      %5343 = vmatprep.mubr.bf16.mxu0 0
      %5344 = vmatmul.mubr.bf16.gmra.mxu0 %v5198
      %v5345 = vpop.f32.mrf.mxu0
      %v5346 = vadd.f32 0.0, %v5345
      %v5347 = vpop.f32.mrf.mxu0
      %v5348 = vpop.f32.mrf.mxu0
      %v5349 = vadd.f32 0.0, %v5348
      %v5350 = vpop.f32.mrf.mxu0
      %5351 = vdwg.mxu0
      %v5352 = vadd.f32 %v4926, %v5290
      %v5353 = vadd.f32 %v4927, %v5293
      %v5354 = vadd.f32 %v4928, %v5298
      %v5355 = vadd.f32 %v4929, %v5301
      %v5356 = vadd.f32 %v4930, %v5306
      %v5357 = vadd.f32 %v4931, %v5309
      %v5358 = vadd.f32 %v4932, %v5314
      %v5359 = vadd.f32 %v4933, %v5317
      %v5360 = vadd.f32 %v4934, %v5322
      %v5361 = vadd.f32 %v4935, %v5325
      %v5362 = vadd.f32 %v4936, %v5330
      %v5363 = vadd.f32 %v4937, %v5333
      %v5364 = vadd.f32 %v4938, %v5338
      %v5365 = vadd.f32 %v4939, %v5341
      %v5366 = vadd.f32 %v4940, %v5346
      %v5367 = vadd.f32 %v4941, %v5349
      %s5368 = scalar_lea.vmem [#allocation2], 16
      %v5369 = vld [vmem:[%s5368] sm:$0xf]
      %v5370 = vld [vmem:[%s5368 + $0x4] sm:$0xf]
      %v5371 = vld [vmem:[%s5368 + $0x10] sm:$0xf]
      %v5372 = vld [vmem:[%s5368 + $0x14] sm:$0xf]
      %v5373 = vld [vmem:[%s5368 + $0x20] sm:$0xf]
      %v5374 = vld [vmem:[%s5368 + $0x24] sm:$0xf]
      %v5375 = vld [vmem:[%s5368 + $0x30] sm:$0xf]
      %v5376 = vld [vmem:[%s5368 + $0x34] sm:$0xf]
      %v5377 = vld [vmem:[%s5368 + $0x40] sm:$0xf]
      %v5378 = vld [vmem:[%s5368 + $0x44] sm:$0xf]
      %v5379 = vld [vmem:[%s5368 + $0x50] sm:$0xf]
      %v5380 = vld [vmem:[%s5368 + $0x54] sm:$0xf]
      %v5381 = vld [vmem:[%s5368 + $0x60] sm:$0xf]
      %v5382 = vld [vmem:[%s5368 + $0x64] sm:$0xf]
      %v5383 = vld [vmem:[%s5368 + $0x70] sm:$0xf]
      %v5384 = vld [vmem:[%s5368 + $0x74] sm:$0xf]
      %s5385 = scalar_lea.vmem %s4, 384
      %v5386 = vld [vmem:[%s5385] sm:$0xf]
      %v5387 = vld [vmem:[%s5385 + $0x4] sm:$0xf]
      %v5388 = vld [vmem:[%s5385 + $0x8] sm:$0xf]
      %v5389 = vld [vmem:[%s5385 + $0xc] sm:$0xf]
      %v5390 = vld [vmem:[%s5385 + $0x10] sm:$0xf]
      %v5391 = vld [vmem:[%s5385 + $0x14] sm:$0xf]
      %v5392 = vld [vmem:[%s5385 + $0x18] sm:$0xf]
      %v5393 = vld [vmem:[%s5385 + $0x1c] sm:$0xf]
      %v5394 = vld [vmem:[%s5385 + $0x20] sm:$0xf]
      %v5395 = vld [vmem:[%s5385 + $0x24] sm:$0xf]
      %v5396 = vld [vmem:[%s5385 + $0x28] sm:$0xf]
      %v5397 = vld [vmem:[%s5385 + $0x2c] sm:$0xf]
      %v5398 = vld [vmem:[%s5385 + $0x30] sm:$0xf]
      %v5399 = vld [vmem:[%s5385 + $0x34] sm:$0xf]
      %v5400 = vld [vmem:[%s5385 + $0x38] sm:$0xf]
      %v5401 = vld [vmem:[%s5385 + $0x3c] sm:$0xf]
      %v5418 = vunpack.c.l.b16 %v5369
      %v5419 = vunpack.c.l.b16 %v5370
      %v5420 = vunpack.c.l.b16 %v5371
      %v5421 = vunpack.c.l.b16 %v5372
      %v5422 = vunpack.c.l.b16 %v5373
      %v5423 = vunpack.c.l.b16 %v5374
      %v5424 = vunpack.c.l.b16 %v5375
      %v5425 = vunpack.c.l.b16 %v5376
      %v5426 = vunpack.c.l.b16 %v5377
      %v5427 = vunpack.c.l.b16 %v5378
      %v5428 = vunpack.c.l.b16 %v5379
      %v5429 = vunpack.c.l.b16 %v5380
      %v5430 = vunpack.c.l.b16 %v5381
      %v5431 = vunpack.c.l.b16 %v5382
      %v5432 = vunpack.c.l.b16 %v5383
      %v5433 = vunpack.c.l.b16 %v5384
      %v5434 = vpack.c.b16 %v5419, %v5418
      %v5435 = vpack.c.b16 %v5421, %v5420
      %v5436 = vpack.c.b16 %v5423, %v5422
      %v5437 = vpack.c.b16 %v5425, %v5424
      %v5438 = vpack.c.b16 %v5427, %v5426
      %v5439 = vpack.c.b16 %v5429, %v5428
      %v5440 = vpack.c.b16 %v5431, %v5430
      %v5441 = vpack.c.b16 %v5433, %v5432
      %v5466 = vunpack.c.l.b16 %v5386
      %v5467 = vunpack.c.l.b16 %v5387
      %v5468 = vunpack.c.l.b16 %v5388
      %v5469 = vunpack.c.l.b16 %v5389
      %v5470 = vunpack.c.l.b16 %v5390
      %v5471 = vunpack.c.l.b16 %v5391
      %v5472 = vunpack.c.l.b16 %v5392
      %v5473 = vunpack.c.l.b16 %v5393
      %v5474 = vunpack.c.l.b16 %v5394
      %v5475 = vunpack.c.l.b16 %v5395
      %v5476 = vunpack.c.l.b16 %v5396
      %v5477 = vunpack.c.l.b16 %v5397
      %v5478 = vunpack.c.l.b16 %v5398
      %v5479 = vunpack.c.l.b16 %v5399
      %v5480 = vunpack.c.l.b16 %v5400
      %v5481 = vunpack.c.l.b16 %v5401
      %v5482 = vpack.c.b16 %v5467, %v5466
      %v5483 = vpack.c.b16 %v5469, %v5468
      %v5484 = vpack.c.b16 %v5471, %v5470
      %v5485 = vpack.c.b16 %v5473, %v5472
      %v5486 = vpack.c.b16 %v5475, %v5474
      %v5487 = vpack.c.b16 %v5477, %v5476
      %v5488 = vpack.c.b16 %v5479, %v5478
      %v5489 = vpack.c.b16 %v5481, %v5480
      %5498 = vmatprep.subr.bf16.mxu0 0
      %5499 = vmatpush1.bf16.msra.mxu0 %v5489
      %5500 = vmatprep.subr.bf16.mxu0 0
      %5501 = vmatpush1.bf16.msra.mxu0 %v5488
      %5502 = vmatprep.subr.bf16.mxu0 0
      %5503 = vmatpush1.bf16.msra.mxu0 %v5487
      %5504 = vmatprep.subr.bf16.mxu0 0
      %5505 = vmatpush1.bf16.msra.mxu0 %v5486
      %5506 = vmatprep.subr.bf16.mxu0 0
      %5507 = vmatpush1.bf16.msra.mxu0 %v5485
      %5508 = vmatprep.subr.bf16.mxu0 0
      %5509 = vmatpush1.bf16.msra.mxu0 %v5484
      %5510 = vmatprep.subr.bf16.mxu0 0
      %5511 = vmatpush1.bf16.msra.mxu0 %v5483
      %5512 = vmatprep.subr.bf16.mxu0 0
      %5513 = vmatpush1.bf16.msra.mxu0 %v5482
      %5514 = vmatprep.subr.bf16.mxu0 0
      %5515 = vmatpush2.bf16.msra.mxu0 0
      %5516 = vmatprep.subr.bf16.mxu0 0
      %5517 = vmatpush2.bf16.msra.mxu0 0
      %5518 = vmatprep.subr.bf16.mxu0 0
      %5519 = vmatpush2.bf16.msra.mxu0 0
      %5520 = vmatprep.subr.bf16.mxu0 0
      %5521 = vmatpush2.bf16.msra.mxu0 0
      %5522 = vmatprep.subr.bf16.mxu0 0
      %5523 = vmatpush2.bf16.msra.mxu0 0
      %5524 = vmatprep.subr.bf16.mxu0 0
      %5525 = vmatpush2.bf16.msra.mxu0 0
      %5526 = vmatprep.subr.bf16.mxu0 0
      %5527 = vmatpush2.bf16.msra.mxu0 0
      %5528 = vmatprep.subr.bf16.mxu0 0
      %5529 = vmatpush2.bf16.msra.mxu0 0
      %5530 = vmatprep.mubr.bf16.mxu0 0
      %5531 = vmatmul.mubr.bf16.gmra.mxu0 %v5434
      %v5532 = vpop.f32.mrf.mxu0
      %v5533 = vadd.f32 0.0, %v5532
      %v5534 = vpop.f32.mrf.mxu0
      %v5535 = vpop.f32.mrf.mxu0
      %v5536 = vadd.f32 0.0, %v5535
      %v5537 = vpop.f32.mrf.mxu0
      %5538 = vmatprep.mubr.bf16.mxu0 0
      %5539 = vmatmul.mubr.bf16.gmra.mxu0 %v5435
      %v5540 = vpop.f32.mrf.mxu0
      %v5541 = vadd.f32 0.0, %v5540
      %v5542 = vpop.f32.mrf.mxu0
      %v5543 = vpop.f32.mrf.mxu0
      %v5544 = vadd.f32 0.0, %v5543
      %v5545 = vpop.f32.mrf.mxu0
      %5546 = vmatprep.mubr.bf16.mxu0 0
      %5547 = vmatmul.mubr.bf16.gmra.mxu0 %v5436
      %v5548 = vpop.f32.mrf.mxu0
      %v5549 = vadd.f32 0.0, %v5548
      %v5550 = vpop.f32.mrf.mxu0
      %v5551 = vpop.f32.mrf.mxu0
      %v5552 = vadd.f32 0.0, %v5551
      %v5553 = vpop.f32.mrf.mxu0
      %5554 = vmatprep.mubr.bf16.mxu0 0
      %5555 = vmatmul.mubr.bf16.gmra.mxu0 %v5437
      %v5556 = vpop.f32.mrf.mxu0
      %v5557 = vadd.f32 0.0, %v5556
      %v5558 = vpop.f32.mrf.mxu0
      %v5559 = vpop.f32.mrf.mxu0
      %v5560 = vadd.f32 0.0, %v5559
      %v5561 = vpop.f32.mrf.mxu0
      %5562 = vmatprep.mubr.bf16.mxu0 0
      %5563 = vmatmul.mubr.bf16.gmra.mxu0 %v5438
      %v5564 = vpop.f32.mrf.mxu0
      %v5565 = vadd.f32 0.0, %v5564
      %v5566 = vpop.f32.mrf.mxu0
      %v5567 = vpop.f32.mrf.mxu0
      %v5568 = vadd.f32 0.0, %v5567
      %v5569 = vpop.f32.mrf.mxu0
      %5570 = vmatprep.mubr.bf16.mxu0 0
      %5571 = vmatmul.mubr.bf16.gmra.mxu0 %v5439
      %v5572 = vpop.f32.mrf.mxu0
      %v5573 = vadd.f32 0.0, %v5572
      %v5574 = vpop.f32.mrf.mxu0
      %v5575 = vpop.f32.mrf.mxu0
      %v5576 = vadd.f32 0.0, %v5575
      %v5577 = vpop.f32.mrf.mxu0
      %5578 = vmatprep.mubr.bf16.mxu0 0
      %5579 = vmatmul.mubr.bf16.gmra.mxu0 %v5440
      %v5580 = vpop.f32.mrf.mxu0
      %v5581 = vadd.f32 0.0, %v5580
      %v5582 = vpop.f32.mrf.mxu0
      %v5583 = vpop.f32.mrf.mxu0
      %v5584 = vadd.f32 0.0, %v5583
      %v5585 = vpop.f32.mrf.mxu0
      %5586 = vmatprep.mubr.bf16.mxu0 0
      %5587 = vmatmul.mubr.bf16.gmra.mxu0 %v5441
      %v5588 = vpop.f32.mrf.mxu0
      %v5589 = vadd.f32 0.0, %v5588
      %v5590 = vpop.f32.mrf.mxu0
      %v5591 = vpop.f32.mrf.mxu0
      %v5592 = vadd.f32 0.0, %v5591
      %v5593 = vpop.f32.mrf.mxu0
      %5594 = vdwg.mxu0
      %v5595 = vadd.f32 %v5352, %v5533
      %v5596 = vadd.f32 %v5353, %v5536
      %v5597 = vadd.f32 %v5354, %v5541
      %v5598 = vadd.f32 %v5355, %v5544
      %v5599 = vadd.f32 %v5356, %v5549
      %v5600 = vadd.f32 %v5357, %v5552
      %v5601 = vadd.f32 %v5358, %v5557
      %v5602 = vadd.f32 %v5359, %v5560
      %v5603 = vadd.f32 %v5360, %v5565
      %v5604 = vadd.f32 %v5361, %v5568
      %v5605 = vadd.f32 %v5362, %v5573
      %v5606 = vadd.f32 %v5363, %v5576
      %v5607 = vadd.f32 %v5364, %v5581
      %v5608 = vadd.f32 %v5365, %v5584
      %v5609 = vadd.f32 %v5366, %v5589
      %v5610 = vadd.f32 %v5367, %v5592
      %s5611 = scalar_lea.vmem [#allocation2], 160
      %v5612 = vld [vmem:[%s5611] sm:$0xf]
      %v5613 = vld [vmem:[%s5611 + $0x4] sm:$0xf]
      %v5614 = vld [vmem:[%s5611 + $0x10] sm:$0xf]
      %v5615 = vld [vmem:[%s5611 + $0x14] sm:$0xf]
      %v5616 = vld [vmem:[%s5611 + $0x20] sm:$0xf]
      %v5617 = vld [vmem:[%s5611 + $0x24] sm:$0xf]
      %v5618 = vld [vmem:[%s5611 + $0x30] sm:$0xf]
      %v5619 = vld [vmem:[%s5611 + $0x34] sm:$0xf]
      %v5620 = vld [vmem:[%s5611 + $0x40] sm:$0xf]
      %v5621 = vld [vmem:[%s5611 + $0x44] sm:$0xf]
      %v5622 = vld [vmem:[%s5611 + $0x50] sm:$0xf]
      %v5623 = vld [vmem:[%s5611 + $0x54] sm:$0xf]
      %v5624 = vld [vmem:[%s5611 + $0x60] sm:$0xf]
      %v5625 = vld [vmem:[%s5611 + $0x64] sm:$0xf]
      %v5626 = vld [vmem:[%s5611 + $0x70] sm:$0xf]
      %v5627 = vld [vmem:[%s5611 + $0x74] sm:$0xf]
      %s5628 = scalar_lea.vmem %s4, 448
      %v5629 = vld [vmem:[%s5628] sm:$0xf]
      %v5630 = vld [vmem:[%s5628 + $0x4] sm:$0xf]
      %v5631 = vld [vmem:[%s5628 + $0x8] sm:$0xf]
      %v5632 = vld [vmem:[%s5628 + $0xc] sm:$0xf]
      %v5633 = vld [vmem:[%s5628 + $0x10] sm:$0xf]
      %v5634 = vld [vmem:[%s5628 + $0x14] sm:$0xf]
      %v5635 = vld [vmem:[%s5628 + $0x18] sm:$0xf]
      %v5636 = vld [vmem:[%s5628 + $0x1c] sm:$0xf]
      %v5637 = vld [vmem:[%s5628 + $0x20] sm:$0xf]
      %v5638 = vld [vmem:[%s5628 + $0x24] sm:$0xf]
      %v5639 = vld [vmem:[%s5628 + $0x28] sm:$0xf]
      %v5640 = vld [vmem:[%s5628 + $0x2c] sm:$0xf]
      %v5641 = vld [vmem:[%s5628 + $0x30] sm:$0xf]
      %v5642 = vld [vmem:[%s5628 + $0x34] sm:$0xf]
      %v5643 = vld [vmem:[%s5628 + $0x38] sm:$0xf]
      %v5644 = vld [vmem:[%s5628 + $0x3c] sm:$0xf]
      %v5661 = vunpack.c.l.b16 %v5612
      %v5662 = vunpack.c.l.b16 %v5613
      %v5663 = vunpack.c.l.b16 %v5614
      %v5664 = vunpack.c.l.b16 %v5615
      %v5665 = vunpack.c.l.b16 %v5616
      %v5666 = vunpack.c.l.b16 %v5617
      %v5667 = vunpack.c.l.b16 %v5618
      %v5668 = vunpack.c.l.b16 %v5619
      %v5669 = vunpack.c.l.b16 %v5620
      %v5670 = vunpack.c.l.b16 %v5621
      %v5671 = vunpack.c.l.b16 %v5622
      %v5672 = vunpack.c.l.b16 %v5623
      %v5673 = vunpack.c.l.b16 %v5624
      %v5674 = vunpack.c.l.b16 %v5625
      %v5675 = vunpack.c.l.b16 %v5626
      %v5676 = vunpack.c.l.b16 %v5627
      %v5677 = vpack.c.b16 %v5662, %v5661
      %v5678 = vpack.c.b16 %v5664, %v5663
      %v5679 = vpack.c.b16 %v5666, %v5665
      %v5680 = vpack.c.b16 %v5668, %v5667
      %v5681 = vpack.c.b16 %v5670, %v5669
      %v5682 = vpack.c.b16 %v5672, %v5671
      %v5683 = vpack.c.b16 %v5674, %v5673
      %v5684 = vpack.c.b16 %v5676, %v5675
      %v5709 = vunpack.c.l.b16 %v5629
      %v5710 = vunpack.c.l.b16 %v5630
      %v5711 = vunpack.c.l.b16 %v5631
      %v5712 = vunpack.c.l.b16 %v5632
      %v5713 = vunpack.c.l.b16 %v5633
      %v5714 = vunpack.c.l.b16 %v5634
      %v5715 = vunpack.c.l.b16 %v5635
      %v5716 = vunpack.c.l.b16 %v5636
      %v5717 = vunpack.c.l.b16 %v5637
      %v5718 = vunpack.c.l.b16 %v5638
      %v5719 = vunpack.c.l.b16 %v5639
      %v5720 = vunpack.c.l.b16 %v5640
      %v5721 = vunpack.c.l.b16 %v5641
      %v5722 = vunpack.c.l.b16 %v5642
      %v5723 = vunpack.c.l.b16 %v5643
      %v5724 = vunpack.c.l.b16 %v5644
      %v5725 = vpack.c.b16 %v5710, %v5709
      %v5726 = vpack.c.b16 %v5712, %v5711
      %v5727 = vpack.c.b16 %v5714, %v5713
      %v5728 = vpack.c.b16 %v5716, %v5715
      %v5729 = vpack.c.b16 %v5718, %v5717
      %v5730 = vpack.c.b16 %v5720, %v5719
      %v5731 = vpack.c.b16 %v5722, %v5721
      %v5732 = vpack.c.b16 %v5724, %v5723
      %5741 = vmatprep.subr.bf16.mxu0 0
      %5742 = vmatpush1.bf16.msra.mxu0 %v5732
      %5743 = vmatprep.subr.bf16.mxu0 0
      %5744 = vmatpush1.bf16.msra.mxu0 %v5731
      %5745 = vmatprep.subr.bf16.mxu0 0
      %5746 = vmatpush1.bf16.msra.mxu0 %v5730
      %5747 = vmatprep.subr.bf16.mxu0 0
      %5748 = vmatpush1.bf16.msra.mxu0 %v5729
      %5749 = vmatprep.subr.bf16.mxu0 0
      %5750 = vmatpush1.bf16.msra.mxu0 %v5728
      %5751 = vmatprep.subr.bf16.mxu0 0
      %5752 = vmatpush1.bf16.msra.mxu0 %v5727
      %5753 = vmatprep.subr.bf16.mxu0 0
      %5754 = vmatpush1.bf16.msra.mxu0 %v5726
      %5755 = vmatprep.subr.bf16.mxu0 0
      %5756 = vmatpush1.bf16.msra.mxu0 %v5725
      %5757 = vmatprep.subr.bf16.mxu0 0
      %5758 = vmatpush2.bf16.msra.mxu0 0
      %5759 = vmatprep.subr.bf16.mxu0 0
      %5760 = vmatpush2.bf16.msra.mxu0 0
      %5761 = vmatprep.subr.bf16.mxu0 0
      %5762 = vmatpush2.bf16.msra.mxu0 0
      %5763 = vmatprep.subr.bf16.mxu0 0
      %5764 = vmatpush2.bf16.msra.mxu0 0
      %5765 = vmatprep.subr.bf16.mxu0 0
      %5766 = vmatpush2.bf16.msra.mxu0 0
      %5767 = vmatprep.subr.bf16.mxu0 0
      %5768 = vmatpush2.bf16.msra.mxu0 0
      %5769 = vmatprep.subr.bf16.mxu0 0
      %5770 = vmatpush2.bf16.msra.mxu0 0
      %5771 = vmatprep.subr.bf16.mxu0 0
      %5772 = vmatpush2.bf16.msra.mxu0 0
      %5773 = vmatprep.mubr.bf16.mxu0 0
      %5774 = vmatmul.mubr.bf16.gmra.mxu0 %v5677
      %v5775 = vpop.f32.mrf.mxu0
      %v5776 = vadd.f32 0.0, %v5775
      %v5777 = vpop.f32.mrf.mxu0
      %v5778 = vpop.f32.mrf.mxu0
      %v5779 = vadd.f32 0.0, %v5778
      %v5780 = vpop.f32.mrf.mxu0
      %5781 = vmatprep.mubr.bf16.mxu0 0
      %5782 = vmatmul.mubr.bf16.gmra.mxu0 %v5678
      %v5783 = vpop.f32.mrf.mxu0
      %v5784 = vadd.f32 0.0, %v5783
      %v5785 = vpop.f32.mrf.mxu0
      %v5786 = vpop.f32.mrf.mxu0
      %v5787 = vadd.f32 0.0, %v5786
      %v5788 = vpop.f32.mrf.mxu0
      %5789 = vmatprep.mubr.bf16.mxu0 0
      %5790 = vmatmul.mubr.bf16.gmra.mxu0 %v5679
      %v5791 = vpop.f32.mrf.mxu0
      %v5792 = vadd.f32 0.0, %v5791
      %v5793 = vpop.f32.mrf.mxu0
      %v5794 = vpop.f32.mrf.mxu0
      %v5795 = vadd.f32 0.0, %v5794
      %v5796 = vpop.f32.mrf.mxu0
      %5797 = vmatprep.mubr.bf16.mxu0 0
      %5798 = vmatmul.mubr.bf16.gmra.mxu0 %v5680
      %v5799 = vpop.f32.mrf.mxu0
      %v5800 = vadd.f32 0.0, %v5799
      %v5801 = vpop.f32.mrf.mxu0
      %v5802 = vpop.f32.mrf.mxu0
      %v5803 = vadd.f32 0.0, %v5802
      %v5804 = vpop.f32.mrf.mxu0
      %5805 = vmatprep.mubr.bf16.mxu0 0
      %5806 = vmatmul.mubr.bf16.gmra.mxu0 %v5681
      %v5807 = vpop.f32.mrf.mxu0
      %v5808 = vadd.f32 0.0, %v5807
      %v5809 = vpop.f32.mrf.mxu0
      %v5810 = vpop.f32.mrf.mxu0
      %v5811 = vadd.f32 0.0, %v5810
      %v5812 = vpop.f32.mrf.mxu0
      %5813 = vmatprep.mubr.bf16.mxu0 0
      %5814 = vmatmul.mubr.bf16.gmra.mxu0 %v5682
      %v5815 = vpop.f32.mrf.mxu0
      %v5816 = vadd.f32 0.0, %v5815
      %v5817 = vpop.f32.mrf.mxu0
      %v5818 = vpop.f32.mrf.mxu0
      %v5819 = vadd.f32 0.0, %v5818
      %v5820 = vpop.f32.mrf.mxu0
      %5821 = vmatprep.mubr.bf16.mxu0 0
      %5822 = vmatmul.mubr.bf16.gmra.mxu0 %v5683
      %v5823 = vpop.f32.mrf.mxu0
      %v5824 = vadd.f32 0.0, %v5823
      %v5825 = vpop.f32.mrf.mxu0
      %v5826 = vpop.f32.mrf.mxu0
      %v5827 = vadd.f32 0.0, %v5826
      %v5828 = vpop.f32.mrf.mxu0
      %5829 = vmatprep.mubr.bf16.mxu0 0
      %5830 = vmatmul.mubr.bf16.gmra.mxu0 %v5684
      %v5831 = vpop.f32.mrf.mxu0
      %v5832 = vadd.f32 0.0, %v5831
      %v5833 = vpop.f32.mrf.mxu0
      %v5834 = vpop.f32.mrf.mxu0
      %v5835 = vadd.f32 0.0, %v5834
      %v5836 = vpop.f32.mrf.mxu0
      %5837 = vdwg.mxu0
      %v5838 = vadd.f32 %v5595, %v5776
      %v5839 = vadd.f32 %v5596, %v5779
      %v5840 = vadd.f32 %v5597, %v5784
      %v5841 = vadd.f32 %v5598, %v5787
      %v5842 = vadd.f32 %v5599, %v5792
      %v5843 = vadd.f32 %v5600, %v5795
      %v5844 = vadd.f32 %v5601, %v5800
      %v5845 = vadd.f32 %v5602, %v5803
      %v5846 = vadd.f32 %v5603, %v5808
      %v5847 = vadd.f32 %v5604, %v5811
      %v5848 = vadd.f32 %v5605, %v5816
      %v5849 = vadd.f32 %v5606, %v5819
      %v5850 = vadd.f32 %v5607, %v5824
      %v5851 = vadd.f32 %v5608, %v5827
      %v5852 = vadd.f32 %v5609, %v5832
      %v5853 = vadd.f32 %v5610, %v5835
      %v5854 = vld [vmem:[%s5368] sm:$0xf]
      %v5855 = vld [vmem:[%s5368 + $0x4] sm:$0xf]
      %v5856 = vld [vmem:[%s5368 + $0x8] sm:$0x1]
      %v5857 = vld [vmem:[%s5368 + $0x10] sm:$0xf]
      %v5858 = vld [vmem:[%s5368 + $0x14] sm:$0xf]
      %v5859 = vld [vmem:[%s5368 + $0x18] sm:$0x1]
      %v5860 = vld [vmem:[%s5368 + $0x20] sm:$0xf]
      %v5861 = vld [vmem:[%s5368 + $0x24] sm:$0xf]
      %v5862 = vld [vmem:[%s5368 + $0x28] sm:$0x1]
      %v5863 = vld [vmem:[%s5368 + $0x30] sm:$0xf]
      %v5864 = vld [vmem:[%s5368 + $0x34] sm:$0xf]
      %v5865 = vld [vmem:[%s5368 + $0x38] sm:$0x1]
      %v5866 = vld [vmem:[%s5368 + $0x40] sm:$0xf]
      %v5867 = vld [vmem:[%s5368 + $0x44] sm:$0xf]
      %v5868 = vld [vmem:[%s5368 + $0x48] sm:$0x1]
      %v5869 = vld [vmem:[%s5368 + $0x50] sm:$0xf]
      %v5870 = vld [vmem:[%s5368 + $0x54] sm:$0xf]
      %v5871 = vld [vmem:[%s5368 + $0x58] sm:$0x1]
      %v5872 = vld [vmem:[%s5368 + $0x60] sm:$0xf]
      %v5873 = vld [vmem:[%s5368 + $0x64] sm:$0xf]
      %v5874 = vld [vmem:[%s5368 + $0x68] sm:$0x1]
      %v5875 = vld [vmem:[%s5368 + $0x70] sm:$0xf]
      %v5876 = vld [vmem:[%s5368 + $0x74] sm:$0xf]
      %v5877 = vld [vmem:[%s5368 + $0x78] sm:$0x1]
      %v5879 = vshrl.u32 %v5854, 16
      %v5881 = vrot.slane %v5879, 4
      %v5882 = vshll.u32 %v5854, 16
      %v5884 = vrot.slane %v5882, 5
      %v5885 = vor.u32 %v5881, %v5884
      %v5886 = vrot.slane %v5885, 4
      %v5888 = vshll.u32 %v5855, 16
      %v5890 = vrot.slane %v5888, 5
      %v5891 = vsel %vm4053, %v5886, %v5890
      %v5892 = vshrl.u32 %v5855, 16
      %v5894 = vrot.slane %v5892, 4
      %v5895 = vor.u32 %v5894, %v5890
      %v5896 = vrot.slane %v5895, 4
      %v5898 = vshll.u32 %v5856, 16
      %v5900 = vrot.slane %v5898, 5
      %v5901 = vsel %vm4053, %v5896, %v5900
      %v5903 = vshrl.u32 %v5857, 16
      %v5905 = vrot.slane %v5903, 4
      %v5906 = vshll.u32 %v5857, 16
      %v5908 = vrot.slane %v5906, 5
      %v5909 = vor.u32 %v5905, %v5908
      %v5910 = vrot.slane %v5909, 4
      %v5912 = vshll.u32 %v5858, 16
      %v5914 = vrot.slane %v5912, 5
      %v5915 = vsel %vm4053, %v5910, %v5914
      %v5916 = vshrl.u32 %v5858, 16
      %v5918 = vrot.slane %v5916, 4
      %v5919 = vor.u32 %v5918, %v5914
      %v5920 = vrot.slane %v5919, 4
      %v5922 = vshll.u32 %v5859, 16
      %v5924 = vrot.slane %v5922, 5
      %v5925 = vsel %vm4053, %v5920, %v5924
      %v5927 = vshrl.u32 %v5860, 16
      %v5929 = vrot.slane %v5927, 4
      %v5930 = vshll.u32 %v5860, 16
      %v5932 = vrot.slane %v5930, 5
      %v5933 = vor.u32 %v5929, %v5932
      %v5934 = vrot.slane %v5933, 4
      %v5936 = vshll.u32 %v5861, 16
      %v5938 = vrot.slane %v5936, 5
      %v5939 = vsel %vm4053, %v5934, %v5938
      %v5940 = vshrl.u32 %v5861, 16
      %v5942 = vrot.slane %v5940, 4
      %v5943 = vor.u32 %v5942, %v5938
      %v5944 = vrot.slane %v5943, 4
      %v5946 = vshll.u32 %v5862, 16
      %v5948 = vrot.slane %v5946, 5
      %v5949 = vsel %vm4053, %v5944, %v5948
      %v5951 = vshrl.u32 %v5863, 16
      %v5953 = vrot.slane %v5951, 4
      %v5954 = vshll.u32 %v5863, 16
      %v5956 = vrot.slane %v5954, 5
      %v5957 = vor.u32 %v5953, %v5956
      %v5958 = vrot.slane %v5957, 4
      %v5960 = vshll.u32 %v5864, 16
      %v5962 = vrot.slane %v5960, 5
      %v5963 = vsel %vm4053, %v5958, %v5962
      %v5964 = vshrl.u32 %v5864, 16
      %v5966 = vrot.slane %v5964, 4
      %v5967 = vor.u32 %v5966, %v5962
      %v5968 = vrot.slane %v5967, 4
      %v5970 = vshll.u32 %v5865, 16
      %v5972 = vrot.slane %v5970, 5
      %v5973 = vsel %vm4053, %v5968, %v5972
      %v5975 = vshrl.u32 %v5866, 16
      %v5977 = vrot.slane %v5975, 4
      %v5978 = vshll.u32 %v5866, 16
      %v5980 = vrot.slane %v5978, 5
      %v5981 = vor.u32 %v5977, %v5980
      %v5982 = vrot.slane %v5981, 4
      %v5984 = vshll.u32 %v5867, 16
      %v5986 = vrot.slane %v5984, 5
      %v5987 = vsel %vm4053, %v5982, %v5986
      %v5988 = vshrl.u32 %v5867, 16
      %v5990 = vrot.slane %v5988, 4
      %v5991 = vor.u32 %v5990, %v5986
      %v5992 = vrot.slane %v5991, 4
      %v5994 = vshll.u32 %v5868, 16
      %v5996 = vrot.slane %v5994, 5
      %v5997 = vsel %vm4053, %v5992, %v5996
      %v5999 = vshrl.u32 %v5869, 16
      %v6001 = vrot.slane %v5999, 4
      %v6002 = vshll.u32 %v5869, 16
      %v6004 = vrot.slane %v6002, 5
      %v6005 = vor.u32 %v6001, %v6004
      %v6006 = vrot.slane %v6005, 4
      %v6008 = vshll.u32 %v5870, 16
      %v6010 = vrot.slane %v6008, 5
      %v6011 = vsel %vm4053, %v6006, %v6010
      %v6012 = vshrl.u32 %v5870, 16
      %v6014 = vrot.slane %v6012, 4
      %v6015 = vor.u32 %v6014, %v6010
      %v6016 = vrot.slane %v6015, 4
      %v6018 = vshll.u32 %v5871, 16
      %v6020 = vrot.slane %v6018, 5
      %v6021 = vsel %vm4053, %v6016, %v6020
      %v6023 = vshrl.u32 %v5872, 16
      %v6025 = vrot.slane %v6023, 4
      %v6026 = vshll.u32 %v5872, 16
      %v6028 = vrot.slane %v6026, 5
      %v6029 = vor.u32 %v6025, %v6028
      %v6030 = vrot.slane %v6029, 4
      %v6032 = vshll.u32 %v5873, 16
      %v6034 = vrot.slane %v6032, 5
      %v6035 = vsel %vm4053, %v6030, %v6034
      %v6036 = vshrl.u32 %v5873, 16
      %v6038 = vrot.slane %v6036, 4
      %v6039 = vor.u32 %v6038, %v6034
      %v6040 = vrot.slane %v6039, 4
      %v6042 = vshll.u32 %v5874, 16
      %v6044 = vrot.slane %v6042, 5
      %v6045 = vsel %vm4053, %v6040, %v6044
      %v6047 = vshrl.u32 %v5875, 16
      %v6049 = vrot.slane %v6047, 4
      %v6050 = vshll.u32 %v5875, 16
      %v6052 = vrot.slane %v6050, 5
      %v6053 = vor.u32 %v6049, %v6052
      %v6054 = vrot.slane %v6053, 4
      %v6056 = vshll.u32 %v5876, 16
      %v6058 = vrot.slane %v6056, 5
      %v6059 = vsel %vm4053, %v6054, %v6058
      %v6060 = vshrl.u32 %v5876, 16
      %v6062 = vrot.slane %v6060, 4
      %v6063 = vor.u32 %v6062, %v6058
      %v6064 = vrot.slane %v6063, 4
      %v6066 = vshll.u32 %v5877, 16
      %v6068 = vrot.slane %v6066, 5
      %v6069 = vsel %vm4053, %v6064, %v6068
      %s6070 = scalar_lea.vmem %s4, 512
      %v6071 = vld [vmem:[%s6070] sm:$0xf]
      %v6072 = vld [vmem:[%s6070 + $0x4] sm:$0xf]
      %v6073 = vld [vmem:[%s6070 + $0x8] sm:$0xf]
      %v6074 = vld [vmem:[%s6070 + $0xc] sm:$0xf]
      %v6075 = vld [vmem:[%s6070 + $0x10] sm:$0xf]
      %v6076 = vld [vmem:[%s6070 + $0x14] sm:$0xf]
      %v6077 = vld [vmem:[%s6070 + $0x18] sm:$0xf]
      %v6078 = vld [vmem:[%s6070 + $0x1c] sm:$0xf]
      %v6079 = vld [vmem:[%s6070 + $0x20] sm:$0xf]
      %v6080 = vld [vmem:[%s6070 + $0x24] sm:$0xf]
      %v6081 = vld [vmem:[%s6070 + $0x28] sm:$0xf]
      %v6082 = vld [vmem:[%s6070 + $0x2c] sm:$0xf]
      %v6083 = vld [vmem:[%s6070 + $0x30] sm:$0xf]
      %v6084 = vld [vmem:[%s6070 + $0x34] sm:$0xf]
      %v6085 = vld [vmem:[%s6070 + $0x38] sm:$0xf]
      %v6086 = vld [vmem:[%s6070 + $0x3c] sm:$0xf]
      %v6087 = vunpack.c.l.b16 %v5891
      %v6088 = vunpack.c.l.b16 %v5901
      %v6089 = vunpack.c.l.b16 %v5915
      %v6090 = vunpack.c.l.b16 %v5925
      %v6091 = vunpack.c.l.b16 %v5939
      %v6092 = vunpack.c.l.b16 %v5949
      %v6093 = vunpack.c.l.b16 %v5963
      %v6094 = vunpack.c.l.b16 %v5973
      %v6095 = vunpack.c.l.b16 %v5987
      %v6096 = vunpack.c.l.b16 %v5997
      %v6097 = vunpack.c.l.b16 %v6011
      %v6098 = vunpack.c.l.b16 %v6021
      %v6099 = vunpack.c.l.b16 %v6035
      %v6100 = vunpack.c.l.b16 %v6045
      %v6101 = vunpack.c.l.b16 %v6059
      %v6102 = vunpack.c.l.b16 %v6069
      %v6103 = vpack.c.b16 %v6088, %v6087
      %v6104 = vpack.c.b16 %v6090, %v6089
      %v6105 = vpack.c.b16 %v6092, %v6091
      %v6106 = vpack.c.b16 %v6094, %v6093
      %v6107 = vpack.c.b16 %v6096, %v6095
      %v6108 = vpack.c.b16 %v6098, %v6097
      %v6109 = vpack.c.b16 %v6100, %v6099
      %v6110 = vpack.c.b16 %v6102, %v6101
      %v6135 = vunpack.c.l.b16 %v6071
      %v6136 = vunpack.c.l.b16 %v6072
      %v6137 = vunpack.c.l.b16 %v6073
      %v6138 = vunpack.c.l.b16 %v6074
      %v6139 = vunpack.c.l.b16 %v6075
      %v6140 = vunpack.c.l.b16 %v6076
      %v6141 = vunpack.c.l.b16 %v6077
      %v6142 = vunpack.c.l.b16 %v6078
      %v6143 = vunpack.c.l.b16 %v6079
      %v6144 = vunpack.c.l.b16 %v6080
      %v6145 = vunpack.c.l.b16 %v6081
      %v6146 = vunpack.c.l.b16 %v6082
      %v6147 = vunpack.c.l.b16 %v6083
      %v6148 = vunpack.c.l.b16 %v6084
      %v6149 = vunpack.c.l.b16 %v6085
      %v6150 = vunpack.c.l.b16 %v6086
      %v6151 = vpack.c.b16 %v6136, %v6135
      %v6152 = vpack.c.b16 %v6138, %v6137
      %v6153 = vpack.c.b16 %v6140, %v6139
      %v6154 = vpack.c.b16 %v6142, %v6141
      %v6155 = vpack.c.b16 %v6144, %v6143
      %v6156 = vpack.c.b16 %v6146, %v6145
      %v6157 = vpack.c.b16 %v6148, %v6147
      %v6158 = vpack.c.b16 %v6150, %v6149
      %6167 = vmatprep.subr.bf16.mxu0 0
      %6168 = vmatpush1.bf16.msra.mxu0 %v6158
      %6169 = vmatprep.subr.bf16.mxu0 0
      %6170 = vmatpush1.bf16.msra.mxu0 %v6157
      %6171 = vmatprep.subr.bf16.mxu0 0
      %6172 = vmatpush1.bf16.msra.mxu0 %v6156
      %6173 = vmatprep.subr.bf16.mxu0 0
      %6174 = vmatpush1.bf16.msra.mxu0 %v6155
      %6175 = vmatprep.subr.bf16.mxu0 0
      %6176 = vmatpush1.bf16.msra.mxu0 %v6154
      %6177 = vmatprep.subr.bf16.mxu0 0
      %6178 = vmatpush1.bf16.msra.mxu0 %v6153
      %6179 = vmatprep.subr.bf16.mxu0 0
      %6180 = vmatpush1.bf16.msra.mxu0 %v6152
      %6181 = vmatprep.subr.bf16.mxu0 0
      %6182 = vmatpush1.bf16.msra.mxu0 %v6151
      %6183 = vmatprep.subr.bf16.mxu0 0
      %6184 = vmatpush2.bf16.msra.mxu0 0
      %6185 = vmatprep.subr.bf16.mxu0 0
      %6186 = vmatpush2.bf16.msra.mxu0 0
      %6187 = vmatprep.subr.bf16.mxu0 0
      %6188 = vmatpush2.bf16.msra.mxu0 0
      %6189 = vmatprep.subr.bf16.mxu0 0
      %6190 = vmatpush2.bf16.msra.mxu0 0
      %6191 = vmatprep.subr.bf16.mxu0 0
      %6192 = vmatpush2.bf16.msra.mxu0 0
      %6193 = vmatprep.subr.bf16.mxu0 0
      %6194 = vmatpush2.bf16.msra.mxu0 0
      %6195 = vmatprep.subr.bf16.mxu0 0
      %6196 = vmatpush2.bf16.msra.mxu0 0
      %6197 = vmatprep.subr.bf16.mxu0 0
      %6198 = vmatpush2.bf16.msra.mxu0 0
      %6199 = vmatprep.mubr.bf16.mxu0 0
      %6200 = vmatmul.mubr.bf16.gmra.mxu0 %v6103
      %v6201 = vpop.f32.mrf.mxu0
      %v6202 = vadd.f32 0.0, %v6201
      %v6203 = vpop.f32.mrf.mxu0
      %v6204 = vpop.f32.mrf.mxu0
      %v6205 = vadd.f32 0.0, %v6204
      %v6206 = vpop.f32.mrf.mxu0
      %6207 = vmatprep.mubr.bf16.mxu0 0
      %6208 = vmatmul.mubr.bf16.gmra.mxu0 %v6104
      %v6209 = vpop.f32.mrf.mxu0
      %v6210 = vadd.f32 0.0, %v6209
      %v6211 = vpop.f32.mrf.mxu0
      %v6212 = vpop.f32.mrf.mxu0
      %v6213 = vadd.f32 0.0, %v6212
      %v6214 = vpop.f32.mrf.mxu0
      %6215 = vmatprep.mubr.bf16.mxu0 0
      %6216 = vmatmul.mubr.bf16.gmra.mxu0 %v6105
      %v6217 = vpop.f32.mrf.mxu0
      %v6218 = vadd.f32 0.0, %v6217
      %v6219 = vpop.f32.mrf.mxu0
      %v6220 = vpop.f32.mrf.mxu0
      %v6221 = vadd.f32 0.0, %v6220
      %v6222 = vpop.f32.mrf.mxu0
      %6223 = vmatprep.mubr.bf16.mxu0 0
      %6224 = vmatmul.mubr.bf16.gmra.mxu0 %v6106
      %v6225 = vpop.f32.mrf.mxu0
      %v6226 = vadd.f32 0.0, %v6225
      %v6227 = vpop.f32.mrf.mxu0
      %v6228 = vpop.f32.mrf.mxu0
      %v6229 = vadd.f32 0.0, %v6228
      %v6230 = vpop.f32.mrf.mxu0
      %6231 = vmatprep.mubr.bf16.mxu0 0
      %6232 = vmatmul.mubr.bf16.gmra.mxu0 %v6107
      %v6233 = vpop.f32.mrf.mxu0
      %v6234 = vadd.f32 0.0, %v6233
      %v6235 = vpop.f32.mrf.mxu0
      %v6236 = vpop.f32.mrf.mxu0
      %v6237 = vadd.f32 0.0, %v6236
      %v6238 = vpop.f32.mrf.mxu0
      %6239 = vmatprep.mubr.bf16.mxu0 0
      %6240 = vmatmul.mubr.bf16.gmra.mxu0 %v6108
      %v6241 = vpop.f32.mrf.mxu0
      %v6242 = vadd.f32 0.0, %v6241
      %v6243 = vpop.f32.mrf.mxu0
      %v6244 = vpop.f32.mrf.mxu0
      %v6245 = vadd.f32 0.0, %v6244
      %v6246 = vpop.f32.mrf.mxu0
      %6247 = vmatprep.mubr.bf16.mxu0 0
      %6248 = vmatmul.mubr.bf16.gmra.mxu0 %v6109
      %v6249 = vpop.f32.mrf.mxu0
      %v6250 = vadd.f32 0.0, %v6249
      %v6251 = vpop.f32.mrf.mxu0
      %v6252 = vpop.f32.mrf.mxu0
      %v6253 = vadd.f32 0.0, %v6252
      %v6254 = vpop.f32.mrf.mxu0
      %6255 = vmatprep.mubr.bf16.mxu0 0
      %6256 = vmatmul.mubr.bf16.gmra.mxu0 %v6110
      %v6257 = vpop.f32.mrf.mxu0
      %v6258 = vadd.f32 0.0, %v6257
      %v6259 = vpop.f32.mrf.mxu0
      %v6260 = vpop.f32.mrf.mxu0
      %v6261 = vadd.f32 0.0, %v6260
      %v6262 = vpop.f32.mrf.mxu0
      %6263 = vdwg.mxu0
      %v6264 = vadd.f32 %v5838, %v6202
      %v6265 = vadd.f32 %v5839, %v6205
      %v6266 = vadd.f32 %v5840, %v6210
      %v6267 = vadd.f32 %v5841, %v6213
      %v6268 = vadd.f32 %v5842, %v6218
      %v6269 = vadd.f32 %v5843, %v6221
      %v6270 = vadd.f32 %v5844, %v6226
      %v6271 = vadd.f32 %v5845, %v6229
      %v6272 = vadd.f32 %v5846, %v6234
      %v6273 = vadd.f32 %v5847, %v6237
      %v6274 = vadd.f32 %v5848, %v6242
      %v6275 = vadd.f32 %v5849, %v6245
      %v6276 = vadd.f32 %v5850, %v6250
      %v6277 = vadd.f32 %v5851, %v6253
      %v6278 = vadd.f32 %v5852, %v6258
      %v6279 = vadd.f32 %v5853, %v6261
      %v6280 = vld [vmem:[%s5] sm:$0x1]
      %v6282 = vlaneseq
      %v6283 = vshrl.u32 %v6282, 7
      %v6284 = vsub.s32 0, %v6283
      %v6285 = vrot.slane %v6280, %v6284
      %v6287 = vadd.f32 %v6264, %v6285
      %v6288 = vadd.f32 %v6265, %v6285
      %v6289 = vadd.f32 %v6266, %v6285
      %v6290 = vadd.f32 %v6267, %v6285
      %v6291 = vadd.f32 %v6268, %v6285
      %v6292 = vadd.f32 %v6269, %v6285
      %v6293 = vadd.f32 %v6270, %v6285
      %v6294 = vadd.f32 %v6271, %v6285
      %v6295 = vadd.f32 %v6272, %v6285
      %v6296 = vadd.f32 %v6273, %v6285
      %v6297 = vadd.f32 %v6274, %v6285
      %v6298 = vadd.f32 %v6275, %v6285
      %v6299 = vadd.f32 %v6276, %v6285
      %v6300 = vadd.f32 %v6277, %v6285
      %v6301 = vadd.f32 %v6278, %v6285
      %v6302 = vadd.f32 %v6279, %v6285
      %v6303 = vmax.f32 %v6287, 0.0
      %v6304 = vmax.f32 %v6288, 0.0
      %v6305 = vmax.f32 %v6289, 0.0
      %v6306 = vmax.f32 %v6290, 0.0
      %v6307 = vmax.f32 %v6291, 0.0
      %v6308 = vmax.f32 %v6292, 0.0
      %v6309 = vmax.f32 %v6293, 0.0
      %v6310 = vmax.f32 %v6294, 0.0
      %v6311 = vmax.f32 %v6295, 0.0
      %v6312 = vmax.f32 %v6296, 0.0
      %v6313 = vmax.f32 %v6297, 0.0
      %v6314 = vmax.f32 %v6298, 0.0
      %v6315 = vmax.f32 %v6299, 0.0
      %v6316 = vmax.f32 %v6300, 0.0
      %v6317 = vmax.f32 %v6301, 0.0
      %v6318 = vmax.f32 %v6302, 0.0
      %v6319 = vpack.c.bf16 %v6304, %v6303
      %v6320 = vpack.c.bf16 %v6306, %v6305
      %v6321 = vpack.c.bf16 %v6308, %v6307
      %v6322 = vpack.c.bf16 %v6310, %v6309
      %v6323 = vpack.c.bf16 %v6312, %v6311
      %v6324 = vpack.c.bf16 %v6314, %v6313
      %v6325 = vpack.c.bf16 %v6316, %v6315
      %v6326 = vpack.c.bf16 %v6318, %v6317
      %v6327 = vld [vmem:[%s6] sm:$0xf]
      %v6328 = vld [vmem:[%s6 + $0x4] sm:$0xf]
      %v6329 = vld [vmem:[%s6 + $0x8] sm:$0xf]
      %v6330 = vld [vmem:[%s6 + $0xc] sm:$0xf]
      %v6331 = vld [vmem:[%s6 + $0x10] sm:$0xf]
      %v6332 = vld [vmem:[%s6 + $0x14] sm:$0xf]
      %v6333 = vld [vmem:[%s6 + $0x18] sm:$0xf]
      %v6334 = vld [vmem:[%s6 + $0x1c] sm:$0xf]
      %v6335 = vld [vmem:[%s6 + $0x20] sm:$0xf]
      %v6336 = vld [vmem:[%s6 + $0x24] sm:$0xf]
      %v6337 = vld [vmem:[%s6 + $0x28] sm:$0xf]
      %v6338 = vld [vmem:[%s6 + $0x2c] sm:$0xf]
      %v6339 = vld [vmem:[%s6 + $0x30] sm:$0xf]
      %v6340 = vld [vmem:[%s6 + $0x34] sm:$0xf]
      %v6341 = vld [vmem:[%s6 + $0x38] sm:$0xf]
      %v6342 = vld [vmem:[%s6 + $0x3c] sm:$0xf]
      %v6343 = vld [vmem:[%s7] sm:$0x1]
      %v6345 = vlaneseq
      %v6346 = vshrl.u32 %v6345, 7
      %v6347 = vsub.s32 0, %v6346
      %v6348 = vrot.slane %v6343, %v6347
      %v6366 = vunpack.c.l.b16 %v6327
      %v6367 = vunpack.c.l.b16 %v6328
      %v6368 = vunpack.c.l.b16 %v6329
      %v6369 = vunpack.c.l.b16 %v6330
      %v6370 = vunpack.c.l.b16 %v6331
      %v6371 = vunpack.c.l.b16 %v6332
      %v6372 = vunpack.c.l.b16 %v6333
      %v6373 = vunpack.c.l.b16 %v6334
      %v6374 = vunpack.c.l.b16 %v6335
      %v6375 = vunpack.c.l.b16 %v6336
      %v6376 = vunpack.c.l.b16 %v6337
      %v6377 = vunpack.c.l.b16 %v6338
      %v6378 = vunpack.c.l.b16 %v6339
      %v6379 = vunpack.c.l.b16 %v6340
      %v6380 = vunpack.c.l.b16 %v6341
      %v6381 = vunpack.c.l.b16 %v6342
      %v6382 = vpack.c.b16 %v6367, %v6366
      %v6383 = vpack.c.b16 %v6369, %v6368
      %v6384 = vpack.c.b16 %v6371, %v6370
      %v6385 = vpack.c.b16 %v6373, %v6372
      %v6386 = vpack.c.b16 %v6375, %v6374
      %v6387 = vpack.c.b16 %v6377, %v6376
      %v6388 = vpack.c.b16 %v6379, %v6378
      %v6389 = vpack.c.b16 %v6381, %v6380
      %6398 = vmatprep.subr.bf16.mxu0 0
      %6399 = vmatpush1.bf16.msra.mxu0 %v6389
      %6400 = vmatprep.subr.bf16.mxu0 0
      %6401 = vmatpush1.bf16.msra.mxu0 %v6388
      %6402 = vmatprep.subr.bf16.mxu0 0
      %6403 = vmatpush1.bf16.msra.mxu0 %v6387
      %6404 = vmatprep.subr.bf16.mxu0 0
      %6405 = vmatpush1.bf16.msra.mxu0 %v6386
      %6406 = vmatprep.subr.bf16.mxu0 0
      %6407 = vmatpush1.bf16.msra.mxu0 %v6385
      %6408 = vmatprep.subr.bf16.mxu0 0
      %6409 = vmatpush1.bf16.msra.mxu0 %v6384
      %6410 = vmatprep.subr.bf16.mxu0 0
      %6411 = vmatpush1.bf16.msra.mxu0 %v6383
      %6412 = vmatprep.subr.bf16.mxu0 0
      %6413 = vmatpush1.bf16.msra.mxu0 %v6382
      %6414 = vmatprep.subr.bf16.mxu0 0
      %6415 = vmatpush2.bf16.msra.mxu0 0
      %6416 = vmatprep.subr.bf16.mxu0 0
      %6417 = vmatpush2.bf16.msra.mxu0 0
      %6418 = vmatprep.subr.bf16.mxu0 0
      %6419 = vmatpush2.bf16.msra.mxu0 0
      %6420 = vmatprep.subr.bf16.mxu0 0
      %6421 = vmatpush2.bf16.msra.mxu0 0
      %6422 = vmatprep.subr.bf16.mxu0 0
      %6423 = vmatpush2.bf16.msra.mxu0 0
      %6424 = vmatprep.subr.bf16.mxu0 0
      %6425 = vmatpush2.bf16.msra.mxu0 0
      %6426 = vmatprep.subr.bf16.mxu0 0
      %6427 = vmatpush2.bf16.msra.mxu0 0
      %6428 = vmatprep.subr.bf16.mxu0 0
      %6429 = vmatpush2.bf16.msra.mxu0 0
      %6430 = vmatprep.mubr.bf16.mxu0 0
      %6431 = vmatmul.mubr.bf16.gmra.mxu0 %v6319
      %v6432 = vpop.f32.mrf.mxu0
      %v6433 = vadd.f32 %v6348, %v6432
      %v6434 = vpop.f32.mrf.mxu0
      %v6435 = vpop.f32.mrf.mxu0
      %v6436 = vadd.f32 %v6348, %v6435
      %v6437 = vpop.f32.mrf.mxu0
      %6438 = vmatprep.mubr.bf16.mxu0 0
      %6439 = vmatmul.mubr.bf16.gmra.mxu0 %v6320
      %v6440 = vpop.f32.mrf.mxu0
      %v6441 = vadd.f32 %v6348, %v6440
      %v6442 = vpop.f32.mrf.mxu0
      %v6443 = vpop.f32.mrf.mxu0
      %v6444 = vadd.f32 %v6348, %v6443
      %v6445 = vpop.f32.mrf.mxu0
      %6446 = vmatprep.mubr.bf16.mxu0 0
      %6447 = vmatmul.mubr.bf16.gmra.mxu0 %v6321
      %v6448 = vpop.f32.mrf.mxu0
      %v6449 = vadd.f32 %v6348, %v6448
      %v6450 = vpop.f32.mrf.mxu0
      %v6451 = vpop.f32.mrf.mxu0
      %v6452 = vadd.f32 %v6348, %v6451
      %v6453 = vpop.f32.mrf.mxu0
      %6454 = vmatprep.mubr.bf16.mxu0 0
      %6455 = vmatmul.mubr.bf16.gmra.mxu0 %v6322
      %v6456 = vpop.f32.mrf.mxu0
      %v6457 = vadd.f32 %v6348, %v6456
      %v6458 = vpop.f32.mrf.mxu0
      %v6459 = vpop.f32.mrf.mxu0
      %v6460 = vadd.f32 %v6348, %v6459
      %v6461 = vpop.f32.mrf.mxu0
      %6462 = vmatprep.mubr.bf16.mxu0 0
      %6463 = vmatmul.mubr.bf16.gmra.mxu0 %v6323
      %v6464 = vpop.f32.mrf.mxu0
      %v6465 = vadd.f32 %v6348, %v6464
      %v6466 = vpop.f32.mrf.mxu0
      %v6467 = vpop.f32.mrf.mxu0
      %v6468 = vadd.f32 %v6348, %v6467
      %v6469 = vpop.f32.mrf.mxu0
      %6470 = vmatprep.mubr.bf16.mxu0 0
      %6471 = vmatmul.mubr.bf16.gmra.mxu0 %v6324
      %v6472 = vpop.f32.mrf.mxu0
      %v6473 = vadd.f32 %v6348, %v6472
      %v6474 = vpop.f32.mrf.mxu0
      %v6475 = vpop.f32.mrf.mxu0
      %v6476 = vadd.f32 %v6348, %v6475
      %v6477 = vpop.f32.mrf.mxu0
      %6478 = vmatprep.mubr.bf16.mxu0 0
      %6479 = vmatmul.mubr.bf16.gmra.mxu0 %v6325
      %v6480 = vpop.f32.mrf.mxu0
      %v6481 = vadd.f32 %v6348, %v6480
      %v6482 = vpop.f32.mrf.mxu0
      %v6483 = vpop.f32.mrf.mxu0
      %v6484 = vadd.f32 %v6348, %v6483
      %v6485 = vpop.f32.mrf.mxu0
      %6486 = vmatprep.mubr.bf16.mxu0 0
      %6487 = vmatmul.mubr.bf16.gmra.mxu0 %v6326
      %v6488 = vpop.f32.mrf.mxu0
      %v6489 = vadd.f32 %v6348, %v6488
      %v6490 = vpop.f32.mrf.mxu0
      %v6491 = vpop.f32.mrf.mxu0
      %v6492 = vadd.f32 %v6348, %v6491
      %v6493 = vpop.f32.mrf.mxu0
      %6494 = vdwg.mxu0
      %s6495 = scalar_lea.vmem %s354, 432
      %v6496 = vld [vmem:[%s6495] sm:$0xf]
      %v6497 = vld [vmem:[%s6495 + $0x4] sm:$0xf]
      %v6498 = vld [vmem:[%s6495 + $0x10] sm:$0xf]
      %v6499 = vld [vmem:[%s6495 + $0x14] sm:$0xf]
      %v6500 = vld [vmem:[%s6495 + $0x20] sm:$0xf]
      %v6501 = vld [vmem:[%s6495 + $0x24] sm:$0xf]
      %v6502 = vld [vmem:[%s6495 + $0x30] sm:$0xf]
      %v6503 = vld [vmem:[%s6495 + $0x34] sm:$0xf]
      %v6504 = vld [vmem:[%s6495 + $0x40] sm:$0xf]
      %v6505 = vld [vmem:[%s6495 + $0x44] sm:$0xf]
      %v6506 = vld [vmem:[%s6495 + $0x50] sm:$0xf]
      %v6507 = vld [vmem:[%s6495 + $0x54] sm:$0xf]
      %v6508 = vld [vmem:[%s6495 + $0x60] sm:$0xf]
      %v6509 = vld [vmem:[%s6495 + $0x64] sm:$0xf]
      %v6510 = vld [vmem:[%s6495 + $0x70] sm:$0xf]
      %v6511 = vld [vmem:[%s6495 + $0x74] sm:$0xf]
      %v6512 = vld [vmem:[%s8] sm:$0xf]
      %v6529 = vunpack.c.l.b16 %v6496
      %v6530 = vunpack.c.l.b16 %v6497
      %v6531 = vunpack.c.l.b16 %v6498
      %v6532 = vunpack.c.l.b16 %v6499
      %v6533 = vunpack.c.l.b16 %v6500
      %v6534 = vunpack.c.l.b16 %v6501
      %v6535 = vunpack.c.l.b16 %v6502
      %v6536 = vunpack.c.l.b16 %v6503
      %v6537 = vunpack.c.l.b16 %v6504
      %v6538 = vunpack.c.l.b16 %v6505
      %v6539 = vunpack.c.l.b16 %v6506
      %v6540 = vunpack.c.l.b16 %v6507
      %v6541 = vunpack.c.l.b16 %v6508
      %v6542 = vunpack.c.l.b16 %v6509
      %v6543 = vunpack.c.l.b16 %v6510
      %v6544 = vunpack.c.l.b16 %v6511
      %v6545 = vpack.c.b16 %v6530, %v6529
      %v6546 = vpack.c.b16 %v6532, %v6531
      %v6547 = vpack.c.b16 %v6534, %v6533
      %v6548 = vpack.c.b16 %v6536, %v6535
      %v6549 = vpack.c.b16 %v6538, %v6537
      %v6550 = vpack.c.b16 %v6540, %v6539
      %v6551 = vpack.c.b16 %v6542, %v6541
      %v6552 = vpack.c.b16 %v6544, %v6543
      %v6554 = vsel %vm873, %v6545, 0
      %v6557 = vsel %vm873, %v6546, 0
      %v6560 = vsel %vm873, %v6547, 0
      %v6563 = vsel %vm873, %v6548, 0
      %v6566 = vsel %vm873, %v6549, 0
      %v6569 = vsel %vm873, %v6550, 0
      %v6572 = vsel %vm873, %v6551, 0
      %v6575 = vsel %vm873, %v6552, 0
      %v6578 = vsel %vm1090, %v6512, 0
      %6580 = vmatprep.subr.bf16.mxu0 0
      %6581 = vmatpush1.bf16.msra.mxu0 0
      %6582 = vmatprep.subr.bf16.mxu0 0
      %6583 = vmatpush1.bf16.msra.mxu0 0
      %6584 = vmatprep.subr.bf16.mxu0 0
      %6585 = vmatpush1.bf16.msra.mxu0 0
      %6586 = vmatprep.subr.bf16.mxu0 0
      %6587 = vmatpush1.bf16.msra.mxu0 0
      %6588 = vmatprep.subr.bf16.mxu0 0
      %6589 = vmatpush1.bf16.msra.mxu0 0
      %6590 = vmatprep.subr.bf16.mxu0 0
      %6591 = vmatpush1.bf16.msra.mxu0 0
      %6592 = vmatprep.subr.bf16.mxu0 0
      %6593 = vmatpush1.bf16.msra.mxu0 0
      %6594 = vmatprep.subr.bf16.mxu0 0
      %6595 = vmatpush1.bf16.msra.mxu0 %v6578
      %6596 = vmatprep.subr.bf16.mxu0 0
      %6597 = vmatpush2.bf16.msra.mxu0 0
      %6598 = vmatprep.subr.bf16.mxu0 0
      %6599 = vmatpush2.bf16.msra.mxu0 0
      %6600 = vmatprep.subr.bf16.mxu0 0
      %6601 = vmatpush2.bf16.msra.mxu0 0
      %6602 = vmatprep.subr.bf16.mxu0 0
      %6603 = vmatpush2.bf16.msra.mxu0 0
      %6604 = vmatprep.subr.bf16.mxu0 0
      %6605 = vmatpush2.bf16.msra.mxu0 0
      %6606 = vmatprep.subr.bf16.mxu0 0
      %6607 = vmatpush2.bf16.msra.mxu0 0
      %6608 = vmatprep.subr.bf16.mxu0 0
      %6609 = vmatpush2.bf16.msra.mxu0 0
      %6610 = vmatprep.subr.bf16.mxu0 0
      %6611 = vmatpush2.bf16.msra.mxu0 0
      %6612 = vmatprep.mubr.bf16.mxu0 0
      %6613 = vmatmul.mubr.bf16.gmra.mxu0 %v6554
      %v6614 = vpop.f32.mrf.mxu0
      %v6615 = vadd.f32 0.0, %v6614
      %v6616 = vpop.f32.mrf.mxu0
      %v6617 = vpop.f32.mrf.mxu0
      %v6618 = vadd.f32 0.0, %v6617
      %v6619 = vpop.f32.mrf.mxu0
      %6620 = vmatprep.mubr.bf16.mxu0 0
      %6621 = vmatmul.mubr.bf16.gmra.mxu0 %v6557
      %v6622 = vpop.f32.mrf.mxu0
      %v6623 = vadd.f32 0.0, %v6622
      %v6624 = vpop.f32.mrf.mxu0
      %v6625 = vpop.f32.mrf.mxu0
      %v6626 = vadd.f32 0.0, %v6625
      %v6627 = vpop.f32.mrf.mxu0
      %6628 = vmatprep.mubr.bf16.mxu0 0
      %6629 = vmatmul.mubr.bf16.gmra.mxu0 %v6560
      %v6630 = vpop.f32.mrf.mxu0
      %v6631 = vadd.f32 0.0, %v6630
      %v6632 = vpop.f32.mrf.mxu0
      %v6633 = vpop.f32.mrf.mxu0
      %v6634 = vadd.f32 0.0, %v6633
      %v6635 = vpop.f32.mrf.mxu0
      %6636 = vmatprep.mubr.bf16.mxu0 0
      %6637 = vmatmul.mubr.bf16.gmra.mxu0 %v6563
      %v6638 = vpop.f32.mrf.mxu0
      %v6639 = vadd.f32 0.0, %v6638
      %v6640 = vpop.f32.mrf.mxu0
      %v6641 = vpop.f32.mrf.mxu0
      %v6642 = vadd.f32 0.0, %v6641
      %v6643 = vpop.f32.mrf.mxu0
      %6644 = vmatprep.mubr.bf16.mxu0 0
      %6645 = vmatmul.mubr.bf16.gmra.mxu0 %v6566
      %v6646 = vpop.f32.mrf.mxu0
      %v6647 = vadd.f32 0.0, %v6646
      %v6648 = vpop.f32.mrf.mxu0
      %v6649 = vpop.f32.mrf.mxu0
      %v6650 = vadd.f32 0.0, %v6649
      %v6651 = vpop.f32.mrf.mxu0
      %6652 = vmatprep.mubr.bf16.mxu0 0
      %6653 = vmatmul.mubr.bf16.gmra.mxu0 %v6569
      %v6654 = vpop.f32.mrf.mxu0
      %v6655 = vadd.f32 0.0, %v6654
      %v6656 = vpop.f32.mrf.mxu0
      %v6657 = vpop.f32.mrf.mxu0
      %v6658 = vadd.f32 0.0, %v6657
      %v6659 = vpop.f32.mrf.mxu0
      %6660 = vmatprep.mubr.bf16.mxu0 0
      %6661 = vmatmul.mubr.bf16.gmra.mxu0 %v6572
      %v6662 = vpop.f32.mrf.mxu0
      %v6663 = vadd.f32 0.0, %v6662
      %v6664 = vpop.f32.mrf.mxu0
      %v6665 = vpop.f32.mrf.mxu0
      %v6666 = vadd.f32 0.0, %v6665
      %v6667 = vpop.f32.mrf.mxu0
      %6668 = vmatprep.mubr.bf16.mxu0 0
      %6669 = vmatmul.mubr.bf16.gmra.mxu0 %v6575
      %v6670 = vpop.f32.mrf.mxu0
      %v6671 = vadd.f32 0.0, %v6670
      %v6672 = vpop.f32.mrf.mxu0
      %v6673 = vpop.f32.mrf.mxu0
      %v6674 = vadd.f32 0.0, %v6673
      %v6675 = vpop.f32.mrf.mxu0
      %6676 = vdwg.mxu0
      %v6677 = vadd.f32 %v6433, %v6615
      %v6678 = vadd.f32 %v6436, %v6618
      %v6679 = vadd.f32 %v6441, %v6623
      %v6680 = vadd.f32 %v6444, %v6626
      %v6681 = vadd.f32 %v6449, %v6631
      %v6682 = vadd.f32 %v6452, %v6634
      %v6683 = vadd.f32 %v6457, %v6639
      %v6684 = vadd.f32 %v6460, %v6642
      %v6685 = vadd.f32 %v6465, %v6647
      %v6686 = vadd.f32 %v6468, %v6650
      %v6687 = vadd.f32 %v6473, %v6655
      %v6688 = vadd.f32 %v6476, %v6658
      %v6689 = vadd.f32 %v6481, %v6663
      %v6690 = vadd.f32 %v6484, %v6666
      %v6691 = vadd.f32 %v6489, %v6671
      %v6692 = vadd.f32 %v6492, %v6674
      %v6693 = vld [vmem:[%s9] sm:$0x1]
      %v6695 = vlaneseq
      %v6696 = vshrl.u32 %v6695, 7
      %v6697 = vsub.s32 0, %v6696
      %v6698 = vrot.slane %v6693, %v6697
      %v6700 = vadd.f32 %v6677, %v6698
      %v6701 = vadd.f32 %v6678, %v6698
      %v6702 = vadd.f32 %v6679, %v6698
      %v6703 = vadd.f32 %v6680, %v6698
      %v6704 = vadd.f32 %v6681, %v6698
      %v6705 = vadd.f32 %v6682, %v6698
      %v6706 = vadd.f32 %v6683, %v6698
      %v6707 = vadd.f32 %v6684, %v6698
      %v6708 = vadd.f32 %v6685, %v6698
      %v6709 = vadd.f32 %v6686, %v6698
      %v6710 = vadd.f32 %v6687, %v6698
      %v6711 = vadd.f32 %v6688, %v6698
      %v6712 = vadd.f32 %v6689, %v6698
      %v6713 = vadd.f32 %v6690, %v6698
      %v6714 = vadd.f32 %v6691, %v6698
      %v6715 = vadd.f32 %v6692, %v6698
      %v6716 = vmax.f32 %v6700, 0.0
      %v6717 = vmax.f32 %v6701, 0.0
      %v6718 = vmax.f32 %v6702, 0.0
      %v6719 = vmax.f32 %v6703, 0.0
      %v6720 = vmax.f32 %v6704, 0.0
      %v6721 = vmax.f32 %v6705, 0.0
      %v6722 = vmax.f32 %v6706, 0.0
      %v6723 = vmax.f32 %v6707, 0.0
      %v6724 = vmax.f32 %v6708, 0.0
      %v6725 = vmax.f32 %v6709, 0.0
      %v6726 = vmax.f32 %v6710, 0.0
      %v6727 = vmax.f32 %v6711, 0.0
      %v6728 = vmax.f32 %v6712, 0.0
      %v6729 = vmax.f32 %v6713, 0.0
      %v6730 = vmax.f32 %v6714, 0.0
      %v6731 = vmax.f32 %v6715, 0.0
      %v6732 = vpack.c.bf16 %v6717, %v6716
      %v6733 = vpack.c.bf16 %v6719, %v6718
      %v6734 = vpack.c.bf16 %v6721, %v6720
      %v6735 = vpack.c.bf16 %v6723, %v6722
      %v6736 = vpack.c.bf16 %v6725, %v6724
      %v6737 = vpack.c.bf16 %v6727, %v6726
      %v6738 = vpack.c.bf16 %v6729, %v6728
      %v6739 = vpack.c.bf16 %v6731, %v6730
      %v6748 = vunpack.c.l.b16 %v6732
      %v6749 = vunpack.c.h.b16 %v6732
      %v6750 = vunpack.c.l.b16 %v6733
      %v6751 = vunpack.c.h.b16 %v6733
      %v6752 = vunpack.c.l.b16 %v6734
      %v6753 = vunpack.c.h.b16 %v6734
      %v6754 = vunpack.c.l.b16 %v6735
      %v6755 = vunpack.c.h.b16 %v6735
      %v6756 = vunpack.c.l.b16 %v6736
      %v6757 = vunpack.c.h.b16 %v6736
      %v6758 = vunpack.c.l.b16 %v6737
      %v6759 = vunpack.c.h.b16 %v6737
      %v6760 = vunpack.c.l.b16 %v6738
      %v6761 = vunpack.c.h.b16 %v6738
      %v6762 = vunpack.c.l.b16 %v6739
      %v6763 = vunpack.c.h.b16 %v6739
      %v6764 = vpack.c.b16 %v6748, %v6748
      %v6765 = vpack.c.b16 %v6749, %v6749
      %v6766 = vpack.c.b16 %v6750, %v6750
      %v6767 = vpack.c.b16 %v6751, %v6751
      %v6768 = vpack.c.b16 %v6752, %v6752
      %v6769 = vpack.c.b16 %v6753, %v6753
      %v6770 = vpack.c.b16 %v6754, %v6754
      %v6771 = vpack.c.b16 %v6755, %v6755
      %v6772 = vpack.c.b16 %v6756, %v6756
      %v6773 = vpack.c.b16 %v6757, %v6757
      %v6774 = vpack.c.b16 %v6758, %v6758
      %v6775 = vpack.c.b16 %v6759, %v6759
      %v6776 = vpack.c.b16 %v6760, %v6760
      %v6777 = vpack.c.b16 %v6761, %v6761
      %v6778 = vpack.c.b16 %v6762, %v6762
      %v6779 = vpack.c.b16 %v6763, %v6763
      %6796 = vst [vmem:[%s359] sm:$0xf] %v6764
      %6797 = vst [vmem:[%s359 + $0x4] sm:$0xf] %v6765
      %6798 = vst [vmem:[%s359 + $0x8] sm:$0xf] %v6766
      %6799 = vst [vmem:[%s359 + $0xc] sm:$0xf] %v6767
      %6800 = vst [vmem:[%s359 + $0x10] sm:$0xf] %v6768
      %6801 = vst [vmem:[%s359 + $0x14] sm:$0xf] %v6769
      %6802 = vst [vmem:[%s359 + $0x18] sm:$0xf] %v6770
      %6803 = vst [vmem:[%s359 + $0x1c] sm:$0xf] %v6771
      %6804 = vst [vmem:[%s359 + $0x20] sm:$0xf] %v6772
      %6805 = vst [vmem:[%s359 + $0x24] sm:$0xf] %v6773
      %6806 = vst [vmem:[%s359 + $0x28] sm:$0xf] %v6774
      %6807 = vst [vmem:[%s359 + $0x2c] sm:$0xf] %v6775
      %6808 = vst [vmem:[%s359 + $0x30] sm:$0xf] %v6776
      %6809 = vst [vmem:[%s359 + $0x34] sm:$0xf] %v6777
      %6810 = vst [vmem:[%s359 + $0x38] sm:$0xf] %v6778
      %6811 = vst [vmem:[%s359 + $0x3c] sm:$0xf] %v6779
      %p6812 = scmp.lt.s32.totalorder %s21, 1
      %s6813 = scalar_select %p6812, %s21, 1
      %s6814 = smul.addr %s6813, 16
      %s6815 = smul.addr %s6814, 4
      %s6816 = scalar_lea.vmem %s10, %s6815
      // Predicated region
      $region61: #{bottleneck_forward.1} parent=59 // pred_check
        %p6817 = pneg %p254
      $region62: #{bottleneck_forward.1} parent=59 // pred_check_branch
        %6819 = sbr.rel (%p6817) target = $region64
      $region63: #{bottleneck_forward.1} parent=59 // pred_region
        _
      $region64: #{bottleneck_forward.1} parent=59 // pred_fallthru
        _
    $region60: #{bottleneck_forward.1} parent=5 // pred_fallthru
      _
    %p6820 = scmp.le.s32.totalorder 2, %s16
    // Predicated region
    $region65: #{bottleneck_forward.1} parent=5 // pred_check
      %p6821 = pneg %p6820
    $region66: #{bottleneck_forward.1} parent=5 // pred_check_branch
      %6823 = sbr.rel (%p6821) target = $region68
    $region67: #{bottleneck_forward.1} parent=5 // pred_region
      %s6824 = ssub.s32 %s16, 2
      // Predicated region
      $region69: #{bottleneck_forward.1} parent=67 // pred_check
        %p6825 = pneg %p260
      $region70: #{bottleneck_forward.1} parent=67 // pred_check_branch
        %6827 = sbr.rel (%p6825) target = $region72
      $region71: #{bottleneck_forward.1} parent=67 // pred_region
        %p6828 = scmp.lt.s32.totalorder %s22, 1
        %s6829 = scalar_select %p6828, %s22, 1
        %s6830 = smul.addr %s6829, 16
        %s6831 = smul.addr %s6830, 4
        %s6832 = scalar_lea.vmem %s10, %s6831
      $region72: #{bottleneck_forward.1} parent=67 // pred_fallthru
        _
    $region68: #{bottleneck_forward.1} parent=5 // pred_fallthru
      _
  $region6: #{bottleneck_forward.1} parent=0 // loop_footer
    %s20 = sadd.s32 1, %s16
  $region7: #{bottleneck_forward.1} parent=0 // loop_footer_branch
    %15 = sbr.rel target = $region3
  $region8: #{bottleneck_forward.1} parent=0 // loop_exit
    _

</llo_original>
